<compile_context>
chip_gen: v6e
topology: v6e:2x2x1
jax: 0.10.0
libtpu: 0.0.40
codegen_flags: <defaults>
</compile_context>

<pallas_src>
import jax
import jax.numpy as jnp
from jax.experimental import pallas as pl
from jax.experimental.pallas import tpu as pltpu

Z_DIM = 32        # latent size `z` of the Discriminator
HIDDEN = 1000     # hidden width from the module definition
HIDDEN_PAD = 1024 # padded to a multiple of 128 for clean vreg / MXU tiles
OUT_PAD = 128     # lane-dense final layer; only column 0 is meaningful
NEG_SLOPE = 0.01  # PyTorch LeakyReLU default negative_slope


def _leaky_relu(x):
    return jnp.where(x > 0, x, NEG_SLOPE * x)


def _round_up(n, m):
    return ((n + m - 1) // m) * m


def discriminator_kernel(x_ref, w1_ref, b1_ref, w2_ref, b2_ref, w3_ref, b3_ref,
                         o_ref):
    # One batch tile per grid step; weights/biases are VMEM-resident across
    # grid steps (constant index_map).  bf16 MXU inputs, f32 accumulation,
    # activation functions applied in f32.
    x = x_ref[...].astype(jnp.bfloat16)

    # Layer 1: Linear(z, 1024pad) + LeakyReLU
    h1 = jnp.dot(x, w1_ref[...], preferred_element_type=jnp.float32) + b1_ref[...]
    h1 = _leaky_relu(h1)

    # Layer 2: Linear(1024pad, 1024pad) + LeakyReLU
    h2 = jnp.dot(h1.astype(jnp.bfloat16), w2_ref[...],
                 preferred_element_type=jnp.float32) + b2_ref[...]
    h2 = _leaky_relu(h2)

    # Layer 3: Linear(1024pad, 128pad) + Sigmoid (only lane 0 is the real output)
    h3 = jnp.dot(h2.astype(jnp.bfloat16), w3_ref[...],
                 preferred_element_type=jnp.float32) + b3_ref[...]
    o_ref[...] = jax.nn.sigmoid(h3)


def discriminator_forward(x, params, *, tb=128):
    """x: [B, Z_DIM] float32 -> [B, 1] float32 (sigmoid probabilities)."""
    w1, b1, w2, b2, w3, b3 = params
    B = x.shape[0]

    tb = min(tb, _round_up(B, 8))          # sublane-aligned batch tile
    b_pad = _round_up(B, tb)
    if b_pad != B:
        x = jnp.pad(x, ((0, b_pad - B), (0, 0)))

    grid = (b_pad // tb,)
    # Constant index_map => block index never changes => fetched once, stays
    # resident in VMEM across all batch tiles.
    resident = lambda shape: pl.BlockSpec(shape, lambda i, s=shape: (0,) * len(s))

    out = pl.pallas_call(
        discriminator_kernel,
        out_shape=jax.ShapeDtypeStruct((b_pad, OUT_PAD), jnp.float32),
        grid=grid,
        in_specs=[
            pl.BlockSpec((tb, x.shape[1]), lambda i: (i, 0)),   # batch-tiled input
            resident(w1.shape), resident(b1.shape),
            resident(w2.shape), resident(b2.shape),
            resident(w3.shape), resident(b3.shape),
        ],
        out_specs=pl.BlockSpec((tb, OUT_PAD), lambda i: (i, 0)),  # lane-dense output
        compiler_params=pltpu.CompilerParams(
            dimension_semantics=("parallel",),   # v7x: shard batch tiles over 2 TCs
            vmem_limit_bytes=16 << 20,
        ),
    )(x, w1, b1, w2, b2, w3, b3)

    return out[:B, :1]


def init_params(key, z_dim=Z_DIM, hidden=HIDDEN):
    """Deterministic synthetic init (PyTorch-style uniform fan-in scaling),
    stored padded ([in_pad, out_pad]) with bf16 weights and f32 biases."""
    ks = jax.random.split(key, 6)

    def linear(kw, kb, fan_in, fan_out, fan_in_pad, fan_out_pad):
        bound = 1.0 / jnp.sqrt(fan_in)
        w = jax.random.uniform(kw, (fan_in, fan_out), jnp.float32, -bound, bound)
        b = jax.random.uniform(kb, (1, fan_out), jnp.float32, -bound, bound)
        w = jnp.pad(w, ((0, fan_in_pad - fan_in), (0, fan_out_pad - fan_out)))
        b = jnp.pad(b, ((0, 0), (0, fan_out_pad - fan_out)))
        return w.astype(jnp.bfloat16), b   # bf16 weights halve HBM traffic

    w1, b1 = linear(ks[0], ks[1], z_dim, hidden, z_dim, HIDDEN_PAD)
    w2, b2 = linear(ks[2], ks[3], hidden, hidden, HIDDEN_PAD, HIDDEN_PAD)
    w3, b3 = linear(ks[4], ks[5], hidden, 1, HIDDEN_PAD, OUT_PAD)
    return (w1, b1, w2, b2, w3, b3)


def reference_forward(x, params):
    """Pure-JAX reference with identical numerics (bf16 MXU inputs, f32 acc)."""
    w1, b1, w2, b2, w3, b3 = params

    def layer(h, w, b):
        return jnp.dot(h.astype(jnp.bfloat16), w,
                       preferred_element_type=jnp.float32) + b

    h1 = _leaky_relu(layer(x, w1, b1))
    h2 = _leaky_relu(layer(h1, w2, b2))
    return jax.nn.sigmoid(layer(h2, w3, b3))[:, :1]


if __name__ == "__main__":
    key = jax.random.PRNGKey(0)
    k_params, k_x = jax.random.split(key)

    params = init_params(k_params)
    batch = 16
    x = jax.random.normal(k_x, (batch, Z_DIM), dtype=jnp.float32)

    out = jax.block_until_ready(discriminator_forward(x, params, tb=8))
    ref = reference_forward(x, params)

    assert out.shape == (batch, 1)
    assert jnp.allclose(out, ref, atol=2e-3, rtol=2e-3), "mismatch vs JAX reference"

    print("KERNEL_OK")
</pallas_src>

<mosaic_0001>
module attributes {stable_mosaic.version = 11 : i64} {
  func.func @discriminator_kernel(%arg0: i32, %arg1: memref<8x32xf32, #tpu.memory_space<vmem>>, %arg2: memref<32x1024xbf16, #tpu.memory_space<vmem>>, %arg3: memref<1x1024xf32, #tpu.memory_space<vmem>>, %arg4: memref<1024x1024xbf16, #tpu.memory_space<vmem>>, %arg5: memref<1x1024xf32, #tpu.memory_space<vmem>>, %arg6: memref<1024x128xbf16, #tpu.memory_space<vmem>>, %arg7: memref<1x128xf32, #tpu.memory_space<vmem>>, %arg8: memref<8x128xf32, #tpu.memory_space<vmem>>) attributes {dimension_semantics = [#tpu.dimension_semantics<parallel>], iteration_bounds = array<i64: 2>, scalar_prefetch = 0 : i64, scratch_operands = 0 : i64, tpu.core_type = #tpu.core_type<tc>, window_params = [{transform_indices = @transform_0, window_bounds = array<i64: 8, 32>}, {pipeline_mode = #tpu.pipeline_mode<synchronous>, transform_indices = @transform_1, window_bounds = array<i64: 32, 1024>}, {pipeline_mode = #tpu.pipeline_mode<synchronous>, transform_indices = @transform_2, window_bounds = array<i64: 1, 1024>}, {pipeline_mode = #tpu.pipeline_mode<synchronous>, transform_indices = @transform_3, window_bounds = array<i64: 1024, 1024>}, {pipeline_mode = #tpu.pipeline_mode<synchronous>, transform_indices = @transform_4, window_bounds = array<i64: 1, 1024>}, {pipeline_mode = #tpu.pipeline_mode<synchronous>, transform_indices = @transform_5, window_bounds = array<i64: 1024, 128>}, {pipeline_mode = #tpu.pipeline_mode<synchronous>, transform_indices = @transform_6, window_bounds = array<i64: 1, 128>}, {transform_indices = @transform_7, window_bounds = array<i64: 8, 128>}]} {
    %c0 = arith.constant 0 : index
    %c0_0 = arith.constant 0 : index
    %0 = vector.load %arg1[%c0, %c0_0] : memref<8x32xf32, #tpu.memory_space<vmem>>, vector<8x32xf32>
    %1 = arith.truncf %0 : vector<8x32xf32> to vector<8x32xbf16>
    %c0_1 = arith.constant 0 : index
    %c0_2 = arith.constant 0 : index
    %2 = vector.load %arg2[%c0_1, %c0_2] : memref<32x1024xbf16, #tpu.memory_space<vmem>>, vector<32x1024xbf16>
    %cst = arith.constant dense<0.000000e+00> : vector<8x1024xf32>
    %3 = tpu.matmul %1, %2, %cst {dimension_numbers = #tpu.dot_dimension_numbers<[1], [0], [0], [1], [0, 0, 1, 1], [], []>} : vector<8x32xbf16>, vector<32x1024xbf16>, vector<8x1024xf32> -> vector<8x1024xf32>
    %c0_3 = arith.constant 0 : index
    %c0_4 = arith.constant 0 : index
    %4 = vector.load %arg3[%c0_3, %c0_4] : memref<1x1024xf32, #tpu.memory_space<vmem>>, vector<1x1024xf32>
    %5 = vector.broadcast %4 : vector<1x1024xf32> to vector<8x1024xf32>
    %6 = arith.addf %3, %5 : vector<8x1024xf32>
    %cst_5 = arith.constant 0.000000e+00 : f32
    %7 = vector.broadcast %cst_5 : f32 to vector<8x1024xf32>
    %8 = arith.cmpf ogt, %6, %7 : vector<8x1024xf32>
    %cst_6 = arith.constant 0.00999999977 : f32
    %9 = vector.broadcast %cst_6 : f32 to vector<8x1024xf32>
    %10 = arith.mulf %9, %6 : vector<8x1024xf32>
    %11 = arith.select %8, %6, %10 : vector<8x1024xi1>, vector<8x1024xf32>
    %12 = arith.truncf %11 : vector<8x1024xf32> to vector<8x1024xbf16>
    %c0_7 = arith.constant 0 : index
    %c0_8 = arith.constant 0 : index
    %13 = vector.load %arg4[%c0_7, %c0_8] : memref<1024x1024xbf16, #tpu.memory_space<vmem>>, vector<1024x1024xbf16>
    %cst_9 = arith.constant dense<0.000000e+00> : vector<8x1024xf32>
    %14 = tpu.matmul %12, %13, %cst_9 {dimension_numbers = #tpu.dot_dimension_numbers<[1], [0], [0], [1], [0, 0, 1, 1], [], []>} : vector<8x1024xbf16>, vector<1024x1024xbf16>, vector<8x1024xf32> -> vector<8x1024xf32>
    %c0_10 = arith.constant 0 : index
    %c0_11 = arith.constant 0 : index
    %15 = vector.load %arg5[%c0_10, %c0_11] : memref<1x1024xf32, #tpu.memory_space<vmem>>, vector<1x1024xf32>
    %16 = vector.broadcast %15 : vector<1x1024xf32> to vector<8x1024xf32>
    %17 = arith.addf %14, %16 : vector<8x1024xf32>
    %cst_12 = arith.constant 0.000000e+00 : f32
    %18 = vector.broadcast %cst_12 : f32 to vector<8x1024xf32>
    %19 = arith.cmpf ogt, %17, %18 : vector<8x1024xf32>
    %cst_13 = arith.constant 0.00999999977 : f32
    %20 = vector.broadcast %cst_13 : f32 to vector<8x1024xf32>
    %21 = arith.mulf %20, %17 : vector<8x1024xf32>
    %22 = arith.select %19, %17, %21 : vector<8x1024xi1>, vector<8x1024xf32>
    %23 = arith.truncf %22 : vector<8x1024xf32> to vector<8x1024xbf16>
    %c0_14 = arith.constant 0 : index
    %c0_15 = arith.constant 0 : index
    %24 = vector.load %arg6[%c0_14, %c0_15] : memref<1024x128xbf16, #tpu.memory_space<vmem>>, vector<1024x128xbf16>
    %cst_16 = arith.constant dense<0.000000e+00> : vector<8x128xf32>
    %25 = tpu.matmul %23, %24, %cst_16 {dimension_numbers = #tpu.dot_dimension_numbers<[1], [0], [0], [1], [0, 0, 1, 1], [], []>} : vector<8x1024xbf16>, vector<1024x128xbf16>, vector<8x128xf32> -> vector<8x128xf32>
    %c0_17 = arith.constant 0 : index
    %c0_18 = arith.constant 0 : index
    %26 = vector.load %arg7[%c0_17, %c0_18] : memref<1x128xf32, #tpu.memory_space<vmem>>, vector<1x128xf32>
    %27 = vector.broadcast %26 : vector<1x128xf32> to vector<8x128xf32>
    %28 = arith.addf %25, %27 : vector<8x128xf32>
    %29 = arith.negf %28 : vector<8x128xf32>
    %30 = math.exp %29 : vector<8x128xf32>
    %cst_19 = arith.constant 1.000000e+00 : f32
    %31 = vector.broadcast %cst_19 : f32 to vector<8x128xf32>
    %32 = arith.addf %31, %30 : vector<8x128xf32>
    %33 = arith.divf %31, %32 : vector<8x128xf32>
    %c0_20 = arith.constant 0 : index
    %c0_21 = arith.constant 0 : index
    %34 = vector.load %arg8[%c0_20, %c0_21] : memref<8x128xf32, #tpu.memory_space<vmem>>, vector<8x128xf32>
    tpu.vector_store %arg8[%c0_20, %c0_21], %33 {strides = array<i32>} : memref<8x128xf32, #tpu.memory_space<vmem>>, vector<8x128xf32>,
    return
  }
  func.func @transform_0(%arg0: i32) -> (i32, i32) {
    %c0_i32 = arith.constant 0 : i32
    %c0_i32_0 = arith.constant 0 : i32
    return %arg0, %c0_i32 : i32, i32
  }
  func.func @transform_1(%arg0: i32) -> (i32, i32) {
    %c0_i32 = arith.constant 0 : i32
    %c0_i32_0 = arith.constant 0 : i32
    %c0_i32_1 = arith.constant 0 : i32
    return %c0_i32, %c0_i32_0 : i32, i32
  }
  func.func @transform_2(%arg0: i32) -> (i32, i32) {
    %c0_i32 = arith.constant 0 : i32
    %c0_i32_0 = arith.constant 0 : i32
    %c0_i32_1 = arith.constant 0 : i32
    return %c0_i32, %c0_i32_0 : i32, i32
  }
  func.func @transform_3(%arg0: i32) -> (i32, i32) {
    %c0_i32 = arith.constant 0 : i32
    %c0_i32_0 = arith.constant 0 : i32
    %c0_i32_1 = arith.constant 0 : i32
    return %c0_i32, %c0_i32_0 : i32, i32
  }
  func.func @transform_4(%arg0: i32) -> (i32, i32) {
    %c0_i32 = arith.constant 0 : i32
    %c0_i32_0 = arith.constant 0 : i32
    %c0_i32_1 = arith.constant 0 : i32
    return %c0_i32, %c0_i32_0 : i32, i32
  }
  func.func @transform_5(%arg0: i32) -> (i32, i32) {
    %c0_i32 = arith.constant 0 : i32
    %c0_i32_0 = arith.constant 0 : i32
    %c0_i32_1 = arith.constant 0 : i32
    return %c0_i32, %c0_i32_0 : i32, i32
  }
  func.func @transform_6(%arg0: i32) -> (i32, i32) {
    %c0_i32 = arith.constant 0 : i32
    %c0_i32_0 = arith.constant 0 : i32
    %c0_i32_1 = arith.constant 0 : i32
    return %c0_i32, %c0_i32_0 : i32, i32
  }
  func.func @transform_7(%arg0: i32) -> (i32, i32) {
    %c0_i32 = arith.constant 0 : i32
    %c0_i32_0 = arith.constant 0 : i32
    return %arg0, %c0_i32 : i32, i32
  }
}

</mosaic_0001>

<llo_original>
// kernel: tpu_custom_call.1
$region0: #{tpu_custom_call.1}
  #allocation0 [shape = 'u32[]', space=smem, size = 0x4, offset = 0x4, fixed_abs, tag = 'smem constant byte address 0x4 - core index']
  #allocation1 [shape = 'u32[144,128]{1,0:T(1,128)}', space=vmem, size = 0x12000, scoped, tag = 'internal scratch']
  %s0 = inlined_call_operand.hbm [shape: f32[16,32], index: 0, kind: input, shape index: {}]
  %s1 = inlined_call_operand.hbm [shape: bf16[32,1024], index: 1, kind: input, shape index: {}]
  %s2 = inlined_call_operand.hbm [shape: f32[1,1024], index: 2, kind: input, shape index: {}]
  %s3 = inlined_call_operand.hbm [shape: bf16[1024,1024], index: 3, kind: input, shape index: {}]
  %s4 = inlined_call_operand.hbm [shape: f32[1,1024], index: 4, kind: input, shape index: {}]
  %s5 = inlined_call_operand.hbm [shape: bf16[1024,128], index: 5, kind: input, shape index: {}]
  %s6 = inlined_call_operand.hbm [shape: f32[1,128], index: 6, kind: input, shape index: {}]
  %s7 = inlined_call_operand.hbm [shape: f32[16,128], index: 7, kind: output, shape index: {}]
  %s8 = sld [smem:[#allocation0]]
  $region89: #{tpu_custom_call.1} parent=0
    _
  %s10 = ssub.s32 1, %s8
  %s11 = scalar_select 0, %s10, %s8
  $region1: #{tpu_custom_call.1} parent=0
    #allocation2 [shape = 'u8[8192]{0}', space=vmem, size = 0x2000, scoped, tag = 'input window, operand 0']
    #allocation3 [shape = 's32[2]{0}', space=sflag, size = 0x8, scoped, tag = 'scoped memory for tpu_custom_call.1']
    #allocation4 [shape = 's32[2]{0}', space=sflag, size = 0x8, scoped, tag = 'scoped memory for tpu_custom_call.1']
    #allocation5 [shape = 'u8[65536]{0}', space=vmem, size = 0x10000, scoped, tag = 'input window, operand 1, single buffered']
    #allocation6 [shape = 's32[1]{0}', space=sflag, size = 0x4, scoped, tag = 'scoped memory for tpu_custom_call.1']
    #allocation7 [shape = 'u8[4096]{0}', space=vmem, size = 0x1000, scoped, tag = 'input window, operand 2, single buffered']
    #allocation8 [shape = 'u8[2097152]{0}', space=vmem, size = 0x200000, scoped, tag = 'input window, operand 3, single buffered']
    #allocation9 [shape = 's32[1]{0}', space=sflag, size = 0x4, scoped, tag = 'scoped memory for tpu_custom_call.1']
    #allocation10 [shape = 'u8[4096]{0}', space=vmem, size = 0x1000, scoped, tag = 'input window, operand 4, single buffered']
    #allocation11 [shape = 'u8[262144]{0}', space=vmem, size = 0x40000, scoped, tag = 'input window, operand 5, single buffered']
    #allocation12 [shape = 's32[1]{0}', space=sflag, size = 0x4, scoped, tag = 'scoped memory for tpu_custom_call.1']
    #allocation13 [shape = 'u8[512]{0}', space=vmem, size = 0x400, scoped, tag = 'input window, operand 6, single buffered']
    #allocation14 [shape = 'u8[8192]{0}', space=vmem, size = 0x2000, scoped, tag = 'output window, operand 0']
    %12 = vsyncpa [#allocation3], 0
    %s13 = scalar_lea.sflag [#allocation3], 1
    %14 = vsyncpa %s13, 0
    %15 = vsyncpa [#allocation6], 0
    %16 = vsyncpa [#allocation9], 0
    %17 = vsyncpa [#allocation12], 0
    %18 = vsyncpa [#allocation4], 0
    %s19 = scalar_lea.sflag [#allocation4], 1
    %20 = vsyncpa %s19, 0
    loop: start=0, step=1, limit=4
    $region2: #{tpu_custom_call.1} parent=1 // loop_pre_header
      _
    $region3: #{tpu_custom_call.1} parent=1 // loop_header
      %s22 = sphi 0, %s26
      %p23 = scmp.ge.s32.totalorder %s22, 4
      %s32 = sphi 0, %s34
      %s35 = sphi 0, %s32
      %s36 = sphi 0, %s35
      %s52 = sphi 0, %s36
      %s56 = sphi 0, %s56
      %s58 = sphi 0, %s56
      %s59 = sphi 0, %s58
      %s73 = sphi 0, %s59
      %s77 = sphi 0, %s77
      %s79 = sphi 0, %s77
      %s80 = sphi 0, %s79
      %s94 = sphi 0, %s80
      %s98 = sphi 0, %s98
      %s100 = sphi 0, %s98
      %s101 = sphi 0, %s100
      %s115 = sphi 0, %s101
      %s119 = sphi 0, %s119
      %s121 = sphi 0, %s119
      %s122 = sphi 0, %s121
      %s136 = sphi 0, %s122
      %s140 = sphi 0, %s140
      %s142 = sphi 0, %s140
      %s143 = sphi 0, %s142
      %s157 = sphi 0, %s143
      %s161 = sphi 0, %s161
      %s163 = sphi 0, %s161
      %s164 = sphi 0, %s163
      %s178 = sphi 0, %s164
      %s184 = sphi 0, %s186
      %s187 = sphi 0, %s184
      %s188 = sphi 0, %s187
      %s204 = sphi 0, %s188
    $region4: #{tpu_custom_call.1} parent=1 // loop_header_branch
      %25 = sbr.rel (%p23) target = $region8
    $region5: #{tpu_custom_call.1} parent=1 // loop_body
      %s27 = ssub.s32 %s22, 1
      %s28 = ssub.s32 %s22, 2
      %s29 = sadd.s32 %s22, 1
      %s30 = ssub.s32 %s22, %s29
      %p31 = scmp.eq.s32.totalorder %s30, 0
      %s33 = sadd.s32 %s32, 1
      %s34 = scalar_select %p31, %s32, %s33
      %p37 = pneg %p31
      %p38 = scmp.eq.s32.totalorder %s22, 1
      %p39 = por %p37, %p38
      %p40 = scmp.ne.s32.totalorder %s32, %s35
      %p41 = scmp.eq.s32.totalorder %s22, 0
      %p42 = por %p40, %p41
      %p43 = scmp.ne.s32.totalorder %s32, %s35
      %p44 = scmp.eq.s32.totalorder %s27, 1
      %p45 = por %p43, %p44
      %p46 = scmp.ne.s32.totalorder %s35, %s36
      %p47 = scmp.eq.s32.totalorder %s27, 0
      %p48 = por %p46, %p47
      %p49 = scmp.ne.s32.totalorder %s35, %s36
      %p50 = scmp.eq.s32.totalorder %s28, 1
      %p51 = por %p49, %p50
      %p53 = scmp.ne.s32.totalorder %s36, %s52
      %p54 = scmp.eq.s32.totalorder %s28, 0
      %p55 = por %p53, %p54
      %s57 = sadd.s32 %s56, 1
      %p60 = scmp.eq.s32.totalorder %s22, 1
      %p61 = scmp.ne.s32.totalorder %s56, %s58
      %p62 = scmp.eq.s32.totalorder %s22, 0
      %p63 = por %p61, %p62
      %p64 = scmp.ne.s32.totalorder %s56, %s58
      %p65 = scmp.eq.s32.totalorder %s27, 1
      %p66 = por %p64, %p65
      %p67 = scmp.ne.s32.totalorder %s58, %s59
      %p68 = scmp.eq.s32.totalorder %s27, 0
      %p69 = por %p67, %p68
      %p70 = scmp.ne.s32.totalorder %s58, %s59
      %p71 = scmp.eq.s32.totalorder %s28, 1
      %p72 = por %p70, %p71
      %p74 = scmp.ne.s32.totalorder %s59, %s73
      %p75 = scmp.eq.s32.totalorder %s28, 0
      %p76 = por %p74, %p75
      %s78 = sadd.s32 %s77, 1
      %p81 = scmp.eq.s32.totalorder %s22, 1
      %p82 = scmp.ne.s32.totalorder %s77, %s79
      %p83 = scmp.eq.s32.totalorder %s22, 0
      %p84 = por %p82, %p83
      %p85 = scmp.ne.s32.totalorder %s77, %s79
      %p86 = scmp.eq.s32.totalorder %s27, 1
      %p87 = por %p85, %p86
      %p88 = scmp.ne.s32.totalorder %s79, %s80
      %p89 = scmp.eq.s32.totalorder %s27, 0
      %p90 = por %p88, %p89
      %p91 = scmp.ne.s32.totalorder %s79, %s80
      %p92 = scmp.eq.s32.totalorder %s28, 1
      %p93 = por %p91, %p92
      %p95 = scmp.ne.s32.totalorder %s80, %s94
      %p96 = scmp.eq.s32.totalorder %s28, 0
      %p97 = por %p95, %p96
      %s99 = sadd.s32 %s98, 1
      %p102 = scmp.eq.s32.totalorder %s22, 1
      %p103 = scmp.ne.s32.totalorder %s98, %s100
      %p104 = scmp.eq.s32.totalorder %s22, 0
      %p105 = por %p103, %p104
      %p106 = scmp.ne.s32.totalorder %s98, %s100
      %p107 = scmp.eq.s32.totalorder %s27, 1
      %p108 = por %p106, %p107
      %p109 = scmp.ne.s32.totalorder %s100, %s101
      %p110 = scmp.eq.s32.totalorder %s27, 0
      %p111 = por %p109, %p110
      %p112 = scmp.ne.s32.totalorder %s100, %s101
      %p113 = scmp.eq.s32.totalorder %s28, 1
      %p114 = por %p112, %p113
      %p116 = scmp.ne.s32.totalorder %s101, %s115
      %p117 = scmp.eq.s32.totalorder %s28, 0
      %p118 = por %p116, %p117
      %s120 = sadd.s32 %s119, 1
      %p123 = scmp.eq.s32.totalorder %s22, 1
      %p124 = scmp.ne.s32.totalorder %s119, %s121
      %p125 = scmp.eq.s32.totalorder %s22, 0
      %p126 = por %p124, %p125
      %p127 = scmp.ne.s32.totalorder %s119, %s121
      %p128 = scmp.eq.s32.totalorder %s27, 1
      %p129 = por %p127, %p128
      %p130 = scmp.ne.s32.totalorder %s121, %s122
      %p131 = scmp.eq.s32.totalorder %s27, 0
      %p132 = por %p130, %p131
      %p133 = scmp.ne.s32.totalorder %s121, %s122
      %p134 = scmp.eq.s32.totalorder %s28, 1
      %p135 = por %p133, %p134
      %p137 = scmp.ne.s32.totalorder %s122, %s136
      %p138 = scmp.eq.s32.totalorder %s28, 0
      %p139 = por %p137, %p138
      %s141 = sadd.s32 %s140, 1
      %p144 = scmp.eq.s32.totalorder %s22, 1
      %p145 = scmp.ne.s32.totalorder %s140, %s142
      %p146 = scmp.eq.s32.totalorder %s22, 0
      %p147 = por %p145, %p146
      %p148 = scmp.ne.s32.totalorder %s140, %s142
      %p149 = scmp.eq.s32.totalorder %s27, 1
      %p150 = por %p148, %p149
      %p151 = scmp.ne.s32.totalorder %s142, %s143
      %p152 = scmp.eq.s32.totalorder %s27, 0
      %p153 = por %p151, %p152
      %p154 = scmp.ne.s32.totalorder %s142, %s143
      %p155 = scmp.eq.s32.totalorder %s28, 1
      %p156 = por %p154, %p155
      %p158 = scmp.ne.s32.totalorder %s143, %s157
      %p159 = scmp.eq.s32.totalorder %s28, 0
      %p160 = por %p158, %p159
      %s162 = sadd.s32 %s161, 1
      %p165 = scmp.eq.s32.totalorder %s22, 1
      %p166 = scmp.ne.s32.totalorder %s161, %s163
      %p167 = scmp.eq.s32.totalorder %s22, 0
      %p168 = por %p166, %p167
      %p169 = scmp.ne.s32.totalorder %s161, %s163
      %p170 = scmp.eq.s32.totalorder %s27, 1
      %p171 = por %p169, %p170
      %p172 = scmp.ne.s32.totalorder %s163, %s164
      %p173 = scmp.eq.s32.totalorder %s27, 0
      %p174 = por %p172, %p173
      %p175 = scmp.ne.s32.totalorder %s163, %s164
      %p176 = scmp.eq.s32.totalorder %s28, 1
      %p177 = por %p175, %p176
      %p179 = scmp.ne.s32.totalorder %s164, %s178
      %p180 = scmp.eq.s32.totalorder %s28, 0
      %p181 = por %p179, %p180
      %s182 = ssub.s32 %s22, %s29
      %p183 = scmp.eq.s32.totalorder %s182, 0
      %s185 = sadd.s32 %s184, 1
      %s186 = scalar_select %p183, %s184, %s185
      %p189 = pneg %p183
      %p190 = scmp.eq.s32.totalorder %s22, 1
      %p191 = por %p189, %p190
      %p192 = scmp.ne.s32.totalorder %s184, %s187
      %p193 = scmp.eq.s32.totalorder %s22, 0
      %p194 = por %p192, %p193
      %p195 = scmp.ne.s32.totalorder %s184, %s187
      %p196 = scmp.eq.s32.totalorder %s27, 1
      %p197 = por %p195, %p196
      %p198 = scmp.ne.s32.totalorder %s187, %s188
      %p199 = scmp.eq.s32.totalorder %s27, 0
      %p200 = por %p198, %p199
      %p201 = scmp.ne.s32.totalorder %s187, %s188
      %p202 = scmp.eq.s32.totalorder %s28, 1
      %p203 = por %p201, %p202
      %p205 = scmp.ne.s32.totalorder %s188, %s204
      %p206 = scmp.eq.s32.totalorder %s28, 0
      %p207 = por %p205, %p206
      %p208 = scmp.le.s32.totalorder 1, %s22
      %p209 = scmp.lt.s32.totalorder %s22, 3
      %p210 = pnand %p208, %p209
      %p211 = pneg %p210
      // Predicated region
      $region9: #{tpu_custom_call.1} parent=5 // pred_check
        _
      $region10: #{tpu_custom_call.1} parent=5 // pred_check_branch
        %213 = sbr.rel (%p210) target = $region12
      $region11: #{tpu_custom_call.1} parent=5 // pred_region
        %s214 = ssub.s32 %s22, 1
        // Predicated region
        $region13: #{tpu_custom_call.1} parent=11 // pred_check
          %p215 = pneg %p69
        $region14: #{tpu_custom_call.1} parent=11 // pred_check_branch
          %217 = sbr.rel (%p215) target = $region16
        $region15: #{tpu_custom_call.1} parent=11 // pred_region
          %s219 = ssub.s32 2048, 2048
          %220 = vsyncadd [#allocation6], %s219
          %s221 = sshll.u32 [#allocation5], 4
          %s222 = int_to_ptr.vmem [resolvable:$true] %s221
          %227 = dma.hbm_to_vmem [thread:$0]  %s1, 2048, %s222, [#allocation6], 512, 512, 32
        $region16: #{tpu_custom_call.1} parent=11 // pred_fallthru
          _
        // Predicated region
        $region17: #{tpu_custom_call.1} parent=11 // pred_check
          %p228 = pneg %p90
        $region18: #{tpu_custom_call.1} parent=11 // pred_check_branch
          %230 = sbr.rel (%p228) target = $region20
        $region19: #{tpu_custom_call.1} parent=11 // pred_region
          %s232 = ssub.s32 128, 128
          %233 = vsyncadd [#allocation6], %s232
          %s235 = sshll.u32 [#allocation7], 4
          %s236 = int_to_ptr.vmem [resolvable:$true] %s235
          %238 = dma.hbm_to_vmem [thread:$0]  %s2, 128, %s236, [#allocation6]
        $region20: #{tpu_custom_call.1} parent=11 // pred_fallthru
          _
        // Predicated region
        $region21: #{tpu_custom_call.1} parent=11 // pred_check
          %p239 = pneg %p111
        $region22: #{tpu_custom_call.1} parent=11 // pred_check_branch
          %241 = sbr.rel (%p239) target = $region24
        $region23: #{tpu_custom_call.1} parent=11 // pred_region
          %s243 = ssub.s32 65536, 65536
          %244 = vsyncadd [#allocation9], %s243
          %s245 = sshll.u32 [#allocation8], 4
          %s246 = int_to_ptr.vmem [resolvable:$true] %s245
          %251 = dma.hbm_to_vmem [thread:$0]  %s3, 65536, %s246, [#allocation9], 512, 512, 32
        $region24: #{tpu_custom_call.1} parent=11 // pred_fallthru
          _
        // Predicated region
        $region25: #{tpu_custom_call.1} parent=11 // pred_check
          %p252 = pneg %p132
        $region26: #{tpu_custom_call.1} parent=11 // pred_check_branch
          %254 = sbr.rel (%p252) target = $region28
        $region27: #{tpu_custom_call.1} parent=11 // pred_region
          %s256 = ssub.s32 128, 128
          %257 = vsyncadd [#allocation9], %s256
          %s259 = sshll.u32 [#allocation10], 4
          %s260 = int_to_ptr.vmem [resolvable:$true] %s259
          %262 = dma.hbm_to_vmem [thread:$0]  %s4, 128, %s260, [#allocation9]
        $region28: #{tpu_custom_call.1} parent=11 // pred_fallthru
          _
        // Predicated region
        $region29: #{tpu_custom_call.1} parent=11 // pred_check
          %p263 = pneg %p153
        $region30: #{tpu_custom_call.1} parent=11 // pred_check_branch
          %265 = sbr.rel (%p263) target = $region32
        $region31: #{tpu_custom_call.1} parent=11 // pred_region
          %s267 = ssub.s32 8192, 8192
          %268 = vsyncadd [#allocation12], %s267
          %s269 = sshll.u32 [#allocation11], 4
          %s270 = int_to_ptr.vmem [resolvable:$true] %s269
          %275 = dma.hbm_to_vmem [thread:$0]  %s5, 8192, %s270, [#allocation12], 64, 64, 4
        $region32: #{tpu_custom_call.1} parent=11 // pred_fallthru
          _
        // Predicated region
        $region33: #{tpu_custom_call.1} parent=11 // pred_check
          %p276 = pneg %p174
        $region34: #{tpu_custom_call.1} parent=11 // pred_check_branch
          %278 = sbr.rel (%p276) target = $region36
        $region35: #{tpu_custom_call.1} parent=11 // pred_region
          %s280 = ssub.s32 16, 16
          %281 = vsyncadd [#allocation12], %s280
          %s283 = sshll.u32 [#allocation13], 4
          %s284 = int_to_ptr.vmem [resolvable:$true] %s283
          %286 = dma.hbm_to_vmem [thread:$0]  %s6, 16, %s284, [#allocation12]
        $region36: #{tpu_custom_call.1} parent=11 // pred_fallthru
          _
      $region12: #{tpu_custom_call.1} parent=5 // pred_fallthru
        _
      %p287 = scmp.lt.s32.totalorder %s22, 2
      // Predicated region
      $region37: #{tpu_custom_call.1} parent=5 // pred_check
        %p288 = pneg %p287
      $region38: #{tpu_custom_call.1} parent=5 // pred_check_branch
        %290 = sbr.rel (%p288) target = $region40
      $region39: #{tpu_custom_call.1} parent=5 // pred_region
        // Predicated region
        $region41: #{tpu_custom_call.1} parent=39 // pred_check
          %p291 = pneg %p42
        $region42: #{tpu_custom_call.1} parent=39 // pred_check_branch
          %293 = sbr.rel (%p291) target = $region44
        $region43: #{tpu_custom_call.1} parent=39 // pred_region
          %s294 = sand.u32 %s32, 1
          %s295 = scalar_lea.sflag [#allocation3], %s294
          %s296 = sand.u32 %s32, 1
          %s297 = smul.addr %s296, 8
          %s298 = scalar_lea.vmem [#allocation2], %s297
          %s300 = ssub.s32 128, 128
          %301 = vsyncadd %s295, %s300
          %s302 = smul.addr %s22, 128
          %s303 = scalar_lea.hbm %s0, %s302
          %s305 = sshll.u32 %s298, 4
          %s306 = int_to_ptr.vmem [resolvable:$true] %s305
          %308 = dma.hbm_to_vmem [thread:$0]  %s303, 128, %s306, %s295
        $region44: #{tpu_custom_call.1} parent=39 // pred_fallthru
          _
      $region40: #{tpu_custom_call.1} parent=5 // pred_fallthru
        _
      %p309 = scmp.le.s32.totalorder 1, %s22
      %p310 = scmp.lt.s32.totalorder %s22, 3
      %p311 = pnand %p309, %p310
      %p312 = pneg %p311
      // Predicated region
      $region45: #{tpu_custom_call.1} parent=5 // pred_check
        _
      $region46: #{tpu_custom_call.1} parent=5 // pred_check_branch
        %314 = sbr.rel (%p311) target = $region48
      $region47: #{tpu_custom_call.1} parent=5 // pred_region
        %s315 = ssub.s32 %s22, 1
        %s316 = sand.u32 %s35, 1
        %s317 = scalar_lea.sflag [#allocation3], %s316
        %s318 = sand.u32 %s35, 1
        %s319 = smul.addr %s318, 8
        %s320 = scalar_lea.vmem [#allocation2], %s319
        // Predicated region
        $region49: #{tpu_custom_call.1} parent=47 // pred_check
          %p321 = pneg %p48
        $region50: #{tpu_custom_call.1} parent=47 // pred_check_branch
          %323 = sbr.rel (%p321) target = $region52
        $region51: #{tpu_custom_call.1} parent=47 // pred_region
          %324 = dma.done %s317, 128
        $region52: #{tpu_custom_call.1} parent=47 // pred_fallthru
          _
        // Predicated region
        $region53: #{tpu_custom_call.1} parent=47 // pred_check
          %p325 = pneg %p69
        $region54: #{tpu_custom_call.1} parent=47 // pred_check_branch
          %327 = sbr.rel (%p325) target = $region56
        $region55: #{tpu_custom_call.1} parent=47 // pred_region
          %328 = dma.done [#allocation6], 2048
        $region56: #{tpu_custom_call.1} parent=47 // pred_fallthru
          _
        // Predicated region
        $region57: #{tpu_custom_call.1} parent=47 // pred_check
          %p329 = pneg %p90
        $region58: #{tpu_custom_call.1} parent=47 // pred_check_branch
          %331 = sbr.rel (%p329) target = $region60
        $region59: #{tpu_custom_call.1} parent=47 // pred_region
          %332 = dma.done [#allocation6], 128
        $region60: #{tpu_custom_call.1} parent=47 // pred_fallthru
          _
        // Predicated region
        $region61: #{tpu_custom_call.1} parent=47 // pred_check
          %p333 = pneg %p111
        $region62: #{tpu_custom_call.1} parent=47 // pred_check_branch
          %335 = sbr.rel (%p333) target = $region64
        $region63: #{tpu_custom_call.1} parent=47 // pred_region
          %336 = dma.done [#allocation9], 65536
        $region64: #{tpu_custom_call.1} parent=47 // pred_fallthru
          _
        // Predicated region
        $region65: #{tpu_custom_call.1} parent=47 // pred_check
          %p337 = pneg %p132
        $region66: #{tpu_custom_call.1} parent=47 // pred_check_branch
          %339 = sbr.rel (%p337) target = $region68
        $region67: #{tpu_custom_call.1} parent=47 // pred_region
          %340 = dma.done [#allocation9], 128
        $region68: #{tpu_custom_call.1} parent=47 // pred_fallthru
          _
        // Predicated region
        $region69: #{tpu_custom_call.1} parent=47 // pred_check
          %p341 = pneg %p153
        $region70: #{tpu_custom_call.1} parent=47 // pred_check_branch
          %343 = sbr.rel (%p341) target = $region72
        $region71: #{tpu_custom_call.1} parent=47 // pred_region
          %344 = dma.done [#allocation12], 8192
        $region72: #{tpu_custom_call.1} parent=47 // pred_fallthru
          _
        // Predicated region
        $region73: #{tpu_custom_call.1} parent=47 // pred_check
          %p345 = pneg %p174
        $region74: #{tpu_custom_call.1} parent=47 // pred_check_branch
          %347 = sbr.rel (%p345) target = $region76
        $region75: #{tpu_custom_call.1} parent=47 // pred_region
          %348 = dma.done [#allocation12], 16
        $region76: #{tpu_custom_call.1} parent=47 // pred_fallthru
          _
        %s349 = sand.u32 %s35, 1
        %s350 = scalar_lea.sflag [#allocation3], %s349
        %s351 = sand.u32 %s35, 1
        %s352 = smul.addr %s351, 8
        %s353 = scalar_lea.vmem [#allocation2], %s352
        %p354 = pneg %p48
        %p355 = pneg %p45
        %p356 = pneg %p69
        %p357 = pneg %p66
        %p358 = pneg %p90
        %p359 = pneg %p87
        %p360 = pneg %p111
        %p361 = pneg %p108
        %p362 = pneg %p132
        %p363 = pneg %p129
        %p364 = pneg %p153
        %p365 = pneg %p150
        %p366 = pneg %p174
        %p367 = pneg %p171
        %p368 = pneg %p200
        %p369 = pneg %p197
        %s370 = sand.u32 %s187, 1
        %s371 = scalar_lea.sflag [#allocation4], %s370
        %s372 = sand.u32 %s187, 1
        %s373 = smul.addr %s372, 8
        %s374 = scalar_lea.vmem [#allocation14], %s373
        %v376 = vld [vmem:[%s320] sm:$0xff]
        %v377 = vpack.c.bf16 %v376, %v376
        %v378 = vld [vmem:[#allocation5] sm:$0xff]
        %v379 = vld [vmem:[#allocation5 + $0x8] sm:$0xff]
        %v380 = vld [vmem:[#allocation5 + $0x10] sm:$0xff]
        %v381 = vld [vmem:[#allocation5 + $0x18] sm:$0xff]
        %v382 = vld [vmem:[#allocation5 + $0x20] sm:$0xff]
        %v383 = vld [vmem:[#allocation5 + $0x28] sm:$0xff]
        %v384 = vld [vmem:[#allocation5 + $0x30] sm:$0xff]
        %v385 = vld [vmem:[#allocation5 + $0x38] sm:$0xff]
        %v386 = vld [vmem:[#allocation5 + $0x40] sm:$0xff]
        %v387 = vld [vmem:[#allocation5 + $0x48] sm:$0xff]
        %v388 = vld [vmem:[#allocation5 + $0x50] sm:$0xff]
        %v389 = vld [vmem:[#allocation5 + $0x58] sm:$0xff]
        %v390 = vld [vmem:[#allocation5 + $0x60] sm:$0xff]
        %v391 = vld [vmem:[#allocation5 + $0x68] sm:$0xff]
        %v392 = vld [vmem:[#allocation5 + $0x70] sm:$0xff]
        %v393 = vld [vmem:[#allocation5 + $0x78] sm:$0xff]
        %v394 = vld [vmem:[#allocation7] sm:$0xff]
        %v396 = vlaneseq
        %v397 = vshrl.u32 %v396, 7
        %v398 = vsub.s32 0, %v397
        %v399 = vrot.slane %v394, %v398
        %v400 = vlaneseq
        %v401 = vshrl.u32 %v400, 7
        %v402 = vsub.s32 1, %v401
        %v403 = vrot.slane %v394, %v402
        %v404 = vlaneseq
        %v405 = vshrl.u32 %v404, 7
        %v406 = vsub.s32 2, %v405
        %v407 = vrot.slane %v394, %v406
        %v408 = vlaneseq
        %v409 = vshrl.u32 %v408, 7
        %v410 = vsub.s32 3, %v409
        %v411 = vrot.slane %v394, %v410
        %v412 = vlaneseq
        %v413 = vshrl.u32 %v412, 7
        %v414 = vsub.s32 4, %v413
        %v415 = vrot.slane %v394, %v414
        %v416 = vlaneseq
        %v417 = vshrl.u32 %v416, 7
        %v418 = vsub.s32 5, %v417
        %v419 = vrot.slane %v394, %v418
        %v420 = vlaneseq
        %v421 = vshrl.u32 %v420, 7
        %v422 = vsub.s32 6, %v421
        %v423 = vrot.slane %v394, %v422
        %v424 = vlaneseq
        %v425 = vshrl.u32 %v424, 7
        %v426 = vsub.s32 7, %v425
        %v427 = vrot.slane %v394, %v426
        %v452 = vunpack.c.l.b16 %v378
        %v453 = vunpack.c.h.b16 %v378
        %v454 = vunpack.c.l.b16 %v379
        %v455 = vunpack.c.h.b16 %v379
        %v456 = vunpack.c.l.b16 %v380
        %v457 = vunpack.c.h.b16 %v380
        %v458 = vunpack.c.l.b16 %v381
        %v459 = vunpack.c.h.b16 %v381
        %v460 = vunpack.c.l.b16 %v382
        %v461 = vunpack.c.h.b16 %v382
        %v462 = vunpack.c.l.b16 %v383
        %v463 = vunpack.c.h.b16 %v383
        %v464 = vunpack.c.l.b16 %v384
        %v465 = vunpack.c.h.b16 %v384
        %v466 = vunpack.c.l.b16 %v385
        %v467 = vunpack.c.h.b16 %v385
        %v468 = vunpack.c.l.b16 %v386
        %v469 = vunpack.c.h.b16 %v386
        %v470 = vunpack.c.l.b16 %v387
        %v471 = vunpack.c.h.b16 %v387
        %v472 = vunpack.c.l.b16 %v388
        %v473 = vunpack.c.h.b16 %v388
        %v474 = vunpack.c.l.b16 %v389
        %v475 = vunpack.c.h.b16 %v389
        %v476 = vunpack.c.l.b16 %v390
        %v477 = vunpack.c.h.b16 %v390
        %v478 = vunpack.c.l.b16 %v391
        %v479 = vunpack.c.h.b16 %v391
        %v480 = vunpack.c.l.b16 %v392
        %v481 = vunpack.c.h.b16 %v392
        %v482 = vunpack.c.l.b16 %v393
        %v483 = vunpack.c.h.b16 %v393
        %v484 = vpack.c.b16 %v460, %v452
        %v485 = vpack.c.b16 %v461, %v453
        %v486 = vpack.c.b16 %v462, %v454
        %v487 = vpack.c.b16 %v463, %v455
        %v488 = vpack.c.b16 %v464, %v456
        %v489 = vpack.c.b16 %v465, %v457
        %v490 = vpack.c.b16 %v466, %v458
        %v491 = vpack.c.b16 %v467, %v459
        %v492 = vpack.c.b16 %v476, %v468
        %v493 = vpack.c.b16 %v477, %v469
        %v494 = vpack.c.b16 %v478, %v470
        %v495 = vpack.c.b16 %v479, %v471
        %v496 = vpack.c.b16 %v480, %v472
        %v497 = vpack.c.b16 %v481, %v473
        %v498 = vpack.c.b16 %v482, %v474
        %v499 = vpack.c.b16 %v483, %v475
        %vm516 = vcmask 261120
        %v518 = vsel %vm516, %v377, 0
        %520 = vmatprep.subr.bf16.mxu0 0
        %521 = vmatpush1.bf16.msra.mxu0 0
        %522 = vmatprep.subr.bf16.mxu0 0
        %523 = vmatpush1.bf16.msra.mxu0 0
        %524 = vmatprep.subr.bf16.mxu0 0
        %525 = vmatpush1.bf16.msra.mxu0 0
        %526 = vmatprep.subr.bf16.mxu0 0
        %527 = vmatpush1.bf16.msra.mxu0 0
        %528 = vmatprep.subr.bf16.mxu0 0
        %529 = vmatpush1.bf16.msra.mxu0 0
        %530 = vmatprep.subr.bf16.mxu0 0
        %531 = vmatpush1.bf16.msra.mxu0 0
        %532 = vmatprep.subr.bf16.mxu0 %v493
        %533 = vmatpush1.bf16.msra.mxu0 %v492
        %534 = vmatprep.subr.bf16.mxu0 %v485
        %535 = vmatpush1.bf16.msra.mxu0 %v484
        %536 = vmatprep.subr.bf16.mxu0 0
        %537 = vmatpush2.bf16.msra.mxu0 0
        %538 = vmatprep.subr.bf16.mxu0 0
        %539 = vmatpush2.bf16.msra.mxu0 0
        %540 = vmatprep.subr.bf16.mxu0 0
        %541 = vmatpush2.bf16.msra.mxu0 0
        %542 = vmatprep.subr.bf16.mxu0 0
        %543 = vmatpush2.bf16.msra.mxu0 0
        %544 = vmatprep.subr.bf16.mxu0 0
        %545 = vmatpush2.bf16.msra.mxu0 0
        %546 = vmatprep.subr.bf16.mxu0 0
        %547 = vmatpush2.bf16.msra.mxu0 0
        %548 = vmatprep.subr.bf16.mxu0 0
        %549 = vmatpush2.bf16.msra.mxu0 0
        %550 = vmatprep.subr.bf16.mxu0 0
        %551 = vmatpush2.bf16.msra.mxu0 0
        %552 = vmatprep.mubr.bf16.mxu0 0
        %553 = vmatmul.mubr.bf16.gmra.mxu0 %v518
        %v554 = vpop.f32.mrf.mxu0
        %v555 = vadd.f32 %v399, %v554
        %v556 = vpop.f32.mrf.mxu0
        %v557 = vadd.f32 %v403, %v556
        %v558 = vpop.f32.mrf.mxu0
        %v559 = vpop.f32.mrf.mxu0
        %560 = vdwg.mxu0
        %561 = vmatprep.subr.bf16.mxu0 0
        %562 = vmatpush1.bf16.msra.mxu0 0
        %563 = vmatprep.subr.bf16.mxu0 0
        %564 = vmatpush1.bf16.msra.mxu0 0
        %565 = vmatprep.subr.bf16.mxu0 0
        %566 = vmatpush1.bf16.msra.mxu0 0
        %567 = vmatprep.subr.bf16.mxu0 0
        %568 = vmatpush1.bf16.msra.mxu0 0
        %569 = vmatprep.subr.bf16.mxu0 0
        %570 = vmatpush1.bf16.msra.mxu0 0
        %571 = vmatprep.subr.bf16.mxu0 0
        %572 = vmatpush1.bf16.msra.mxu0 0
        %573 = vmatprep.subr.bf16.mxu0 %v495
        %574 = vmatpush1.bf16.msra.mxu0 %v494
        %575 = vmatprep.subr.bf16.mxu0 %v487
        %576 = vmatpush1.bf16.msra.mxu0 %v486
        %577 = vmatprep.subr.bf16.mxu0 0
        %578 = vmatpush2.bf16.msra.mxu0 0
        %579 = vmatprep.subr.bf16.mxu0 0
        %580 = vmatpush2.bf16.msra.mxu0 0
        %581 = vmatprep.subr.bf16.mxu0 0
        %582 = vmatpush2.bf16.msra.mxu0 0
        %583 = vmatprep.subr.bf16.mxu0 0
        %584 = vmatpush2.bf16.msra.mxu0 0
        %585 = vmatprep.subr.bf16.mxu0 0
        %586 = vmatpush2.bf16.msra.mxu0 0
        %587 = vmatprep.subr.bf16.mxu0 0
        %588 = vmatpush2.bf16.msra.mxu0 0
        %589 = vmatprep.subr.bf16.mxu0 0
        %590 = vmatpush2.bf16.msra.mxu0 0
        %591 = vmatprep.subr.bf16.mxu0 0
        %592 = vmatpush2.bf16.msra.mxu0 0
        %593 = vmatprep.mubr.bf16.mxu0 0
        %594 = vmatmul.mubr.bf16.gmra.mxu0 %v518
        %v595 = vpop.f32.mrf.mxu0
        %v596 = vadd.f32 %v407, %v595
        %v597 = vpop.f32.mrf.mxu0
        %v598 = vadd.f32 %v411, %v597
        %v599 = vpop.f32.mrf.mxu0
        %v600 = vpop.f32.mrf.mxu0
        %601 = vdwg.mxu0
        %602 = vmatprep.subr.bf16.mxu0 0
        %603 = vmatpush1.bf16.msra.mxu0 0
        %604 = vmatprep.subr.bf16.mxu0 0
        %605 = vmatpush1.bf16.msra.mxu0 0
        %606 = vmatprep.subr.bf16.mxu0 0
        %607 = vmatpush1.bf16.msra.mxu0 0
        %608 = vmatprep.subr.bf16.mxu0 0
        %609 = vmatpush1.bf16.msra.mxu0 0
        %610 = vmatprep.subr.bf16.mxu0 0
        %611 = vmatpush1.bf16.msra.mxu0 0
        %612 = vmatprep.subr.bf16.mxu0 0
        %613 = vmatpush1.bf16.msra.mxu0 0
        %614 = vmatprep.subr.bf16.mxu0 %v497
        %615 = vmatpush1.bf16.msra.mxu0 %v496
        %616 = vmatprep.subr.bf16.mxu0 %v489
        %617 = vmatpush1.bf16.msra.mxu0 %v488
        %618 = vmatprep.subr.bf16.mxu0 0
        %619 = vmatpush2.bf16.msra.mxu0 0
        %620 = vmatprep.subr.bf16.mxu0 0
        %621 = vmatpush2.bf16.msra.mxu0 0
        %622 = vmatprep.subr.bf16.mxu0 0
        %623 = vmatpush2.bf16.msra.mxu0 0
        %624 = vmatprep.subr.bf16.mxu0 0
        %625 = vmatpush2.bf16.msra.mxu0 0
        %626 = vmatprep.subr.bf16.mxu0 0
        %627 = vmatpush2.bf16.msra.mxu0 0
        %628 = vmatprep.subr.bf16.mxu0 0
        %629 = vmatpush2.bf16.msra.mxu0 0
        %630 = vmatprep.subr.bf16.mxu0 0
        %631 = vmatpush2.bf16.msra.mxu0 0
        %632 = vmatprep.subr.bf16.mxu0 0
        %633 = vmatpush2.bf16.msra.mxu0 0
        %634 = vmatprep.mubr.bf16.mxu0 0
        %635 = vmatmul.mubr.bf16.gmra.mxu0 %v518
        %v636 = vpop.f32.mrf.mxu0
        %v637 = vadd.f32 %v415, %v636
        %v638 = vpop.f32.mrf.mxu0
        %v639 = vadd.f32 %v419, %v638
        %v640 = vpop.f32.mrf.mxu0
        %v641 = vpop.f32.mrf.mxu0
        %642 = vdwg.mxu0
        %643 = vmatprep.subr.bf16.mxu0 0
        %644 = vmatpush1.bf16.msra.mxu0 0
        %645 = vmatprep.subr.bf16.mxu0 0
        %646 = vmatpush1.bf16.msra.mxu0 0
        %647 = vmatprep.subr.bf16.mxu0 0
        %648 = vmatpush1.bf16.msra.mxu0 0
        %649 = vmatprep.subr.bf16.mxu0 0
        %650 = vmatpush1.bf16.msra.mxu0 0
        %651 = vmatprep.subr.bf16.mxu0 0
        %652 = vmatpush1.bf16.msra.mxu0 0
        %653 = vmatprep.subr.bf16.mxu0 0
        %654 = vmatpush1.bf16.msra.mxu0 0
        %655 = vmatprep.subr.bf16.mxu0 %v499
        %656 = vmatpush1.bf16.msra.mxu0 %v498
        %657 = vmatprep.subr.bf16.mxu0 %v491
        %658 = vmatpush1.bf16.msra.mxu0 %v490
        %659 = vmatprep.subr.bf16.mxu0 0
        %660 = vmatpush2.bf16.msra.mxu0 0
        %661 = vmatprep.subr.bf16.mxu0 0
        %662 = vmatpush2.bf16.msra.mxu0 0
        %663 = vmatprep.subr.bf16.mxu0 0
        %664 = vmatpush2.bf16.msra.mxu0 0
        %665 = vmatprep.subr.bf16.mxu0 0
        %666 = vmatpush2.bf16.msra.mxu0 0
        %667 = vmatprep.subr.bf16.mxu0 0
        %668 = vmatpush2.bf16.msra.mxu0 0
        %669 = vmatprep.subr.bf16.mxu0 0
        %670 = vmatpush2.bf16.msra.mxu0 0
        %671 = vmatprep.subr.bf16.mxu0 0
        %672 = vmatpush2.bf16.msra.mxu0 0
        %673 = vmatprep.subr.bf16.mxu0 0
        %674 = vmatpush2.bf16.msra.mxu0 0
        %675 = vmatprep.mubr.bf16.mxu0 0
        %676 = vmatmul.mubr.bf16.gmra.mxu0 %v518
        %v677 = vpop.f32.mrf.mxu0
        %v678 = vadd.f32 %v423, %v677
        %v679 = vpop.f32.mrf.mxu0
        %v680 = vadd.f32 %v427, %v679
        %v681 = vpop.f32.mrf.mxu0
        %v682 = vpop.f32.mrf.mxu0
        %683 = vdwg.mxu0
        %vm684 = vcmp.gt.f32.partialorder %v555, 0.0
        %vm685 = vcmp.gt.f32.partialorder %v557, 0.0
        %vm686 = vcmp.gt.f32.partialorder %v596, 0.0
        %vm687 = vcmp.gt.f32.partialorder %v598, 0.0
        %vm688 = vcmp.gt.f32.partialorder %v637, 0.0
        %vm689 = vcmp.gt.f32.partialorder %v639, 0.0
        %vm690 = vcmp.gt.f32.partialorder %v678, 0.0
        %vm691 = vcmp.gt.f32.partialorder %v680, 0.0
        %v692 = vmul.f32 %v555, 0.01
        %v693 = vmul.f32 %v557, 0.01
        %v694 = vmul.f32 %v596, 0.01
        %v695 = vmul.f32 %v598, 0.01
        %v696 = vmul.f32 %v637, 0.01
        %v697 = vmul.f32 %v639, 0.01
        %v698 = vmul.f32 %v678, 0.01
        %v699 = vmul.f32 %v680, 0.01
        %v700 = vsel %vm684, %v555, %v692
        %v701 = vsel %vm685, %v557, %v693
        %v702 = vsel %vm686, %v596, %v694
        %v703 = vsel %vm687, %v598, %v695
        %v704 = vsel %vm688, %v637, %v696
        %v705 = vsel %vm689, %v639, %v697
        %v706 = vsel %vm690, %v678, %v698
        %v707 = vsel %vm691, %v680, %v699
        %v708 = vpack.c.bf16 %v700, %v700
        %v709 = vpack.c.bf16 %v701, %v701
        %v710 = vpack.c.bf16 %v702, %v702
        %v711 = vpack.c.bf16 %v703, %v703
        %v712 = vpack.c.bf16 %v704, %v704
        %v713 = vpack.c.bf16 %v705, %v705
        %v714 = vpack.c.bf16 %v706, %v706
        %v715 = vpack.c.bf16 %v707, %v707
        %v716 = vld [vmem:[#allocation8] sm:$0xff]
        %v717 = vld [vmem:[#allocation8 + $0x8] sm:$0xff]
        %v718 = vld [vmem:[#allocation8 + $0x10] sm:$0xff]
        %v719 = vld [vmem:[#allocation8 + $0x18] sm:$0xff]
        %v720 = vld [vmem:[#allocation8 + $0x20] sm:$0xff]
        %v721 = vld [vmem:[#allocation8 + $0x28] sm:$0xff]
        %v722 = vld [vmem:[#allocation8 + $0x30] sm:$0xff]
        %v723 = vld [vmem:[#allocation8 + $0x38] sm:$0xff]
        %v724 = vld [vmem:[#allocation8 + $0x40] sm:$0xff]
        %v725 = vld [vmem:[#allocation8 + $0x48] sm:$0xff]
        %v726 = vld [vmem:[#allocation8 + $0x50] sm:$0xff]
        %v727 = vld [vmem:[#allocation8 + $0x58] sm:$0xff]
        %v728 = vld [vmem:[#allocation8 + $0x60] sm:$0xff]
        %v729 = vld [vmem:[#allocation8 + $0x68] sm:$0xff]
        %v730 = vld [vmem:[#allocation8 + $0x70] sm:$0xff]
        %v731 = vld [vmem:[#allocation8 + $0x78] sm:$0xff]
        %v732 = vld [vmem:[#allocation8 + $0x80] sm:$0xff]
        %v733 = vld [vmem:[#allocation8 + $0x88] sm:$0xff]
        %v734 = vld [vmem:[#allocation8 + $0x90] sm:$0xff]
        %v735 = vld [vmem:[#allocation8 + $0x98] sm:$0xff]
        %v736 = vld [vmem:[#allocation8 + $0xa0] sm:$0xff]
        %v737 = vld [vmem:[#allocation8 + $0xa8] sm:$0xff]
        %v738 = vld [vmem:[#allocation8 + $0xb0] sm:$0xff]
        %v739 = vld [vmem:[#allocation8 + $0xb8] sm:$0xff]
        %v740 = vld [vmem:[#allocation8 + $0xc0] sm:$0xff]
        %v741 = vld [vmem:[#allocation8 + $0xc8] sm:$0xff]
        %v742 = vld [vmem:[#allocation8 + $0xd0] sm:$0xff]
        %v743 = vld [vmem:[#allocation8 + $0xd8] sm:$0xff]
        %v744 = vld [vmem:[#allocation8 + $0xe0] sm:$0xff]
        %v745 = vld [vmem:[#allocation8 + $0xe8] sm:$0xff]
        %v746 = vld [vmem:[#allocation8 + $0xf0] sm:$0xff]
        %v747 = vld [vmem:[#allocation8 + $0xf8] sm:$0xff]
        %v748 = vld [vmem:[#allocation8 + $0x100] sm:$0xff]
        %v749 = vld [vmem:[#allocation8 + $0x108] sm:$0xff]
        %v750 = vld [vmem:[#allocation8 + $0x110] sm:$0xff]
        %v751 = vld [vmem:[#allocation8 + $0x118] sm:$0xff]
        %v752 = vld [vmem:[#allocation8 + $0x120] sm:$0xff]
        %v753 = vld [vmem:[#allocation8 + $0x128] sm:$0xff]
        %v754 = vld [vmem:[#allocation8 + $0x130] sm:$0xff]
        %v755 = vld [vmem:[#allocation8 + $0x138] sm:$0xff]
        %v756 = vld [vmem:[#allocation8 + $0x140] sm:$0xff]
        %v757 = vld [vmem:[#allocation8 + $0x148] sm:$0xff]
        %v758 = vld [vmem:[#allocation8 + $0x150] sm:$0xff]
        %v759 = vld [vmem:[#allocation8 + $0x158] sm:$0xff]
        %v760 = vld [vmem:[#allocation8 + $0x160] sm:$0xff]
        %v761 = vld [vmem:[#allocation8 + $0x168] sm:$0xff]
        %v762 = vld [vmem:[#allocation8 + $0x170] sm:$0xff]
        %v763 = vld [vmem:[#allocation8 + $0x178] sm:$0xff]
        %v764 = vld [vmem:[#allocation8 + $0x180] sm:$0xff]
        %v765 = vld [vmem:[#allocation8 + $0x188] sm:$0xff]
        %v766 = vld [vmem:[#allocation8 + $0x190] sm:$0xff]
        %v767 = vld [vmem:[#allocation8 + $0x198] sm:$0xff]
        %v768 = vld [vmem:[#allocation8 + $0x1a0] sm:$0xff]
        %v769 = vld [vmem:[#allocation8 + $0x1a8] sm:$0xff]
        %v770 = vld [vmem:[#allocation8 + $0x1b0] sm:$0xff]
        %v771 = vld [vmem:[#allocation8 + $0x1b8] sm:$0xff]
        %v772 = vld [vmem:[#allocation8 + $0x1c0] sm:$0xff]
        %v773 = vld [vmem:[#allocation8 + $0x1c8] sm:$0xff]
        %v774 = vld [vmem:[#allocation8 + $0x1d0] sm:$0xff]
        %v775 = vld [vmem:[#allocation8 + $0x1d8] sm:$0xff]
        %v776 = vld [vmem:[#allocation8 + $0x1e0] sm:$0xff]
        %v777 = vld [vmem:[#allocation8 + $0x1e8] sm:$0xff]
        %v778 = vld [vmem:[#allocation8 + $0x1f0] sm:$0xff]
        %v779 = vld [vmem:[#allocation8 + $0x1f8] sm:$0xff]
        %v780 = vld [vmem:[#allocation8 + $0x200] sm:$0xff]
        %v781 = vld [vmem:[#allocation8 + $0x208] sm:$0xff]
        %v782 = vld [vmem:[#allocation8 + $0x210] sm:$0xff]
        %v783 = vld [vmem:[#allocation8 + $0x218] sm:$0xff]
        %v784 = vld [vmem:[#allocation8 + $0x220] sm:$0xff]
        %v785 = vld [vmem:[#allocation8 + $0x228] sm:$0xff]
        %v786 = vld [vmem:[#allocation8 + $0x230] sm:$0xff]
        %v787 = vld [vmem:[#allocation8 + $0x238] sm:$0xff]
        %v788 = vld [vmem:[#allocation8 + $0x240] sm:$0xff]
        %v789 = vld [vmem:[#allocation8 + $0x248] sm:$0xff]
        %v790 = vld [vmem:[#allocation8 + $0x250] sm:$0xff]
        %v791 = vld [vmem:[#allocation8 + $0x258] sm:$0xff]
        %v792 = vld [vmem:[#allocation8 + $0x260] sm:$0xff]
        %v793 = vld [vmem:[#allocation8 + $0x268] sm:$0xff]
        %v794 = vld [vmem:[#allocation8 + $0x270] sm:$0xff]
        %v795 = vld [vmem:[#allocation8 + $0x278] sm:$0xff]
        %v796 = vld [vmem:[#allocation8 + $0x280] sm:$0xff]
        %v797 = vld [vmem:[#allocation8 + $0x288] sm:$0xff]
        %v798 = vld [vmem:[#allocation8 + $0x290] sm:$0xff]
        %v799 = vld [vmem:[#allocation8 + $0x298] sm:$0xff]
        %v800 = vld [vmem:[#allocation8 + $0x2a0] sm:$0xff]
        %v801 = vld [vmem:[#allocation8 + $0x2a8] sm:$0xff]
        %v802 = vld [vmem:[#allocation8 + $0x2b0] sm:$0xff]
        %v803 = vld [vmem:[#allocation8 + $0x2b8] sm:$0xff]
        %v804 = vld [vmem:[#allocation8 + $0x2c0] sm:$0xff]
        %v805 = vld [vmem:[#allocation8 + $0x2c8] sm:$0xff]
        %v806 = vld [vmem:[#allocation8 + $0x2d0] sm:$0xff]
        %v807 = vld [vmem:[#allocation8 + $0x2d8] sm:$0xff]
        %v808 = vld [vmem:[#allocation8 + $0x2e0] sm:$0xff]
        %v809 = vld [vmem:[#allocation8 + $0x2e8] sm:$0xff]
        %v810 = vld [vmem:[#allocation8 + $0x2f0] sm:$0xff]
        %v811 = vld [vmem:[#allocation8 + $0x2f8] sm:$0xff]
        %v812 = vld [vmem:[#allocation8 + $0x300] sm:$0xff]
        %v813 = vld [vmem:[#allocation8 + $0x308] sm:$0xff]
        %v814 = vld [vmem:[#allocation8 + $0x310] sm:$0xff]
        %v815 = vld [vmem:[#allocation8 + $0x318] sm:$0xff]
        %v816 = vld [vmem:[#allocation8 + $0x320] sm:$0xff]
        %v817 = vld [vmem:[#allocation8 + $0x328] sm:$0xff]
        %v818 = vld [vmem:[#allocation8 + $0x330] sm:$0xff]
        %v819 = vld [vmem:[#allocation8 + $0x338] sm:$0xff]
        %v820 = vld [vmem:[#allocation8 + $0x340] sm:$0xff]
        %v821 = vld [vmem:[#allocation8 + $0x348] sm:$0xff]
        %v822 = vld [vmem:[#allocation8 + $0x350] sm:$0xff]
        %v823 = vld [vmem:[#allocation8 + $0x358] sm:$0xff]
        %v824 = vld [vmem:[#allocation8 + $0x360] sm:$0xff]
        %v825 = vld [vmem:[#allocation8 + $0x368] sm:$0xff]
        %v826 = vld [vmem:[#allocation8 + $0x370] sm:$0xff]
        %v827 = vld [vmem:[#allocation8 + $0x378] sm:$0xff]
        %v828 = vld [vmem:[#allocation8 + $0x380] sm:$0xff]
        %v829 = vld [vmem:[#allocation8 + $0x388] sm:$0xff]
        %v830 = vld [vmem:[#allocation8 + $0x390] sm:$0xff]
        %v831 = vld [vmem:[#allocation8 + $0x398] sm:$0xff]
        %v832 = vld [vmem:[#allocation8 + $0x3a0] sm:$0xff]
        %v833 = vld [vmem:[#allocation8 + $0x3a8] sm:$0xff]
        %v834 = vld [vmem:[#allocation8 + $0x3b0] sm:$0xff]
        %v835 = vld [vmem:[#allocation8 + $0x3b8] sm:$0xff]
        %v836 = vld [vmem:[#allocation8 + $0x3c0] sm:$0xff]
        %v837 = vld [vmem:[#allocation8 + $0x3c8] sm:$0xff]
        %v838 = vld [vmem:[#allocation8 + $0x3d0] sm:$0xff]
        %v839 = vld [vmem:[#allocation8 + $0x3d8] sm:$0xff]
        %v840 = vld [vmem:[#allocation8 + $0x3e0] sm:$0xff]
        %v841 = vld [vmem:[#allocation8 + $0x3e8] sm:$0xff]
        %v842 = vld [vmem:[#allocation8 + $0x3f0] sm:$0xff]
        %v843 = vld [vmem:[#allocation8 + $0x3f8] sm:$0xff]
        %v844 = vld [vmem:[#allocation8 + $0x400] sm:$0xff]
        %v845 = vld [vmem:[#allocation8 + $0x408] sm:$0xff]
        %v846 = vld [vmem:[#allocation8 + $0x410] sm:$0xff]
        %v847 = vld [vmem:[#allocation8 + $0x418] sm:$0xff]
        %v848 = vld [vmem:[#allocation8 + $0x420] sm:$0xff]
        %v849 = vld [vmem:[#allocation8 + $0x428] sm:$0xff]
        %v850 = vld [vmem:[#allocation8 + $0x430] sm:$0xff]
        %v851 = vld [vmem:[#allocation8 + $0x438] sm:$0xff]
        %v852 = vld [vmem:[#allocation8 + $0x440] sm:$0xff]
        %v853 = vld [vmem:[#allocation8 + $0x448] sm:$0xff]
        %v854 = vld [vmem:[#allocation8 + $0x450] sm:$0xff]
        %v855 = vld [vmem:[#allocation8 + $0x458] sm:$0xff]
        %v856 = vld [vmem:[#allocation8 + $0x460] sm:$0xff]
        %v857 = vld [vmem:[#allocation8 + $0x468] sm:$0xff]
        %v858 = vld [vmem:[#allocation8 + $0x470] sm:$0xff]
        %v859 = vld [vmem:[#allocation8 + $0x478] sm:$0xff]
        %v860 = vld [vmem:[#allocation8 + $0x480] sm:$0xff]
        %v861 = vld [vmem:[#allocation8 + $0x488] sm:$0xff]
        %v862 = vld [vmem:[#allocation8 + $0x490] sm:$0xff]
        %v863 = vld [vmem:[#allocation8 + $0x498] sm:$0xff]
        %v864 = vld [vmem:[#allocation8 + $0x4a0] sm:$0xff]
        %v865 = vld [vmem:[#allocation8 + $0x4a8] sm:$0xff]
        %v866 = vld [vmem:[#allocation8 + $0x4b0] sm:$0xff]
        %v867 = vld [vmem:[#allocation8 + $0x4b8] sm:$0xff]
        %v868 = vld [vmem:[#allocation8 + $0x4c0] sm:$0xff]
        %v869 = vld [vmem:[#allocation8 + $0x4c8] sm:$0xff]
        %v870 = vld [vmem:[#allocation8 + $0x4d0] sm:$0xff]
        %v871 = vld [vmem:[#allocation8 + $0x4d8] sm:$0xff]
        %v872 = vld [vmem:[#allocation8 + $0x4e0] sm:$0xff]
        %v873 = vld [vmem:[#allocation8 + $0x4e8] sm:$0xff]
        %v874 = vld [vmem:[#allocation8 + $0x4f0] sm:$0xff]
        %v875 = vld [vmem:[#allocation8 + $0x4f8] sm:$0xff]
        %v876 = vld [vmem:[#allocation8 + $0x500] sm:$0xff]
        %v877 = vld [vmem:[#allocation8 + $0x508] sm:$0xff]
        %v878 = vld [vmem:[#allocation8 + $0x510] sm:$0xff]
        %v879 = vld [vmem:[#allocation8 + $0x518] sm:$0xff]
        %v880 = vld [vmem:[#allocation8 + $0x520] sm:$0xff]
        %v881 = vld [vmem:[#allocation8 + $0x528] sm:$0xff]
        %v882 = vld [vmem:[#allocation8 + $0x530] sm:$0xff]
        %v883 = vld [vmem:[#allocation8 + $0x538] sm:$0xff]
        %v884 = vld [vmem:[#allocation8 + $0x540] sm:$0xff]
        %v885 = vld [vmem:[#allocation8 + $0x548] sm:$0xff]
        %v886 = vld [vmem:[#allocation8 + $0x550] sm:$0xff]
        %v887 = vld [vmem:[#allocation8 + $0x558] sm:$0xff]
        %v888 = vld [vmem:[#allocation8 + $0x560] sm:$0xff]
        %v889 = vld [vmem:[#allocation8 + $0x568] sm:$0xff]
        %v890 = vld [vmem:[#allocation8 + $0x570] sm:$0xff]
        %v891 = vld [vmem:[#allocation8 + $0x578] sm:$0xff]
        %v892 = vld [vmem:[#allocation8 + $0x580] sm:$0xff]
        %v893 = vld [vmem:[#allocation8 + $0x588] sm:$0xff]
        %v894 = vld [vmem:[#allocation8 + $0x590] sm:$0xff]
        %v895 = vld [vmem:[#allocation8 + $0x598] sm:$0xff]
        %v896 = vld [vmem:[#allocation8 + $0x5a0] sm:$0xff]
        %v897 = vld [vmem:[#allocation8 + $0x5a8] sm:$0xff]
        %v898 = vld [vmem:[#allocation8 + $0x5b0] sm:$0xff]
        %v899 = vld [vmem:[#allocation8 + $0x5b8] sm:$0xff]
        %v900 = vld [vmem:[#allocation8 + $0x5c0] sm:$0xff]
        %v901 = vld [vmem:[#allocation8 + $0x5c8] sm:$0xff]
        %v902 = vld [vmem:[#allocation8 + $0x5d0] sm:$0xff]
        %v903 = vld [vmem:[#allocation8 + $0x5d8] sm:$0xff]
        %v904 = vld [vmem:[#allocation8 + $0x5e0] sm:$0xff]
        %v905 = vld [vmem:[#allocation8 + $0x5e8] sm:$0xff]
        %v906 = vld [vmem:[#allocation8 + $0x5f0] sm:$0xff]
        %v907 = vld [vmem:[#allocation8 + $0x5f8] sm:$0xff]
        %v908 = vld [vmem:[#allocation8 + $0x600] sm:$0xff]
        %v909 = vld [vmem:[#allocation8 + $0x608] sm:$0xff]
        %v910 = vld [vmem:[#allocation8 + $0x610] sm:$0xff]
        %v911 = vld [vmem:[#allocation8 + $0x618] sm:$0xff]
        %v912 = vld [vmem:[#allocation8 + $0x620] sm:$0xff]
        %v913 = vld [vmem:[#allocation8 + $0x628] sm:$0xff]
        %v914 = vld [vmem:[#allocation8 + $0x630] sm:$0xff]
        %v915 = vld [vmem:[#allocation8 + $0x638] sm:$0xff]
        %v916 = vld [vmem:[#allocation8 + $0x640] sm:$0xff]
        %v917 = vld [vmem:[#allocation8 + $0x648] sm:$0xff]
        %v918 = vld [vmem:[#allocation8 + $0x650] sm:$0xff]
        %v919 = vld [vmem:[#allocation8 + $0x658] sm:$0xff]
        %v920 = vld [vmem:[#allocation8 + $0x660] sm:$0xff]
        %v921 = vld [vmem:[#allocation8 + $0x668] sm:$0xff]
        %v922 = vld [vmem:[#allocation8 + $0x670] sm:$0xff]
        %v923 = vld [vmem:[#allocation8 + $0x678] sm:$0xff]
        %v924 = vld [vmem:[#allocation8 + $0x680] sm:$0xff]
        %v925 = vld [vmem:[#allocation8 + $0x688] sm:$0xff]
        %v926 = vld [vmem:[#allocation8 + $0x690] sm:$0xff]
        %v927 = vld [vmem:[#allocation8 + $0x698] sm:$0xff]
        %v928 = vld [vmem:[#allocation8 + $0x6a0] sm:$0xff]
        %v929 = vld [vmem:[#allocation8 + $0x6a8] sm:$0xff]
        %v930 = vld [vmem:[#allocation8 + $0x6b0] sm:$0xff]
        %v931 = vld [vmem:[#allocation8 + $0x6b8] sm:$0xff]
        %v932 = vld [vmem:[#allocation8 + $0x6c0] sm:$0xff]
        %v933 = vld [vmem:[#allocation8 + $0x6c8] sm:$0xff]
        %v934 = vld [vmem:[#allocation8 + $0x6d0] sm:$0xff]
        %v935 = vld [vmem:[#allocation8 + $0x6d8] sm:$0xff]
        %v936 = vld [vmem:[#allocation8 + $0x6e0] sm:$0xff]
        %v937 = vld [vmem:[#allocation8 + $0x6e8] sm:$0xff]
        %v938 = vld [vmem:[#allocation8 + $0x6f0] sm:$0xff]
        %v939 = vld [vmem:[#allocation8 + $0x6f8] sm:$0xff]
        %v940 = vld [vmem:[#allocation8 + $0x700] sm:$0xff]
        %v941 = vld [vmem:[#allocation8 + $0x708] sm:$0xff]
        %v942 = vld [vmem:[#allocation8 + $0x710] sm:$0xff]
        %v943 = vld [vmem:[#allocation8 + $0x718] sm:$0xff]
        %v944 = vld [vmem:[#allocation8 + $0x720] sm:$0xff]
        %v945 = vld [vmem:[#allocation8 + $0x728] sm:$0xff]
        %v946 = vld [vmem:[#allocation8 + $0x730] sm:$0xff]
        %v947 = vld [vmem:[#allocation8 + $0x738] sm:$0xff]
        %v948 = vld [vmem:[#allocation8 + $0x740] sm:$0xff]
        %v949 = vld [vmem:[#allocation8 + $0x748] sm:$0xff]
        %v950 = vld [vmem:[#allocation8 + $0x750] sm:$0xff]
        %v951 = vld [vmem:[#allocation8 + $0x758] sm:$0xff]
        %v952 = vld [vmem:[#allocation8 + $0x760] sm:$0xff]
        %v953 = vld [vmem:[#allocation8 + $0x768] sm:$0xff]
        %v954 = vld [vmem:[#allocation8 + $0x770] sm:$0xff]
        %v955 = vld [vmem:[#allocation8 + $0x778] sm:$0xff]
        %v956 = vld [vmem:[#allocation8 + $0x780] sm:$0xff]
        %v957 = vld [vmem:[#allocation8 + $0x788] sm:$0xff]
        %v958 = vld [vmem:[#allocation8 + $0x790] sm:$0xff]
        %v959 = vld [vmem:[#allocation8 + $0x798] sm:$0xff]
        %v960 = vld [vmem:[#allocation8 + $0x7a0] sm:$0xff]
        %v961 = vld [vmem:[#allocation8 + $0x7a8] sm:$0xff]
        %v962 = vld [vmem:[#allocation8 + $0x7b0] sm:$0xff]
        %v963 = vld [vmem:[#allocation8 + $0x7b8] sm:$0xff]
        %v964 = vld [vmem:[#allocation8 + $0x7c0] sm:$0xff]
        %v965 = vld [vmem:[#allocation8 + $0x7c8] sm:$0xff]
        %v966 = vld [vmem:[#allocation8 + $0x7d0] sm:$0xff]
        %v967 = vld [vmem:[#allocation8 + $0x7d8] sm:$0xff]
        %v968 = vld [vmem:[#allocation8 + $0x7e0] sm:$0xff]
        %v969 = vld [vmem:[#allocation8 + $0x7e8] sm:$0xff]
        %v970 = vld [vmem:[#allocation8 + $0x7f0] sm:$0xff]
        %v971 = vld [vmem:[#allocation8 + $0x7f8] sm:$0xff]
        %v972 = vld [vmem:[#allocation8 + $0x800] sm:$0xff]
        %v973 = vld [vmem:[#allocation8 + $0x808] sm:$0xff]
        %v974 = vld [vmem:[#allocation8 + $0x810] sm:$0xff]
        %v975 = vld [vmem:[#allocation8 + $0x818] sm:$0xff]
        %v976 = vld [vmem:[#allocation8 + $0x820] sm:$0xff]
        %v977 = vld [vmem:[#allocation8 + $0x828] sm:$0xff]
        %v978 = vld [vmem:[#allocation8 + $0x830] sm:$0xff]
        %v979 = vld [vmem:[#allocation8 + $0x838] sm:$0xff]
        %v980 = vld [vmem:[#allocation8 + $0x840] sm:$0xff]
        %v981 = vld [vmem:[#allocation8 + $0x848] sm:$0xff]
        %v982 = vld [vmem:[#allocation8 + $0x850] sm:$0xff]
        %v983 = vld [vmem:[#allocation8 + $0x858] sm:$0xff]
        %v984 = vld [vmem:[#allocation8 + $0x860] sm:$0xff]
        %v985 = vld [vmem:[#allocation8 + $0x868] sm:$0xff]
        %v986 = vld [vmem:[#allocation8 + $0x870] sm:$0xff]
        %v987 = vld [vmem:[#allocation8 + $0x878] sm:$0xff]
        %v988 = vld [vmem:[#allocation8 + $0x880] sm:$0xff]
        %v989 = vld [vmem:[#allocation8 + $0x888] sm:$0xff]
        %v990 = vld [vmem:[#allocation8 + $0x890] sm:$0xff]
        %v991 = vld [vmem:[#allocation8 + $0x898] sm:$0xff]
        %v992 = vld [vmem:[#allocation8 + $0x8a0] sm:$0xff]
        %v993 = vld [vmem:[#allocation8 + $0x8a8] sm:$0xff]
        %v994 = vld [vmem:[#allocation8 + $0x8b0] sm:$0xff]
        %v995 = vld [vmem:[#allocation8 + $0x8b8] sm:$0xff]
        %v996 = vld [vmem:[#allocation8 + $0x8c0] sm:$0xff]
        %v997 = vld [vmem:[#allocation8 + $0x8c8] sm:$0xff]
        %v998 = vld [vmem:[#allocation8 + $0x8d0] sm:$0xff]
        %v999 = vld [vmem:[#allocation8 + $0x8d8] sm:$0xff]
        %v1000 = vld [vmem:[#allocation8 + $0x8e0] sm:$0xff]
        %v1001 = vld [vmem:[#allocation8 + $0x8e8] sm:$0xff]
        %v1002 = vld [vmem:[#allocation8 + $0x8f0] sm:$0xff]
        %v1003 = vld [vmem:[#allocation8 + $0x8f8] sm:$0xff]
        %v1004 = vld [vmem:[#allocation8 + $0x900] sm:$0xff]
        %v1005 = vld [vmem:[#allocation8 + $0x908] sm:$0xff]
        %v1006 = vld [vmem:[#allocation8 + $0x910] sm:$0xff]
        %v1007 = vld [vmem:[#allocation8 + $0x918] sm:$0xff]
        %v1008 = vld [vmem:[#allocation8 + $0x920] sm:$0xff]
        %v1009 = vld [vmem:[#allocation8 + $0x928] sm:$0xff]
        %v1010 = vld [vmem:[#allocation8 + $0x930] sm:$0xff]
        %v1011 = vld [vmem:[#allocation8 + $0x938] sm:$0xff]
        %v1012 = vld [vmem:[#allocation8 + $0x940] sm:$0xff]
        %v1013 = vld [vmem:[#allocation8 + $0x948] sm:$0xff]
        %v1014 = vld [vmem:[#allocation8 + $0x950] sm:$0xff]
        %v1015 = vld [vmem:[#allocation8 + $0x958] sm:$0xff]
        %v1016 = vld [vmem:[#allocation8 + $0x960] sm:$0xff]
        %v1017 = vld [vmem:[#allocation8 + $0x968] sm:$0xff]
        %v1018 = vld [vmem:[#allocation8 + $0x970] sm:$0xff]
        %v1019 = vld [vmem:[#allocation8 + $0x978] sm:$0xff]
        %v1020 = vld [vmem:[#allocation8 + $0x980] sm:$0xff]
        %v1021 = vld [vmem:[#allocation8 + $0x988] sm:$0xff]
        %v1022 = vld [vmem:[#allocation8 + $0x990] sm:$0xff]
        %v1023 = vld [vmem:[#allocation8 + $0x998] sm:$0xff]
        %v1024 = vld [vmem:[#allocation8 + $0x9a0] sm:$0xff]
        %v1025 = vld [vmem:[#allocation8 + $0x9a8] sm:$0xff]
        %v1026 = vld [vmem:[#allocation8 + $0x9b0] sm:$0xff]
        %v1027 = vld [vmem:[#allocation8 + $0x9b8] sm:$0xff]
        %v1028 = vld [vmem:[#allocation8 + $0x9c0] sm:$0xff]
        %v1029 = vld [vmem:[#allocation8 + $0x9c8] sm:$0xff]
        %v1030 = vld [vmem:[#allocation8 + $0x9d0] sm:$0xff]
        %v1031 = vld [vmem:[#allocation8 + $0x9d8] sm:$0xff]
        %v1032 = vld [vmem:[#allocation8 + $0x9e0] sm:$0xff]
        %v1033 = vld [vmem:[#allocation8 + $0x9e8] sm:$0xff]
        %v1034 = vld [vmem:[#allocation8 + $0x9f0] sm:$0xff]
        %v1035 = vld [vmem:[#allocation8 + $0x9f8] sm:$0xff]
        %v1036 = vld [vmem:[#allocation8 + $0xa00] sm:$0xff]
        %v1037 = vld [vmem:[#allocation8 + $0xa08] sm:$0xff]
        %v1038 = vld [vmem:[#allocation8 + $0xa10] sm:$0xff]
        %v1039 = vld [vmem:[#allocation8 + $0xa18] sm:$0xff]
        %v1040 = vld [vmem:[#allocation8 + $0xa20] sm:$0xff]
        %v1041 = vld [vmem:[#allocation8 + $0xa28] sm:$0xff]
        %v1042 = vld [vmem:[#allocation8 + $0xa30] sm:$0xff]
        %v1043 = vld [vmem:[#allocation8 + $0xa38] sm:$0xff]
        %v1044 = vld [vmem:[#allocation8 + $0xa40] sm:$0xff]
        %v1045 = vld [vmem:[#allocation8 + $0xa48] sm:$0xff]
        %v1046 = vld [vmem:[#allocation8 + $0xa50] sm:$0xff]
        %v1047 = vld [vmem:[#allocation8 + $0xa58] sm:$0xff]
        %v1048 = vld [vmem:[#allocation8 + $0xa60] sm:$0xff]
        %v1049 = vld [vmem:[#allocation8 + $0xa68] sm:$0xff]
        %v1050 = vld [vmem:[#allocation8 + $0xa70] sm:$0xff]
        %v1051 = vld [vmem:[#allocation8 + $0xa78] sm:$0xff]
        %v1052 = vld [vmem:[#allocation8 + $0xa80] sm:$0xff]
        %v1053 = vld [vmem:[#allocation8 + $0xa88] sm:$0xff]
        %v1054 = vld [vmem:[#allocation8 + $0xa90] sm:$0xff]
        %v1055 = vld [vmem:[#allocation8 + $0xa98] sm:$0xff]
        %v1056 = vld [vmem:[#allocation8 + $0xaa0] sm:$0xff]
        %v1057 = vld [vmem:[#allocation8 + $0xaa8] sm:$0xff]
        %v1058 = vld [vmem:[#allocation8 + $0xab0] sm:$0xff]
        %v1059 = vld [vmem:[#allocation8 + $0xab8] sm:$0xff]
        %v1060 = vld [vmem:[#allocation8 + $0xac0] sm:$0xff]
        %v1061 = vld [vmem:[#allocation8 + $0xac8] sm:$0xff]
        %v1062 = vld [vmem:[#allocation8 + $0xad0] sm:$0xff]
        %v1063 = vld [vmem:[#allocation8 + $0xad8] sm:$0xff]
        %v1064 = vld [vmem:[#allocation8 + $0xae0] sm:$0xff]
        %v1065 = vld [vmem:[#allocation8 + $0xae8] sm:$0xff]
        %v1066 = vld [vmem:[#allocation8 + $0xaf0] sm:$0xff]
        %v1067 = vld [vmem:[#allocation8 + $0xaf8] sm:$0xff]
        %v1068 = vld [vmem:[#allocation8 + $0xb00] sm:$0xff]
        %v1069 = vld [vmem:[#allocation8 + $0xb08] sm:$0xff]
        %v1070 = vld [vmem:[#allocation8 + $0xb10] sm:$0xff]
        %v1071 = vld [vmem:[#allocation8 + $0xb18] sm:$0xff]
        %v1072 = vld [vmem:[#allocation8 + $0xb20] sm:$0xff]
        %v1073 = vld [vmem:[#allocation8 + $0xb28] sm:$0xff]
        %v1074 = vld [vmem:[#allocation8 + $0xb30] sm:$0xff]
        %v1075 = vld [vmem:[#allocation8 + $0xb38] sm:$0xff]
        %v1076 = vld [vmem:[#allocation8 + $0xb40] sm:$0xff]
        %v1077 = vld [vmem:[#allocation8 + $0xb48] sm:$0xff]
        %v1078 = vld [vmem:[#allocation8 + $0xb50] sm:$0xff]
        %v1079 = vld [vmem:[#allocation8 + $0xb58] sm:$0xff]
        %v1080 = vld [vmem:[#allocation8 + $0xb60] sm:$0xff]
        %v1081 = vld [vmem:[#allocation8 + $0xb68] sm:$0xff]
        %v1082 = vld [vmem:[#allocation8 + $0xb70] sm:$0xff]
        %v1083 = vld [vmem:[#allocation8 + $0xb78] sm:$0xff]
        %v1084 = vld [vmem:[#allocation8 + $0xb80] sm:$0xff]
        %v1085 = vld [vmem:[#allocation8 + $0xb88] sm:$0xff]
        %v1086 = vld [vmem:[#allocation8 + $0xb90] sm:$0xff]
        %v1087 = vld [vmem:[#allocation8 + $0xb98] sm:$0xff]
        %v1088 = vld [vmem:[#allocation8 + $0xba0] sm:$0xff]
        %v1089 = vld [vmem:[#allocation8 + $0xba8] sm:$0xff]
        %v1090 = vld [vmem:[#allocation8 + $0xbb0] sm:$0xff]
        %v1091 = vld [vmem:[#allocation8 + $0xbb8] sm:$0xff]
        %v1092 = vld [vmem:[#allocation8 + $0xbc0] sm:$0xff]
        %v1093 = vld [vmem:[#allocation8 + $0xbc8] sm:$0xff]
        %v1094 = vld [vmem:[#allocation8 + $0xbd0] sm:$0xff]
        %v1095 = vld [vmem:[#allocation8 + $0xbd8] sm:$0xff]
        %v1096 = vld [vmem:[#allocation8 + $0xbe0] sm:$0xff]
        %v1097 = vld [vmem:[#allocation8 + $0xbe8] sm:$0xff]
        %v1098 = vld [vmem:[#allocation8 + $0xbf0] sm:$0xff]
        %v1099 = vld [vmem:[#allocation8 + $0xbf8] sm:$0xff]
        %v1100 = vld [vmem:[#allocation8 + $0xc00] sm:$0xff]
        %v1101 = vld [vmem:[#allocation8 + $0xc08] sm:$0xff]
        %v1102 = vld [vmem:[#allocation8 + $0xc10] sm:$0xff]
        %v1103 = vld [vmem:[#allocation8 + $0xc18] sm:$0xff]
        %v1104 = vld [vmem:[#allocation8 + $0xc20] sm:$0xff]
        %v1105 = vld [vmem:[#allocation8 + $0xc28] sm:$0xff]
        %v1106 = vld [vmem:[#allocation8 + $0xc30] sm:$0xff]
        %v1107 = vld [vmem:[#allocation8 + $0xc38] sm:$0xff]
        %v1108 = vld [vmem:[#allocation8 + $0xc40] sm:$0xff]
        %v1109 = vld [vmem:[#allocation8 + $0xc48] sm:$0xff]
        %v1110 = vld [vmem:[#allocation8 + $0xc50] sm:$0xff]
        %v1111 = vld [vmem:[#allocation8 + $0xc58] sm:$0xff]
        %v1112 = vld [vmem:[#allocation8 + $0xc60] sm:$0xff]
        %v1113 = vld [vmem:[#allocation8 + $0xc68] sm:$0xff]
        %v1114 = vld [vmem:[#allocation8 + $0xc70] sm:$0xff]
        %v1115 = vld [vmem:[#allocation8 + $0xc78] sm:$0xff]
        %v1116 = vld [vmem:[#allocation8 + $0xc80] sm:$0xff]
        %v1117 = vld [vmem:[#allocation8 + $0xc88] sm:$0xff]
        %v1118 = vld [vmem:[#allocation8 + $0xc90] sm:$0xff]
        %v1119 = vld [vmem:[#allocation8 + $0xc98] sm:$0xff]
        %v1120 = vld [vmem:[#allocation8 + $0xca0] sm:$0xff]
        %v1121 = vld [vmem:[#allocation8 + $0xca8] sm:$0xff]
        %v1122 = vld [vmem:[#allocation8 + $0xcb0] sm:$0xff]
        %v1123 = vld [vmem:[#allocation8 + $0xcb8] sm:$0xff]
        %v1124 = vld [vmem:[#allocation8 + $0xcc0] sm:$0xff]
        %v1125 = vld [vmem:[#allocation8 + $0xcc8] sm:$0xff]
        %v1126 = vld [vmem:[#allocation8 + $0xcd0] sm:$0xff]
        %v1127 = vld [vmem:[#allocation8 + $0xcd8] sm:$0xff]
        %v1128 = vld [vmem:[#allocation8 + $0xce0] sm:$0xff]
        %v1129 = vld [vmem:[#allocation8 + $0xce8] sm:$0xff]
        %v1130 = vld [vmem:[#allocation8 + $0xcf0] sm:$0xff]
        %v1131 = vld [vmem:[#allocation8 + $0xcf8] sm:$0xff]
        %v1132 = vld [vmem:[#allocation8 + $0xd00] sm:$0xff]
        %v1133 = vld [vmem:[#allocation8 + $0xd08] sm:$0xff]
        %v1134 = vld [vmem:[#allocation8 + $0xd10] sm:$0xff]
        %v1135 = vld [vmem:[#allocation8 + $0xd18] sm:$0xff]
        %v1136 = vld [vmem:[#allocation8 + $0xd20] sm:$0xff]
        %v1137 = vld [vmem:[#allocation8 + $0xd28] sm:$0xff]
        %v1138 = vld [vmem:[#allocation8 + $0xd30] sm:$0xff]
        %v1139 = vld [vmem:[#allocation8 + $0xd38] sm:$0xff]
        %v1140 = vld [vmem:[#allocation8 + $0xd40] sm:$0xff]
        %v1141 = vld [vmem:[#allocation8 + $0xd48] sm:$0xff]
        %v1142 = vld [vmem:[#allocation8 + $0xd50] sm:$0xff]
        %v1143 = vld [vmem:[#allocation8 + $0xd58] sm:$0xff]
        %v1144 = vld [vmem:[#allocation8 + $0xd60] sm:$0xff]
        %v1145 = vld [vmem:[#allocation8 + $0xd68] sm:$0xff]
        %v1146 = vld [vmem:[#allocation8 + $0xd70] sm:$0xff]
        %v1147 = vld [vmem:[#allocation8 + $0xd78] sm:$0xff]
        %v1148 = vld [vmem:[#allocation8 + $0xd80] sm:$0xff]
        %v1149 = vld [vmem:[#allocation8 + $0xd88] sm:$0xff]
        %v1150 = vld [vmem:[#allocation8 + $0xd90] sm:$0xff]
        %v1151 = vld [vmem:[#allocation8 + $0xd98] sm:$0xff]
        %v1152 = vld [vmem:[#allocation8 + $0xda0] sm:$0xff]
        %v1153 = vld [vmem:[#allocation8 + $0xda8] sm:$0xff]
        %v1154 = vld [vmem:[#allocation8 + $0xdb0] sm:$0xff]
        %v1155 = vld [vmem:[#allocation8 + $0xdb8] sm:$0xff]
        %v1156 = vld [vmem:[#allocation8 + $0xdc0] sm:$0xff]
        %v1157 = vld [vmem:[#allocation8 + $0xdc8] sm:$0xff]
        %v1158 = vld [vmem:[#allocation8 + $0xdd0] sm:$0xff]
        %v1159 = vld [vmem:[#allocation8 + $0xdd8] sm:$0xff]
        %v1160 = vld [vmem:[#allocation8 + $0xde0] sm:$0xff]
        %v1161 = vld [vmem:[#allocation8 + $0xde8] sm:$0xff]
        %v1162 = vld [vmem:[#allocation8 + $0xdf0] sm:$0xff]
        %v1163 = vld [vmem:[#allocation8 + $0xdf8] sm:$0xff]
        %v1164 = vld [vmem:[#allocation8 + $0xe00] sm:$0xff]
        %v1165 = vld [vmem:[#allocation8 + $0xe08] sm:$0xff]
        %v1166 = vld [vmem:[#allocation8 + $0xe10] sm:$0xff]
        %v1167 = vld [vmem:[#allocation8 + $0xe18] sm:$0xff]
        %v1168 = vld [vmem:[#allocation8 + $0xe20] sm:$0xff]
        %v1169 = vld [vmem:[#allocation8 + $0xe28] sm:$0xff]
        %v1170 = vld [vmem:[#allocation8 + $0xe30] sm:$0xff]
        %v1171 = vld [vmem:[#allocation8 + $0xe38] sm:$0xff]
        %v1172 = vld [vmem:[#allocation8 + $0xe40] sm:$0xff]
        %v1173 = vld [vmem:[#allocation8 + $0xe48] sm:$0xff]
        %v1174 = vld [vmem:[#allocation8 + $0xe50] sm:$0xff]
        %v1175 = vld [vmem:[#allocation8 + $0xe58] sm:$0xff]
        %v1176 = vld [vmem:[#allocation8 + $0xe60] sm:$0xff]
        %v1177 = vld [vmem:[#allocation8 + $0xe68] sm:$0xff]
        %v1178 = vld [vmem:[#allocation8 + $0xe70] sm:$0xff]
        %v1179 = vld [vmem:[#allocation8 + $0xe78] sm:$0xff]
        %v1180 = vld [vmem:[#allocation8 + $0xe80] sm:$0xff]
        %v1181 = vld [vmem:[#allocation8 + $0xe88] sm:$0xff]
        %v1182 = vld [vmem:[#allocation8 + $0xe90] sm:$0xff]
        %v1183 = vld [vmem:[#allocation8 + $0xe98] sm:$0xff]
        %v1184 = vld [vmem:[#allocation8 + $0xea0] sm:$0xff]
        %v1185 = vld [vmem:[#allocation8 + $0xea8] sm:$0xff]
        %v1186 = vld [vmem:[#allocation8 + $0xeb0] sm:$0xff]
        %v1187 = vld [vmem:[#allocation8 + $0xeb8] sm:$0xff]
        %v1188 = vld [vmem:[#allocation8 + $0xec0] sm:$0xff]
        %v1189 = vld [vmem:[#allocation8 + $0xec8] sm:$0xff]
        %v1190 = vld [vmem:[#allocation8 + $0xed0] sm:$0xff]
        %v1191 = vld [vmem:[#allocation8 + $0xed8] sm:$0xff]
        %v1192 = vld [vmem:[#allocation8 + $0xee0] sm:$0xff]
        %v1193 = vld [vmem:[#allocation8 + $0xee8] sm:$0xff]
        %v1194 = vld [vmem:[#allocation8 + $0xef0] sm:$0xff]
        %v1195 = vld [vmem:[#allocation8 + $0xef8] sm:$0xff]
        %v1196 = vld [vmem:[#allocation8 + $0xf00] sm:$0xff]
        %v1197 = vld [vmem:[#allocation8 + $0xf08] sm:$0xff]
        %v1198 = vld [vmem:[#allocation8 + $0xf10] sm:$0xff]
        %v1199 = vld [vmem:[#allocation8 + $0xf18] sm:$0xff]
        %v1200 = vld [vmem:[#allocation8 + $0xf20] sm:$0xff]
        %v1201 = vld [vmem:[#allocation8 + $0xf28] sm:$0xff]
        %v1202 = vld [vmem:[#allocation8 + $0xf30] sm:$0xff]
        %v1203 = vld [vmem:[#allocation8 + $0xf38] sm:$0xff]
        %v1204 = vld [vmem:[#allocation8 + $0xf40] sm:$0xff]
        %v1205 = vld [vmem:[#allocation8 + $0xf48] sm:$0xff]
        %v1206 = vld [vmem:[#allocation8 + $0xf50] sm:$0xff]
        %v1207 = vld [vmem:[#allocation8 + $0xf58] sm:$0xff]
        %v1208 = vld [vmem:[#allocation8 + $0xf60] sm:$0xff]
        %v1209 = vld [vmem:[#allocation8 + $0xf68] sm:$0xff]
        %v1210 = vld [vmem:[#allocation8 + $0xf70] sm:$0xff]
        %v1211 = vld [vmem:[#allocation8 + $0xf78] sm:$0xff]
        %v1212 = vld [vmem:[#allocation8 + $0xf80] sm:$0xff]
        %v1213 = vld [vmem:[#allocation8 + $0xf88] sm:$0xff]
        %v1214 = vld [vmem:[#allocation8 + $0xf90] sm:$0xff]
        %v1215 = vld [vmem:[#allocation8 + $0xf98] sm:$0xff]
        %v1216 = vld [vmem:[#allocation8 + $0xfa0] sm:$0xff]
        %v1217 = vld [vmem:[#allocation8 + $0xfa8] sm:$0xff]
        %v1218 = vld [vmem:[#allocation8 + $0xfb0] sm:$0xff]
        %v1219 = vld [vmem:[#allocation8 + $0xfb8] sm:$0xff]
        %v1220 = vld [vmem:[#allocation8 + $0xfc0] sm:$0xff]
        %v1221 = vld [vmem:[#allocation8 + $0xfc8] sm:$0xff]
        %v1222 = vld [vmem:[#allocation8 + $0xfd0] sm:$0xff]
        %v1223 = vld [vmem:[#allocation8 + $0xfd8] sm:$0xff]
        %v1224 = vld [vmem:[#allocation8 + $0xfe0] sm:$0xff]
        %v1225 = vld [vmem:[#allocation8 + $0xfe8] sm:$0xff]
        %v1226 = vld [vmem:[#allocation8 + $0xff0] sm:$0xff]
        %v1227 = vld [vmem:[#allocation8 + $0xff8] sm:$0xff]
        %v1228 = vld [vmem:[#allocation10] sm:$0xff]
        %v1230 = vlaneseq
        %v1231 = vshrl.u32 %v1230, 7
        %v1232 = vsub.s32 0, %v1231
        %v1233 = vrot.slane %v1228, %v1232
        %v1234 = vlaneseq
        %v1235 = vshrl.u32 %v1234, 7
        %v1236 = vsub.s32 1, %v1235
        %v1237 = vrot.slane %v1228, %v1236
        %v1238 = vlaneseq
        %v1239 = vshrl.u32 %v1238, 7
        %v1240 = vsub.s32 2, %v1239
        %v1241 = vrot.slane %v1228, %v1240
        %v1242 = vlaneseq
        %v1243 = vshrl.u32 %v1242, 7
        %v1244 = vsub.s32 3, %v1243
        %v1245 = vrot.slane %v1228, %v1244
        %v1246 = vlaneseq
        %v1247 = vshrl.u32 %v1246, 7
        %v1248 = vsub.s32 4, %v1247
        %v1249 = vrot.slane %v1228, %v1248
        %v1250 = vlaneseq
        %v1251 = vshrl.u32 %v1250, 7
        %v1252 = vsub.s32 5, %v1251
        %v1253 = vrot.slane %v1228, %v1252
        %v1254 = vlaneseq
        %v1255 = vshrl.u32 %v1254, 7
        %v1256 = vsub.s32 6, %v1255
        %v1257 = vrot.slane %v1228, %v1256
        %v1258 = vlaneseq
        %v1259 = vshrl.u32 %v1258, 7
        %v1260 = vsub.s32 7, %v1259
        %v1261 = vrot.slane %v1228, %v1260
        %v1782 = vunpack.c.l.b16 %v716
        %v1783 = vunpack.c.h.b16 %v716
        %v1784 = vunpack.c.l.b16 %v717
        %v1785 = vunpack.c.h.b16 %v717
        %v1786 = vunpack.c.l.b16 %v718
        %v1787 = vunpack.c.h.b16 %v718
        %v1788 = vunpack.c.l.b16 %v719
        %v1789 = vunpack.c.h.b16 %v719
        %v1790 = vunpack.c.l.b16 %v720
        %v1791 = vunpack.c.h.b16 %v720
        %v1792 = vunpack.c.l.b16 %v721
        %v1793 = vunpack.c.h.b16 %v721
        %v1794 = vunpack.c.l.b16 %v722
        %v1795 = vunpack.c.h.b16 %v722
        %v1796 = vunpack.c.l.b16 %v723
        %v1797 = vunpack.c.h.b16 %v723
        %v1798 = vunpack.c.l.b16 %v724
        %v1799 = vunpack.c.h.b16 %v724
        %v1800 = vunpack.c.l.b16 %v725
        %v1801 = vunpack.c.h.b16 %v725
        %v1802 = vunpack.c.l.b16 %v726
        %v1803 = vunpack.c.h.b16 %v726
        %v1804 = vunpack.c.l.b16 %v727
        %v1805 = vunpack.c.h.b16 %v727
        %v1806 = vunpack.c.l.b16 %v728
        %v1807 = vunpack.c.h.b16 %v728
        %v1808 = vunpack.c.l.b16 %v729
        %v1809 = vunpack.c.h.b16 %v729
        %v1810 = vunpack.c.l.b16 %v730
        %v1811 = vunpack.c.h.b16 %v730
        %v1812 = vunpack.c.l.b16 %v731
        %v1813 = vunpack.c.h.b16 %v731
        %v1814 = vunpack.c.l.b16 %v732
        %v1815 = vunpack.c.h.b16 %v732
        %v1816 = vunpack.c.l.b16 %v733
        %v1817 = vunpack.c.h.b16 %v733
        %v1818 = vunpack.c.l.b16 %v734
        %v1819 = vunpack.c.h.b16 %v734
        %v1820 = vunpack.c.l.b16 %v735
        %v1821 = vunpack.c.h.b16 %v735
        %v1822 = vunpack.c.l.b16 %v736
        %v1823 = vunpack.c.h.b16 %v736
        %v1824 = vunpack.c.l.b16 %v737
        %v1825 = vunpack.c.h.b16 %v737
        %v1826 = vunpack.c.l.b16 %v738
        %v1827 = vunpack.c.h.b16 %v738
        %v1828 = vunpack.c.l.b16 %v739
        %v1829 = vunpack.c.h.b16 %v739
        %v1830 = vunpack.c.l.b16 %v740
        %v1831 = vunpack.c.h.b16 %v740
        %v1832 = vunpack.c.l.b16 %v741
        %v1833 = vunpack.c.h.b16 %v741
        %v1834 = vunpack.c.l.b16 %v742
        %v1835 = vunpack.c.h.b16 %v742
        %v1836 = vunpack.c.l.b16 %v743
        %v1837 = vunpack.c.h.b16 %v743
        %v1838 = vunpack.c.l.b16 %v744
        %v1839 = vunpack.c.h.b16 %v744
        %v1840 = vunpack.c.l.b16 %v745
        %v1841 = vunpack.c.h.b16 %v745
        %v1842 = vunpack.c.l.b16 %v746
        %v1843 = vunpack.c.h.b16 %v746
        %v1844 = vunpack.c.l.b16 %v747
        %v1845 = vunpack.c.h.b16 %v747
        %v1846 = vunpack.c.l.b16 %v748
        %v1847 = vunpack.c.h.b16 %v748
        %v1848 = vunpack.c.l.b16 %v749
        %v1849 = vunpack.c.h.b16 %v749
        %v1850 = vunpack.c.l.b16 %v750
        %v1851 = vunpack.c.h.b16 %v750
        %v1852 = vunpack.c.l.b16 %v751
        %v1853 = vunpack.c.h.b16 %v751
        %v1854 = vunpack.c.l.b16 %v752
        %v1855 = vunpack.c.h.b16 %v752
        %v1856 = vunpack.c.l.b16 %v753
        %v1857 = vunpack.c.h.b16 %v753
        %v1858 = vunpack.c.l.b16 %v754
        %v1859 = vunpack.c.h.b16 %v754
        %v1860 = vunpack.c.l.b16 %v755
        %v1861 = vunpack.c.h.b16 %v755
        %v1862 = vunpack.c.l.b16 %v756
        %v1863 = vunpack.c.h.b16 %v756
        %v1864 = vunpack.c.l.b16 %v757
        %v1865 = vunpack.c.h.b16 %v757
        %v1866 = vunpack.c.l.b16 %v758
        %v1867 = vunpack.c.h.b16 %v758
        %v1868 = vunpack.c.l.b16 %v759
        %v1869 = vunpack.c.h.b16 %v759
        %v1870 = vunpack.c.l.b16 %v760
        %v1871 = vunpack.c.h.b16 %v760
        %v1872 = vunpack.c.l.b16 %v761
        %v1873 = vunpack.c.h.b16 %v761
        %v1874 = vunpack.c.l.b16 %v762
        %v1875 = vunpack.c.h.b16 %v762
        %v1876 = vunpack.c.l.b16 %v763
        %v1877 = vunpack.c.h.b16 %v763
        %v1878 = vunpack.c.l.b16 %v764
        %v1879 = vunpack.c.h.b16 %v764
        %v1880 = vunpack.c.l.b16 %v765
        %v1881 = vunpack.c.h.b16 %v765
        %v1882 = vunpack.c.l.b16 %v766
        %v1883 = vunpack.c.h.b16 %v766
        %v1884 = vunpack.c.l.b16 %v767
        %v1885 = vunpack.c.h.b16 %v767
        %v1886 = vunpack.c.l.b16 %v768
        %v1887 = vunpack.c.h.b16 %v768
        %v1888 = vunpack.c.l.b16 %v769
        %v1889 = vunpack.c.h.b16 %v769
        %v1890 = vunpack.c.l.b16 %v770
        %v1891 = vunpack.c.h.b16 %v770
        %v1892 = vunpack.c.l.b16 %v771
        %v1893 = vunpack.c.h.b16 %v771
        %v1894 = vunpack.c.l.b16 %v772
        %v1895 = vunpack.c.h.b16 %v772
        %v1896 = vunpack.c.l.b16 %v773
        %v1897 = vunpack.c.h.b16 %v773
        %v1898 = vunpack.c.l.b16 %v774
        %v1899 = vunpack.c.h.b16 %v774
        %v1900 = vunpack.c.l.b16 %v775
        %v1901 = vunpack.c.h.b16 %v775
        %v1902 = vunpack.c.l.b16 %v776
        %v1903 = vunpack.c.h.b16 %v776
        %v1904 = vunpack.c.l.b16 %v777
        %v1905 = vunpack.c.h.b16 %v777
        %v1906 = vunpack.c.l.b16 %v778
        %v1907 = vunpack.c.h.b16 %v778
        %v1908 = vunpack.c.l.b16 %v779
        %v1909 = vunpack.c.h.b16 %v779
        %v1910 = vunpack.c.l.b16 %v780
        %v1911 = vunpack.c.h.b16 %v780
        %v1912 = vunpack.c.l.b16 %v781
        %v1913 = vunpack.c.h.b16 %v781
        %v1914 = vunpack.c.l.b16 %v782
        %v1915 = vunpack.c.h.b16 %v782
        %v1916 = vunpack.c.l.b16 %v783
        %v1917 = vunpack.c.h.b16 %v783
        %v1918 = vunpack.c.l.b16 %v784
        %v1919 = vunpack.c.h.b16 %v784
        %v1920 = vunpack.c.l.b16 %v785
        %v1921 = vunpack.c.h.b16 %v785
        %v1922 = vunpack.c.l.b16 %v786
        %v1923 = vunpack.c.h.b16 %v786
        %v1924 = vunpack.c.l.b16 %v787
        %v1925 = vunpack.c.h.b16 %v787
        %v1926 = vunpack.c.l.b16 %v788
        %v1927 = vunpack.c.h.b16 %v788
        %v1928 = vunpack.c.l.b16 %v789
        %v1929 = vunpack.c.h.b16 %v789
        %v1930 = vunpack.c.l.b16 %v790
        %v1931 = vunpack.c.h.b16 %v790
        %v1932 = vunpack.c.l.b16 %v791
        %v1933 = vunpack.c.h.b16 %v791
        %v1934 = vunpack.c.l.b16 %v792
        %v1935 = vunpack.c.h.b16 %v792
        %v1936 = vunpack.c.l.b16 %v793
        %v1937 = vunpack.c.h.b16 %v793
        %v1938 = vunpack.c.l.b16 %v794
        %v1939 = vunpack.c.h.b16 %v794
        %v1940 = vunpack.c.l.b16 %v795
        %v1941 = vunpack.c.h.b16 %v795
        %v1942 = vunpack.c.l.b16 %v796
        %v1943 = vunpack.c.h.b16 %v796
        %v1944 = vunpack.c.l.b16 %v797
        %v1945 = vunpack.c.h.b16 %v797
        %v1946 = vunpack.c.l.b16 %v798
        %v1947 = vunpack.c.h.b16 %v798
        %v1948 = vunpack.c.l.b16 %v799
        %v1949 = vunpack.c.h.b16 %v799
        %v1950 = vunpack.c.l.b16 %v800
        %v1951 = vunpack.c.h.b16 %v800
        %v1952 = vunpack.c.l.b16 %v801
        %v1953 = vunpack.c.h.b16 %v801
        %v1954 = vunpack.c.l.b16 %v802
        %v1955 = vunpack.c.h.b16 %v802
        %v1956 = vunpack.c.l.b16 %v803
        %v1957 = vunpack.c.h.b16 %v803
        %v1958 = vunpack.c.l.b16 %v804
        %v1959 = vunpack.c.h.b16 %v804
        %v1960 = vunpack.c.l.b16 %v805
        %v1961 = vunpack.c.h.b16 %v805
        %v1962 = vunpack.c.l.b16 %v806
        %v1963 = vunpack.c.h.b16 %v806
        %v1964 = vunpack.c.l.b16 %v807
        %v1965 = vunpack.c.h.b16 %v807
        %v1966 = vunpack.c.l.b16 %v808
        %v1967 = vunpack.c.h.b16 %v808
        %v1968 = vunpack.c.l.b16 %v809
        %v1969 = vunpack.c.h.b16 %v809
        %v1970 = vunpack.c.l.b16 %v810
        %v1971 = vunpack.c.h.b16 %v810
        %v1972 = vunpack.c.l.b16 %v811
        %v1973 = vunpack.c.h.b16 %v811
        %v1974 = vunpack.c.l.b16 %v812
        %v1975 = vunpack.c.h.b16 %v812
        %v1976 = vunpack.c.l.b16 %v813
        %v1977 = vunpack.c.h.b16 %v813
        %v1978 = vunpack.c.l.b16 %v814
        %v1979 = vunpack.c.h.b16 %v814
        %v1980 = vunpack.c.l.b16 %v815
        %v1981 = vunpack.c.h.b16 %v815
        %v1982 = vunpack.c.l.b16 %v816
        %v1983 = vunpack.c.h.b16 %v816
        %v1984 = vunpack.c.l.b16 %v817
        %v1985 = vunpack.c.h.b16 %v817
        %v1986 = vunpack.c.l.b16 %v818
        %v1987 = vunpack.c.h.b16 %v818
        %v1988 = vunpack.c.l.b16 %v819
        %v1989 = vunpack.c.h.b16 %v819
        %v1990 = vunpack.c.l.b16 %v820
        %v1991 = vunpack.c.h.b16 %v820
        %v1992 = vunpack.c.l.b16 %v821
        %v1993 = vunpack.c.h.b16 %v821
        %v1994 = vunpack.c.l.b16 %v822
        %v1995 = vunpack.c.h.b16 %v822
        %v1996 = vunpack.c.l.b16 %v823
        %v1997 = vunpack.c.h.b16 %v823
        %v1998 = vunpack.c.l.b16 %v824
        %v1999 = vunpack.c.h.b16 %v824
        %v2000 = vunpack.c.l.b16 %v825
        %v2001 = vunpack.c.h.b16 %v825
        %v2002 = vunpack.c.l.b16 %v826
        %v2003 = vunpack.c.h.b16 %v826
        %v2004 = vunpack.c.l.b16 %v827
        %v2005 = vunpack.c.h.b16 %v827
        %v2006 = vunpack.c.l.b16 %v828
        %v2007 = vunpack.c.h.b16 %v828
        %v2008 = vunpack.c.l.b16 %v829
        %v2009 = vunpack.c.h.b16 %v829
        %v2010 = vunpack.c.l.b16 %v830
        %v2011 = vunpack.c.h.b16 %v830
        %v2012 = vunpack.c.l.b16 %v831
        %v2013 = vunpack.c.h.b16 %v831
        %v2014 = vunpack.c.l.b16 %v832
        %v2015 = vunpack.c.h.b16 %v832
        %v2016 = vunpack.c.l.b16 %v833
        %v2017 = vunpack.c.h.b16 %v833
        %v2018 = vunpack.c.l.b16 %v834
        %v2019 = vunpack.c.h.b16 %v834
        %v2020 = vunpack.c.l.b16 %v835
        %v2021 = vunpack.c.h.b16 %v835
        %v2022 = vunpack.c.l.b16 %v836
        %v2023 = vunpack.c.h.b16 %v836
        %v2024 = vunpack.c.l.b16 %v837
        %v2025 = vunpack.c.h.b16 %v837
        %v2026 = vunpack.c.l.b16 %v838
        %v2027 = vunpack.c.h.b16 %v838
        %v2028 = vunpack.c.l.b16 %v839
        %v2029 = vunpack.c.h.b16 %v839
        %v2030 = vunpack.c.l.b16 %v840
        %v2031 = vunpack.c.h.b16 %v840
        %v2032 = vunpack.c.l.b16 %v841
        %v2033 = vunpack.c.h.b16 %v841
        %v2034 = vunpack.c.l.b16 %v842
        %v2035 = vunpack.c.h.b16 %v842
        %v2036 = vunpack.c.l.b16 %v843
        %v2037 = vunpack.c.h.b16 %v843
        %v2038 = vunpack.c.l.b16 %v844
        %v2039 = vunpack.c.h.b16 %v844
        %v2040 = vunpack.c.l.b16 %v845
        %v2041 = vunpack.c.h.b16 %v845
        %v2042 = vunpack.c.l.b16 %v846
        %v2043 = vunpack.c.h.b16 %v846
        %v2044 = vunpack.c.l.b16 %v847
        %v2045 = vunpack.c.h.b16 %v847
        %v2046 = vunpack.c.l.b16 %v848
        %v2047 = vunpack.c.h.b16 %v848
        %v2048 = vunpack.c.l.b16 %v849
        %v2049 = vunpack.c.h.b16 %v849
        %v2050 = vunpack.c.l.b16 %v850
        %v2051 = vunpack.c.h.b16 %v850
        %v2052 = vunpack.c.l.b16 %v851
        %v2053 = vunpack.c.h.b16 %v851
        %v2054 = vunpack.c.l.b16 %v852
        %v2055 = vunpack.c.h.b16 %v852
        %v2056 = vunpack.c.l.b16 %v853
        %v2057 = vunpack.c.h.b16 %v853
        %v2058 = vunpack.c.l.b16 %v854
        %v2059 = vunpack.c.h.b16 %v854
        %v2060 = vunpack.c.l.b16 %v855
        %v2061 = vunpack.c.h.b16 %v855
        %v2062 = vunpack.c.l.b16 %v856
        %v2063 = vunpack.c.h.b16 %v856
        %v2064 = vunpack.c.l.b16 %v857
        %v2065 = vunpack.c.h.b16 %v857
        %v2066 = vunpack.c.l.b16 %v858
        %v2067 = vunpack.c.h.b16 %v858
        %v2068 = vunpack.c.l.b16 %v859
        %v2069 = vunpack.c.h.b16 %v859
        %v2070 = vunpack.c.l.b16 %v860
        %v2071 = vunpack.c.h.b16 %v860
        %v2072 = vunpack.c.l.b16 %v861
        %v2073 = vunpack.c.h.b16 %v861
        %v2074 = vunpack.c.l.b16 %v862
        %v2075 = vunpack.c.h.b16 %v862
        %v2076 = vunpack.c.l.b16 %v863
        %v2077 = vunpack.c.h.b16 %v863
        %v2078 = vunpack.c.l.b16 %v864
        %v2079 = vunpack.c.h.b16 %v864
        %v2080 = vunpack.c.l.b16 %v865
        %v2081 = vunpack.c.h.b16 %v865
        %v2082 = vunpack.c.l.b16 %v866
        %v2083 = vunpack.c.h.b16 %v866
        %v2084 = vunpack.c.l.b16 %v867
        %v2085 = vunpack.c.h.b16 %v867
        %v2086 = vunpack.c.l.b16 %v868
        %v2087 = vunpack.c.h.b16 %v868
        %v2088 = vunpack.c.l.b16 %v869
        %v2089 = vunpack.c.h.b16 %v869
        %v2090 = vunpack.c.l.b16 %v870
        %v2091 = vunpack.c.h.b16 %v870
        %v2092 = vunpack.c.l.b16 %v871
        %v2093 = vunpack.c.h.b16 %v871
        %v2094 = vunpack.c.l.b16 %v872
        %v2095 = vunpack.c.h.b16 %v872
        %v2096 = vunpack.c.l.b16 %v873
        %v2097 = vunpack.c.h.b16 %v873
        %v2098 = vunpack.c.l.b16 %v874
        %v2099 = vunpack.c.h.b16 %v874
        %v2100 = vunpack.c.l.b16 %v875
        %v2101 = vunpack.c.h.b16 %v875
        %v2102 = vunpack.c.l.b16 %v876
        %v2103 = vunpack.c.h.b16 %v876
        %v2104 = vunpack.c.l.b16 %v877
        %v2105 = vunpack.c.h.b16 %v877
        %v2106 = vunpack.c.l.b16 %v878
        %v2107 = vunpack.c.h.b16 %v878
        %v2108 = vunpack.c.l.b16 %v879
        %v2109 = vunpack.c.h.b16 %v879
        %v2110 = vunpack.c.l.b16 %v880
        %v2111 = vunpack.c.h.b16 %v880
        %v2112 = vunpack.c.l.b16 %v881
        %v2113 = vunpack.c.h.b16 %v881
        %v2114 = vunpack.c.l.b16 %v882
        %v2115 = vunpack.c.h.b16 %v882
        %v2116 = vunpack.c.l.b16 %v883
        %v2117 = vunpack.c.h.b16 %v883
        %v2118 = vunpack.c.l.b16 %v884
        %v2119 = vunpack.c.h.b16 %v884
        %v2120 = vunpack.c.l.b16 %v885
        %v2121 = vunpack.c.h.b16 %v885
        %v2122 = vunpack.c.l.b16 %v886
        %v2123 = vunpack.c.h.b16 %v886
        %v2124 = vunpack.c.l.b16 %v887
        %v2125 = vunpack.c.h.b16 %v887
        %v2126 = vunpack.c.l.b16 %v888
        %v2127 = vunpack.c.h.b16 %v888
        %v2128 = vunpack.c.l.b16 %v889
        %v2129 = vunpack.c.h.b16 %v889
        %v2130 = vunpack.c.l.b16 %v890
        %v2131 = vunpack.c.h.b16 %v890
        %v2132 = vunpack.c.l.b16 %v891
        %v2133 = vunpack.c.h.b16 %v891
        %v2134 = vunpack.c.l.b16 %v892
        %v2135 = vunpack.c.h.b16 %v892
        %v2136 = vunpack.c.l.b16 %v893
        %v2137 = vunpack.c.h.b16 %v893
        %v2138 = vunpack.c.l.b16 %v894
        %v2139 = vunpack.c.h.b16 %v894
        %v2140 = vunpack.c.l.b16 %v895
        %v2141 = vunpack.c.h.b16 %v895
        %v2142 = vunpack.c.l.b16 %v896
        %v2143 = vunpack.c.h.b16 %v896
        %v2144 = vunpack.c.l.b16 %v897
        %v2145 = vunpack.c.h.b16 %v897
        %v2146 = vunpack.c.l.b16 %v898
        %v2147 = vunpack.c.h.b16 %v898
        %v2148 = vunpack.c.l.b16 %v899
        %v2149 = vunpack.c.h.b16 %v899
        %v2150 = vunpack.c.l.b16 %v900
        %v2151 = vunpack.c.h.b16 %v900
        %v2152 = vunpack.c.l.b16 %v901
        %v2153 = vunpack.c.h.b16 %v901
        %v2154 = vunpack.c.l.b16 %v902
        %v2155 = vunpack.c.h.b16 %v902
        %v2156 = vunpack.c.l.b16 %v903
        %v2157 = vunpack.c.h.b16 %v903
        %v2158 = vunpack.c.l.b16 %v904
        %v2159 = vunpack.c.h.b16 %v904
        %v2160 = vunpack.c.l.b16 %v905
        %v2161 = vunpack.c.h.b16 %v905
        %v2162 = vunpack.c.l.b16 %v906
        %v2163 = vunpack.c.h.b16 %v906
        %v2164 = vunpack.c.l.b16 %v907
        %v2165 = vunpack.c.h.b16 %v907
        %v2166 = vunpack.c.l.b16 %v908
        %v2167 = vunpack.c.h.b16 %v908
        %v2168 = vunpack.c.l.b16 %v909
        %v2169 = vunpack.c.h.b16 %v909
        %v2170 = vunpack.c.l.b16 %v910
        %v2171 = vunpack.c.h.b16 %v910
        %v2172 = vunpack.c.l.b16 %v911
        %v2173 = vunpack.c.h.b16 %v911
        %v2174 = vunpack.c.l.b16 %v912
        %v2175 = vunpack.c.h.b16 %v912
        %v2176 = vunpack.c.l.b16 %v913
        %v2177 = vunpack.c.h.b16 %v913
        %v2178 = vunpack.c.l.b16 %v914
        %v2179 = vunpack.c.h.b16 %v914
        %v2180 = vunpack.c.l.b16 %v915
        %v2181 = vunpack.c.h.b16 %v915
        %v2182 = vunpack.c.l.b16 %v916
        %v2183 = vunpack.c.h.b16 %v916
        %v2184 = vunpack.c.l.b16 %v917
        %v2185 = vunpack.c.h.b16 %v917
        %v2186 = vunpack.c.l.b16 %v918
        %v2187 = vunpack.c.h.b16 %v918
        %v2188 = vunpack.c.l.b16 %v919
        %v2189 = vunpack.c.h.b16 %v919
        %v2190 = vunpack.c.l.b16 %v920
        %v2191 = vunpack.c.h.b16 %v920
        %v2192 = vunpack.c.l.b16 %v921
        %v2193 = vunpack.c.h.b16 %v921
        %v2194 = vunpack.c.l.b16 %v922
        %v2195 = vunpack.c.h.b16 %v922
        %v2196 = vunpack.c.l.b16 %v923
        %v2197 = vunpack.c.h.b16 %v923
        %v2198 = vunpack.c.l.b16 %v924
        %v2199 = vunpack.c.h.b16 %v924
        %v2200 = vunpack.c.l.b16 %v925
        %v2201 = vunpack.c.h.b16 %v925
        %v2202 = vunpack.c.l.b16 %v926
        %v2203 = vunpack.c.h.b16 %v926
        %v2204 = vunpack.c.l.b16 %v927
        %v2205 = vunpack.c.h.b16 %v927
        %v2206 = vunpack.c.l.b16 %v928
        %v2207 = vunpack.c.h.b16 %v928
        %v2208 = vunpack.c.l.b16 %v929
        %v2209 = vunpack.c.h.b16 %v929
        %v2210 = vunpack.c.l.b16 %v930
        %v2211 = vunpack.c.h.b16 %v930
        %v2212 = vunpack.c.l.b16 %v931
        %v2213 = vunpack.c.h.b16 %v931
        %v2214 = vunpack.c.l.b16 %v932
        %v2215 = vunpack.c.h.b16 %v932
        %v2216 = vunpack.c.l.b16 %v933
        %v2217 = vunpack.c.h.b16 %v933
        %v2218 = vunpack.c.l.b16 %v934
        %v2219 = vunpack.c.h.b16 %v934
        %v2220 = vunpack.c.l.b16 %v935
        %v2221 = vunpack.c.h.b16 %v935
        %v2222 = vunpack.c.l.b16 %v936
        %v2223 = vunpack.c.h.b16 %v936
        %v2224 = vunpack.c.l.b16 %v937
        %v2225 = vunpack.c.h.b16 %v937
        %v2226 = vunpack.c.l.b16 %v938
        %v2227 = vunpack.c.h.b16 %v938
        %v2228 = vunpack.c.l.b16 %v939
        %v2229 = vunpack.c.h.b16 %v939
        %v2230 = vunpack.c.l.b16 %v940
        %v2231 = vunpack.c.h.b16 %v940
        %v2232 = vunpack.c.l.b16 %v941
        %v2233 = vunpack.c.h.b16 %v941
        %v2234 = vunpack.c.l.b16 %v942
        %v2235 = vunpack.c.h.b16 %v942
        %v2236 = vunpack.c.l.b16 %v943
        %v2237 = vunpack.c.h.b16 %v943
        %v2238 = vunpack.c.l.b16 %v944
        %v2239 = vunpack.c.h.b16 %v944
        %v2240 = vunpack.c.l.b16 %v945
        %v2241 = vunpack.c.h.b16 %v945
        %v2242 = vunpack.c.l.b16 %v946
        %v2243 = vunpack.c.h.b16 %v946
        %v2244 = vunpack.c.l.b16 %v947
        %v2245 = vunpack.c.h.b16 %v947
        %v2246 = vunpack.c.l.b16 %v948
        %v2247 = vunpack.c.h.b16 %v948
        %v2248 = vunpack.c.l.b16 %v949
        %v2249 = vunpack.c.h.b16 %v949
        %v2250 = vunpack.c.l.b16 %v950
        %v2251 = vunpack.c.h.b16 %v950
        %v2252 = vunpack.c.l.b16 %v951
        %v2253 = vunpack.c.h.b16 %v951
        %v2254 = vunpack.c.l.b16 %v952
        %v2255 = vunpack.c.h.b16 %v952
        %v2256 = vunpack.c.l.b16 %v953
        %v2257 = vunpack.c.h.b16 %v953
        %v2258 = vunpack.c.l.b16 %v954
        %v2259 = vunpack.c.h.b16 %v954
        %v2260 = vunpack.c.l.b16 %v955
        %v2261 = vunpack.c.h.b16 %v955
        %v2262 = vunpack.c.l.b16 %v956
        %v2263 = vunpack.c.h.b16 %v956
        %v2264 = vunpack.c.l.b16 %v957
        %v2265 = vunpack.c.h.b16 %v957
        %v2266 = vunpack.c.l.b16 %v958
        %v2267 = vunpack.c.h.b16 %v958
        %v2268 = vunpack.c.l.b16 %v959
        %v2269 = vunpack.c.h.b16 %v959
        %v2270 = vunpack.c.l.b16 %v960
        %v2271 = vunpack.c.h.b16 %v960
        %v2272 = vunpack.c.l.b16 %v961
        %v2273 = vunpack.c.h.b16 %v961
        %v2274 = vunpack.c.l.b16 %v962
        %v2275 = vunpack.c.h.b16 %v962
        %v2276 = vunpack.c.l.b16 %v963
        %v2277 = vunpack.c.h.b16 %v963
        %v2278 = vunpack.c.l.b16 %v964
        %v2279 = vunpack.c.h.b16 %v964
        %v2280 = vunpack.c.l.b16 %v965
        %v2281 = vunpack.c.h.b16 %v965
        %v2282 = vunpack.c.l.b16 %v966
        %v2283 = vunpack.c.h.b16 %v966
        %v2284 = vunpack.c.l.b16 %v967
        %v2285 = vunpack.c.h.b16 %v967
        %v2286 = vunpack.c.l.b16 %v968
        %v2287 = vunpack.c.h.b16 %v968
        %v2288 = vunpack.c.l.b16 %v969
        %v2289 = vunpack.c.h.b16 %v969
        %v2290 = vunpack.c.l.b16 %v970
        %v2291 = vunpack.c.h.b16 %v970
        %v2292 = vunpack.c.l.b16 %v971
        %v2293 = vunpack.c.h.b16 %v971
        %v2294 = vunpack.c.l.b16 %v972
        %v2295 = vunpack.c.h.b16 %v972
        %v2296 = vunpack.c.l.b16 %v973
        %v2297 = vunpack.c.h.b16 %v973
        %v2298 = vunpack.c.l.b16 %v974
        %v2299 = vunpack.c.h.b16 %v974
        %v2300 = vunpack.c.l.b16 %v975
        %v2301 = vunpack.c.h.b16 %v975
        %v2302 = vunpack.c.l.b16 %v976
        %v2303 = vunpack.c.h.b16 %v976
        %v2304 = vunpack.c.l.b16 %v977
        %v2305 = vunpack.c.h.b16 %v977
        %v2306 = vunpack.c.l.b16 %v978
        %v2307 = vunpack.c.h.b16 %v978
        %v2308 = vunpack.c.l.b16 %v979
        %v2309 = vunpack.c.h.b16 %v979
        %v2310 = vunpack.c.l.b16 %v980
        %v2311 = vunpack.c.h.b16 %v980
        %v2312 = vunpack.c.l.b16 %v981
        %v2313 = vunpack.c.h.b16 %v981
        %v2314 = vunpack.c.l.b16 %v982
        %v2315 = vunpack.c.h.b16 %v982
        %v2316 = vunpack.c.l.b16 %v983
        %v2317 = vunpack.c.h.b16 %v983
        %v2318 = vunpack.c.l.b16 %v984
        %v2319 = vunpack.c.h.b16 %v984
        %v2320 = vunpack.c.l.b16 %v985
        %v2321 = vunpack.c.h.b16 %v985
        %v2322 = vunpack.c.l.b16 %v986
        %v2323 = vunpack.c.h.b16 %v986
        %v2324 = vunpack.c.l.b16 %v987
        %v2325 = vunpack.c.h.b16 %v987
        %v2326 = vunpack.c.l.b16 %v988
        %v2327 = vunpack.c.h.b16 %v988
        %v2328 = vunpack.c.l.b16 %v989
        %v2329 = vunpack.c.h.b16 %v989
        %v2330 = vunpack.c.l.b16 %v990
        %v2331 = vunpack.c.h.b16 %v990
        %v2332 = vunpack.c.l.b16 %v991
        %v2333 = vunpack.c.h.b16 %v991
        %v2334 = vunpack.c.l.b16 %v992
        %v2335 = vunpack.c.h.b16 %v992
        %v2336 = vunpack.c.l.b16 %v993
        %v2337 = vunpack.c.h.b16 %v993
        %v2338 = vunpack.c.l.b16 %v994
        %v2339 = vunpack.c.h.b16 %v994
        %v2340 = vunpack.c.l.b16 %v995
        %v2341 = vunpack.c.h.b16 %v995
        %v2342 = vunpack.c.l.b16 %v996
        %v2343 = vunpack.c.h.b16 %v996
        %v2344 = vunpack.c.l.b16 %v997
        %v2345 = vunpack.c.h.b16 %v997
        %v2346 = vunpack.c.l.b16 %v998
        %v2347 = vunpack.c.h.b16 %v998
        %v2348 = vunpack.c.l.b16 %v999
        %v2349 = vunpack.c.h.b16 %v999
        %v2350 = vunpack.c.l.b16 %v1000
        %v2351 = vunpack.c.h.b16 %v1000
        %v2352 = vunpack.c.l.b16 %v1001
        %v2353 = vunpack.c.h.b16 %v1001
        %v2354 = vunpack.c.l.b16 %v1002
        %v2355 = vunpack.c.h.b16 %v1002
        %v2356 = vunpack.c.l.b16 %v1003
        %v2357 = vunpack.c.h.b16 %v1003
        %v2358 = vunpack.c.l.b16 %v1004
        %v2359 = vunpack.c.h.b16 %v1004
        %v2360 = vunpack.c.l.b16 %v1005
        %v2361 = vunpack.c.h.b16 %v1005
        %v2362 = vunpack.c.l.b16 %v1006
        %v2363 = vunpack.c.h.b16 %v1006
        %v2364 = vunpack.c.l.b16 %v1007
        %v2365 = vunpack.c.h.b16 %v1007
        %v2366 = vunpack.c.l.b16 %v1008
        %v2367 = vunpack.c.h.b16 %v1008
        %v2368 = vunpack.c.l.b16 %v1009
        %v2369 = vunpack.c.h.b16 %v1009
        %v2370 = vunpack.c.l.b16 %v1010
        %v2371 = vunpack.c.h.b16 %v1010
        %v2372 = vunpack.c.l.b16 %v1011
        %v2373 = vunpack.c.h.b16 %v1011
        %v2374 = vunpack.c.l.b16 %v1012
        %v2375 = vunpack.c.h.b16 %v1012
        %v2376 = vunpack.c.l.b16 %v1013
        %v2377 = vunpack.c.h.b16 %v1013
        %v2378 = vunpack.c.l.b16 %v1014
        %v2379 = vunpack.c.h.b16 %v1014
        %v2380 = vunpack.c.l.b16 %v1015
        %v2381 = vunpack.c.h.b16 %v1015
        %v2382 = vunpack.c.l.b16 %v1016
        %v2383 = vunpack.c.h.b16 %v1016
        %v2384 = vunpack.c.l.b16 %v1017
        %v2385 = vunpack.c.h.b16 %v1017
        %v2386 = vunpack.c.l.b16 %v1018
        %v2387 = vunpack.c.h.b16 %v1018
        %v2388 = vunpack.c.l.b16 %v1019
        %v2389 = vunpack.c.h.b16 %v1019
        %v2390 = vunpack.c.l.b16 %v1020
        %v2391 = vunpack.c.h.b16 %v1020
        %v2392 = vunpack.c.l.b16 %v1021
        %v2393 = vunpack.c.h.b16 %v1021
        %v2394 = vunpack.c.l.b16 %v1022
        %v2395 = vunpack.c.h.b16 %v1022
        %v2396 = vunpack.c.l.b16 %v1023
        %v2397 = vunpack.c.h.b16 %v1023
        %v2398 = vunpack.c.l.b16 %v1024
        %v2399 = vunpack.c.h.b16 %v1024
        %v2400 = vunpack.c.l.b16 %v1025
        %v2401 = vunpack.c.h.b16 %v1025
        %v2402 = vunpack.c.l.b16 %v1026
        %v2403 = vunpack.c.h.b16 %v1026
        %v2404 = vunpack.c.l.b16 %v1027
        %v2405 = vunpack.c.h.b16 %v1027
        %v2406 = vunpack.c.l.b16 %v1028
        %v2407 = vunpack.c.h.b16 %v1028
        %v2408 = vunpack.c.l.b16 %v1029
        %v2409 = vunpack.c.h.b16 %v1029
        %v2410 = vunpack.c.l.b16 %v1030
        %v2411 = vunpack.c.h.b16 %v1030
        %v2412 = vunpack.c.l.b16 %v1031
        %v2413 = vunpack.c.h.b16 %v1031
        %v2414 = vunpack.c.l.b16 %v1032
        %v2415 = vunpack.c.h.b16 %v1032
        %v2416 = vunpack.c.l.b16 %v1033
        %v2417 = vunpack.c.h.b16 %v1033
        %v2418 = vunpack.c.l.b16 %v1034
        %v2419 = vunpack.c.h.b16 %v1034
        %v2420 = vunpack.c.l.b16 %v1035
        %v2421 = vunpack.c.h.b16 %v1035
        %v2422 = vunpack.c.l.b16 %v1036
        %v2423 = vunpack.c.h.b16 %v1036
        %v2424 = vunpack.c.l.b16 %v1037
        %v2425 = vunpack.c.h.b16 %v1037
        %v2426 = vunpack.c.l.b16 %v1038
        %v2427 = vunpack.c.h.b16 %v1038
        %v2428 = vunpack.c.l.b16 %v1039
        %v2429 = vunpack.c.h.b16 %v1039
        %v2430 = vunpack.c.l.b16 %v1040
        %v2431 = vunpack.c.h.b16 %v1040
        %v2432 = vunpack.c.l.b16 %v1041
        %v2433 = vunpack.c.h.b16 %v1041
        %v2434 = vunpack.c.l.b16 %v1042
        %v2435 = vunpack.c.h.b16 %v1042
        %v2436 = vunpack.c.l.b16 %v1043
        %v2437 = vunpack.c.h.b16 %v1043
        %v2438 = vunpack.c.l.b16 %v1044
        %v2439 = vunpack.c.h.b16 %v1044
        %v2440 = vunpack.c.l.b16 %v1045
        %v2441 = vunpack.c.h.b16 %v1045
        %v2442 = vunpack.c.l.b16 %v1046
        %v2443 = vunpack.c.h.b16 %v1046
        %v2444 = vunpack.c.l.b16 %v1047
        %v2445 = vunpack.c.h.b16 %v1047
        %v2446 = vunpack.c.l.b16 %v1048
        %v2447 = vunpack.c.h.b16 %v1048
        %v2448 = vunpack.c.l.b16 %v1049
        %v2449 = vunpack.c.h.b16 %v1049
        %v2450 = vunpack.c.l.b16 %v1050
        %v2451 = vunpack.c.h.b16 %v1050
        %v2452 = vunpack.c.l.b16 %v1051
        %v2453 = vunpack.c.h.b16 %v1051
        %v2454 = vunpack.c.l.b16 %v1052
        %v2455 = vunpack.c.h.b16 %v1052
        %v2456 = vunpack.c.l.b16 %v1053
        %v2457 = vunpack.c.h.b16 %v1053
        %v2458 = vunpack.c.l.b16 %v1054
        %v2459 = vunpack.c.h.b16 %v1054
        %v2460 = vunpack.c.l.b16 %v1055
        %v2461 = vunpack.c.h.b16 %v1055
        %v2462 = vunpack.c.l.b16 %v1056
        %v2463 = vunpack.c.h.b16 %v1056
        %v2464 = vunpack.c.l.b16 %v1057
        %v2465 = vunpack.c.h.b16 %v1057
        %v2466 = vunpack.c.l.b16 %v1058
        %v2467 = vunpack.c.h.b16 %v1058
        %v2468 = vunpack.c.l.b16 %v1059
        %v2469 = vunpack.c.h.b16 %v1059
        %v2470 = vunpack.c.l.b16 %v1060
        %v2471 = vunpack.c.h.b16 %v1060
        %v2472 = vunpack.c.l.b16 %v1061
        %v2473 = vunpack.c.h.b16 %v1061
        %v2474 = vunpack.c.l.b16 %v1062
        %v2475 = vunpack.c.h.b16 %v1062
        %v2476 = vunpack.c.l.b16 %v1063
        %v2477 = vunpack.c.h.b16 %v1063
        %v2478 = vunpack.c.l.b16 %v1064
        %v2479 = vunpack.c.h.b16 %v1064
        %v2480 = vunpack.c.l.b16 %v1065
        %v2481 = vunpack.c.h.b16 %v1065
        %v2482 = vunpack.c.l.b16 %v1066
        %v2483 = vunpack.c.h.b16 %v1066
        %v2484 = vunpack.c.l.b16 %v1067
        %v2485 = vunpack.c.h.b16 %v1067
        %v2486 = vunpack.c.l.b16 %v1068
        %v2487 = vunpack.c.h.b16 %v1068
        %v2488 = vunpack.c.l.b16 %v1069
        %v2489 = vunpack.c.h.b16 %v1069
        %v2490 = vunpack.c.l.b16 %v1070
        %v2491 = vunpack.c.h.b16 %v1070
        %v2492 = vunpack.c.l.b16 %v1071
        %v2493 = vunpack.c.h.b16 %v1071
        %v2494 = vunpack.c.l.b16 %v1072
        %v2495 = vunpack.c.h.b16 %v1072
        %v2496 = vunpack.c.l.b16 %v1073
        %v2497 = vunpack.c.h.b16 %v1073
        %v2498 = vunpack.c.l.b16 %v1074
        %v2499 = vunpack.c.h.b16 %v1074
        %v2500 = vunpack.c.l.b16 %v1075
        %v2501 = vunpack.c.h.b16 %v1075
        %v2502 = vunpack.c.l.b16 %v1076
        %v2503 = vunpack.c.h.b16 %v1076
        %v2504 = vunpack.c.l.b16 %v1077
        %v2505 = vunpack.c.h.b16 %v1077
        %v2506 = vunpack.c.l.b16 %v1078
        %v2507 = vunpack.c.h.b16 %v1078
        %v2508 = vunpack.c.l.b16 %v1079
        %v2509 = vunpack.c.h.b16 %v1079
        %v2510 = vunpack.c.l.b16 %v1080
        %v2511 = vunpack.c.h.b16 %v1080
        %v2512 = vunpack.c.l.b16 %v1081
        %v2513 = vunpack.c.h.b16 %v1081
        %v2514 = vunpack.c.l.b16 %v1082
        %v2515 = vunpack.c.h.b16 %v1082
        %v2516 = vunpack.c.l.b16 %v1083
        %v2517 = vunpack.c.h.b16 %v1083
        %v2518 = vunpack.c.l.b16 %v1084
        %v2519 = vunpack.c.h.b16 %v1084
        %v2520 = vunpack.c.l.b16 %v1085
        %v2521 = vunpack.c.h.b16 %v1085
        %v2522 = vunpack.c.l.b16 %v1086
        %v2523 = vunpack.c.h.b16 %v1086
        %v2524 = vunpack.c.l.b16 %v1087
        %v2525 = vunpack.c.h.b16 %v1087
        %v2526 = vunpack.c.l.b16 %v1088
        %v2527 = vunpack.c.h.b16 %v1088
        %v2528 = vunpack.c.l.b16 %v1089
        %v2529 = vunpack.c.h.b16 %v1089
        %v2530 = vunpack.c.l.b16 %v1090
        %v2531 = vunpack.c.h.b16 %v1090
        %v2532 = vunpack.c.l.b16 %v1091
        %v2533 = vunpack.c.h.b16 %v1091
        %v2534 = vunpack.c.l.b16 %v1092
        %v2535 = vunpack.c.h.b16 %v1092
        %v2536 = vunpack.c.l.b16 %v1093
        %v2537 = vunpack.c.h.b16 %v1093
        %v2538 = vunpack.c.l.b16 %v1094
        %v2539 = vunpack.c.h.b16 %v1094
        %v2540 = vunpack.c.l.b16 %v1095
        %v2541 = vunpack.c.h.b16 %v1095
        %v2542 = vunpack.c.l.b16 %v1096
        %v2543 = vunpack.c.h.b16 %v1096
        %v2544 = vunpack.c.l.b16 %v1097
        %v2545 = vunpack.c.h.b16 %v1097
        %v2546 = vunpack.c.l.b16 %v1098
        %v2547 = vunpack.c.h.b16 %v1098
        %v2548 = vunpack.c.l.b16 %v1099
        %v2549 = vunpack.c.h.b16 %v1099
        %v2550 = vunpack.c.l.b16 %v1100
        %v2551 = vunpack.c.h.b16 %v1100
        %v2552 = vunpack.c.l.b16 %v1101
        %v2553 = vunpack.c.h.b16 %v1101
        %v2554 = vunpack.c.l.b16 %v1102
        %v2555 = vunpack.c.h.b16 %v1102
        %v2556 = vunpack.c.l.b16 %v1103
        %v2557 = vunpack.c.h.b16 %v1103
        %v2558 = vunpack.c.l.b16 %v1104
        %v2559 = vunpack.c.h.b16 %v1104
        %v2560 = vunpack.c.l.b16 %v1105
        %v2561 = vunpack.c.h.b16 %v1105
        %v2562 = vunpack.c.l.b16 %v1106
        %v2563 = vunpack.c.h.b16 %v1106
        %v2564 = vunpack.c.l.b16 %v1107
        %v2565 = vunpack.c.h.b16 %v1107
        %v2566 = vunpack.c.l.b16 %v1108
        %v2567 = vunpack.c.h.b16 %v1108
        %v2568 = vunpack.c.l.b16 %v1109
        %v2569 = vunpack.c.h.b16 %v1109
        %v2570 = vunpack.c.l.b16 %v1110
        %v2571 = vunpack.c.h.b16 %v1110
        %v2572 = vunpack.c.l.b16 %v1111
        %v2573 = vunpack.c.h.b16 %v1111
        %v2574 = vunpack.c.l.b16 %v1112
        %v2575 = vunpack.c.h.b16 %v1112
        %v2576 = vunpack.c.l.b16 %v1113
        %v2577 = vunpack.c.h.b16 %v1113
        %v2578 = vunpack.c.l.b16 %v1114
        %v2579 = vunpack.c.h.b16 %v1114
        %v2580 = vunpack.c.l.b16 %v1115
        %v2581 = vunpack.c.h.b16 %v1115
        %v2582 = vunpack.c.l.b16 %v1116
        %v2583 = vunpack.c.h.b16 %v1116
        %v2584 = vunpack.c.l.b16 %v1117
        %v2585 = vunpack.c.h.b16 %v1117
        %v2586 = vunpack.c.l.b16 %v1118
        %v2587 = vunpack.c.h.b16 %v1118
        %v2588 = vunpack.c.l.b16 %v1119
        %v2589 = vunpack.c.h.b16 %v1119
        %v2590 = vunpack.c.l.b16 %v1120
        %v2591 = vunpack.c.h.b16 %v1120
        %v2592 = vunpack.c.l.b16 %v1121
        %v2593 = vunpack.c.h.b16 %v1121
        %v2594 = vunpack.c.l.b16 %v1122
        %v2595 = vunpack.c.h.b16 %v1122
        %v2596 = vunpack.c.l.b16 %v1123
        %v2597 = vunpack.c.h.b16 %v1123
        %v2598 = vunpack.c.l.b16 %v1124
        %v2599 = vunpack.c.h.b16 %v1124
        %v2600 = vunpack.c.l.b16 %v1125
        %v2601 = vunpack.c.h.b16 %v1125
        %v2602 = vunpack.c.l.b16 %v1126
        %v2603 = vunpack.c.h.b16 %v1126
        %v2604 = vunpack.c.l.b16 %v1127
        %v2605 = vunpack.c.h.b16 %v1127
        %v2606 = vunpack.c.l.b16 %v1128
        %v2607 = vunpack.c.h.b16 %v1128
        %v2608 = vunpack.c.l.b16 %v1129
        %v2609 = vunpack.c.h.b16 %v1129
        %v2610 = vunpack.c.l.b16 %v1130
        %v2611 = vunpack.c.h.b16 %v1130
        %v2612 = vunpack.c.l.b16 %v1131
        %v2613 = vunpack.c.h.b16 %v1131
        %v2614 = vunpack.c.l.b16 %v1132
        %v2615 = vunpack.c.h.b16 %v1132
        %v2616 = vunpack.c.l.b16 %v1133
        %v2617 = vunpack.c.h.b16 %v1133
        %v2618 = vunpack.c.l.b16 %v1134
        %v2619 = vunpack.c.h.b16 %v1134
        %v2620 = vunpack.c.l.b16 %v1135
        %v2621 = vunpack.c.h.b16 %v1135
        %v2622 = vunpack.c.l.b16 %v1136
        %v2623 = vunpack.c.h.b16 %v1136
        %v2624 = vunpack.c.l.b16 %v1137
        %v2625 = vunpack.c.h.b16 %v1137
        %v2626 = vunpack.c.l.b16 %v1138
        %v2627 = vunpack.c.h.b16 %v1138
        %v2628 = vunpack.c.l.b16 %v1139
        %v2629 = vunpack.c.h.b16 %v1139
        %v2630 = vunpack.c.l.b16 %v1140
        %v2631 = vunpack.c.h.b16 %v1140
        %v2632 = vunpack.c.l.b16 %v1141
        %v2633 = vunpack.c.h.b16 %v1141
        %v2634 = vunpack.c.l.b16 %v1142
        %v2635 = vunpack.c.h.b16 %v1142
        %v2636 = vunpack.c.l.b16 %v1143
        %v2637 = vunpack.c.h.b16 %v1143
        %v2638 = vunpack.c.l.b16 %v1144
        %v2639 = vunpack.c.h.b16 %v1144
        %v2640 = vunpack.c.l.b16 %v1145
        %v2641 = vunpack.c.h.b16 %v1145
        %v2642 = vunpack.c.l.b16 %v1146
        %v2643 = vunpack.c.h.b16 %v1146
        %v2644 = vunpack.c.l.b16 %v1147
        %v2645 = vunpack.c.h.b16 %v1147
        %v2646 = vunpack.c.l.b16 %v1148
        %v2647 = vunpack.c.h.b16 %v1148
        %v2648 = vunpack.c.l.b16 %v1149
        %v2649 = vunpack.c.h.b16 %v1149
        %v2650 = vunpack.c.l.b16 %v1150
        %v2651 = vunpack.c.h.b16 %v1150
        %v2652 = vunpack.c.l.b16 %v1151
        %v2653 = vunpack.c.h.b16 %v1151
        %v2654 = vunpack.c.l.b16 %v1152
        %v2655 = vunpack.c.h.b16 %v1152
        %v2656 = vunpack.c.l.b16 %v1153
        %v2657 = vunpack.c.h.b16 %v1153
        %v2658 = vunpack.c.l.b16 %v1154
        %v2659 = vunpack.c.h.b16 %v1154
        %v2660 = vunpack.c.l.b16 %v1155
        %v2661 = vunpack.c.h.b16 %v1155
        %v2662 = vunpack.c.l.b16 %v1156
        %v2663 = vunpack.c.h.b16 %v1156
        %v2664 = vunpack.c.l.b16 %v1157
        %v2665 = vunpack.c.h.b16 %v1157
        %v2666 = vunpack.c.l.b16 %v1158
        %v2667 = vunpack.c.h.b16 %v1158
        %v2668 = vunpack.c.l.b16 %v1159
        %v2669 = vunpack.c.h.b16 %v1159
        %v2670 = vunpack.c.l.b16 %v1160
        %v2671 = vunpack.c.h.b16 %v1160
        %v2672 = vunpack.c.l.b16 %v1161
        %v2673 = vunpack.c.h.b16 %v1161
        %v2674 = vunpack.c.l.b16 %v1162
        %v2675 = vunpack.c.h.b16 %v1162
        %v2676 = vunpack.c.l.b16 %v1163
        %v2677 = vunpack.c.h.b16 %v1163
        %v2678 = vunpack.c.l.b16 %v1164
        %v2679 = vunpack.c.h.b16 %v1164
        %v2680 = vunpack.c.l.b16 %v1165
        %v2681 = vunpack.c.h.b16 %v1165
        %v2682 = vunpack.c.l.b16 %v1166
        %v2683 = vunpack.c.h.b16 %v1166
        %v2684 = vunpack.c.l.b16 %v1167
        %v2685 = vunpack.c.h.b16 %v1167
        %v2686 = vunpack.c.l.b16 %v1168
        %v2687 = vunpack.c.h.b16 %v1168
        %v2688 = vunpack.c.l.b16 %v1169
        %v2689 = vunpack.c.h.b16 %v1169
        %v2690 = vunpack.c.l.b16 %v1170
        %v2691 = vunpack.c.h.b16 %v1170
        %v2692 = vunpack.c.l.b16 %v1171
        %v2693 = vunpack.c.h.b16 %v1171
        %v2694 = vunpack.c.l.b16 %v1172
        %v2695 = vunpack.c.h.b16 %v1172
        %v2696 = vunpack.c.l.b16 %v1173
        %v2697 = vunpack.c.h.b16 %v1173
        %v2698 = vunpack.c.l.b16 %v1174
        %v2699 = vunpack.c.h.b16 %v1174
        %v2700 = vunpack.c.l.b16 %v1175
        %v2701 = vunpack.c.h.b16 %v1175
        %v2702 = vunpack.c.l.b16 %v1176
        %v2703 = vunpack.c.h.b16 %v1176
        %v2704 = vunpack.c.l.b16 %v1177
        %v2705 = vunpack.c.h.b16 %v1177
        %v2706 = vunpack.c.l.b16 %v1178
        %v2707 = vunpack.c.h.b16 %v1178
        %v2708 = vunpack.c.l.b16 %v1179
        %v2709 = vunpack.c.h.b16 %v1179
        %v2710 = vunpack.c.l.b16 %v1180
        %v2711 = vunpack.c.h.b16 %v1180
        %v2712 = vunpack.c.l.b16 %v1181
        %v2713 = vunpack.c.h.b16 %v1181
        %v2714 = vunpack.c.l.b16 %v1182
        %v2715 = vunpack.c.h.b16 %v1182
        %v2716 = vunpack.c.l.b16 %v1183
        %v2717 = vunpack.c.h.b16 %v1183
        %v2718 = vunpack.c.l.b16 %v1184
        %v2719 = vunpack.c.h.b16 %v1184
        %v2720 = vunpack.c.l.b16 %v1185
        %v2721 = vunpack.c.h.b16 %v1185
        %v2722 = vunpack.c.l.b16 %v1186
        %v2723 = vunpack.c.h.b16 %v1186
        %v2724 = vunpack.c.l.b16 %v1187
        %v2725 = vunpack.c.h.b16 %v1187
        %v2726 = vunpack.c.l.b16 %v1188
        %v2727 = vunpack.c.h.b16 %v1188
        %v2728 = vunpack.c.l.b16 %v1189
        %v2729 = vunpack.c.h.b16 %v1189
        %v2730 = vunpack.c.l.b16 %v1190
        %v2731 = vunpack.c.h.b16 %v1190
        %v2732 = vunpack.c.l.b16 %v1191
        %v2733 = vunpack.c.h.b16 %v1191
        %v2734 = vunpack.c.l.b16 %v1192
        %v2735 = vunpack.c.h.b16 %v1192
        %v2736 = vunpack.c.l.b16 %v1193
        %v2737 = vunpack.c.h.b16 %v1193
        %v2738 = vunpack.c.l.b16 %v1194
        %v2739 = vunpack.c.h.b16 %v1194
        %v2740 = vunpack.c.l.b16 %v1195
        %v2741 = vunpack.c.h.b16 %v1195
        %v2742 = vunpack.c.l.b16 %v1196
        %v2743 = vunpack.c.h.b16 %v1196
        %v2744 = vunpack.c.l.b16 %v1197
        %v2745 = vunpack.c.h.b16 %v1197
        %v2746 = vunpack.c.l.b16 %v1198
        %v2747 = vunpack.c.h.b16 %v1198
        %v2748 = vunpack.c.l.b16 %v1199
        %v2749 = vunpack.c.h.b16 %v1199
        %v2750 = vunpack.c.l.b16 %v1200
        %v2751 = vunpack.c.h.b16 %v1200
        %v2752 = vunpack.c.l.b16 %v1201
        %v2753 = vunpack.c.h.b16 %v1201
        %v2754 = vunpack.c.l.b16 %v1202
        %v2755 = vunpack.c.h.b16 %v1202
        %v2756 = vunpack.c.l.b16 %v1203
        %v2757 = vunpack.c.h.b16 %v1203
        %v2758 = vunpack.c.l.b16 %v1204
        %v2759 = vunpack.c.h.b16 %v1204
        %v2760 = vunpack.c.l.b16 %v1205
        %v2761 = vunpack.c.h.b16 %v1205
        %v2762 = vunpack.c.l.b16 %v1206
        %v2763 = vunpack.c.h.b16 %v1206
        %v2764 = vunpack.c.l.b16 %v1207
        %v2765 = vunpack.c.h.b16 %v1207
        %v2766 = vunpack.c.l.b16 %v1208
        %v2767 = vunpack.c.h.b16 %v1208
        %v2768 = vunpack.c.l.b16 %v1209
        %v2769 = vunpack.c.h.b16 %v1209
        %v2770 = vunpack.c.l.b16 %v1210
        %v2771 = vunpack.c.h.b16 %v1210
        %v2772 = vunpack.c.l.b16 %v1211
        %v2773 = vunpack.c.h.b16 %v1211
        %v2774 = vunpack.c.l.b16 %v1212
        %v2775 = vunpack.c.h.b16 %v1212
        %v2776 = vunpack.c.l.b16 %v1213
        %v2777 = vunpack.c.h.b16 %v1213
        %v2778 = vunpack.c.l.b16 %v1214
        %v2779 = vunpack.c.h.b16 %v1214
        %v2780 = vunpack.c.l.b16 %v1215
        %v2781 = vunpack.c.h.b16 %v1215
        %v2782 = vunpack.c.l.b16 %v1216
        %v2783 = vunpack.c.h.b16 %v1216
        %v2784 = vunpack.c.l.b16 %v1217
        %v2785 = vunpack.c.h.b16 %v1217
        %v2786 = vunpack.c.l.b16 %v1218
        %v2787 = vunpack.c.h.b16 %v1218
        %v2788 = vunpack.c.l.b16 %v1219
        %v2789 = vunpack.c.h.b16 %v1219
        %v2790 = vunpack.c.l.b16 %v1220
        %v2791 = vunpack.c.h.b16 %v1220
        %v2792 = vunpack.c.l.b16 %v1221
        %v2793 = vunpack.c.h.b16 %v1221
        %v2794 = vunpack.c.l.b16 %v1222
        %v2795 = vunpack.c.h.b16 %v1222
        %v2796 = vunpack.c.l.b16 %v1223
        %v2797 = vunpack.c.h.b16 %v1223
        %v2798 = vunpack.c.l.b16 %v1224
        %v2799 = vunpack.c.h.b16 %v1224
        %v2800 = vunpack.c.l.b16 %v1225
        %v2801 = vunpack.c.h.b16 %v1225
        %v2802 = vunpack.c.l.b16 %v1226
        %v2803 = vunpack.c.h.b16 %v1226
        %v2804 = vunpack.c.l.b16 %v1227
        %v2805 = vunpack.c.h.b16 %v1227
        %v2806 = vpack.c.b16 %v1790, %v1782
        %v2807 = vpack.c.b16 %v1791, %v1783
        %v2808 = vpack.c.b16 %v1792, %v1784
        %v2809 = vpack.c.b16 %v1793, %v1785
        %v2810 = vpack.c.b16 %v1794, %v1786
        %v2811 = vpack.c.b16 %v1795, %v1787
        %v2812 = vpack.c.b16 %v1796, %v1788
        %v2813 = vpack.c.b16 %v1797, %v1789
        %v2814 = vpack.c.b16 %v1806, %v1798
        %v2815 = vpack.c.b16 %v1807, %v1799
        %v2816 = vpack.c.b16 %v1808, %v1800
        %v2817 = vpack.c.b16 %v1809, %v1801
        %v2818 = vpack.c.b16 %v1810, %v1802
        %v2819 = vpack.c.b16 %v1811, %v1803
        %v2820 = vpack.c.b16 %v1812, %v1804
        %v2821 = vpack.c.b16 %v1813, %v1805
        %v2822 = vpack.c.b16 %v1822, %v1814
        %v2823 = vpack.c.b16 %v1823, %v1815
        %v2824 = vpack.c.b16 %v1824, %v1816
        %v2825 = vpack.c.b16 %v1825, %v1817
        %v2826 = vpack.c.b16 %v1826, %v1818
        %v2827 = vpack.c.b16 %v1827, %v1819
        %v2828 = vpack.c.b16 %v1828, %v1820
        %v2829 = vpack.c.b16 %v1829, %v1821
        %v2830 = vpack.c.b16 %v1838, %v1830
        %v2831 = vpack.c.b16 %v1839, %v1831
        %v2832 = vpack.c.b16 %v1840, %v1832
        %v2833 = vpack.c.b16 %v1841, %v1833
        %v2834 = vpack.c.b16 %v1842, %v1834
        %v2835 = vpack.c.b16 %v1843, %v1835
        %v2836 = vpack.c.b16 %v1844, %v1836
        %v2837 = vpack.c.b16 %v1845, %v1837
        %v2838 = vpack.c.b16 %v1854, %v1846
        %v2839 = vpack.c.b16 %v1855, %v1847
        %v2840 = vpack.c.b16 %v1856, %v1848
        %v2841 = vpack.c.b16 %v1857, %v1849
        %v2842 = vpack.c.b16 %v1858, %v1850
        %v2843 = vpack.c.b16 %v1859, %v1851
        %v2844 = vpack.c.b16 %v1860, %v1852
        %v2845 = vpack.c.b16 %v1861, %v1853
        %v2846 = vpack.c.b16 %v1870, %v1862
        %v2847 = vpack.c.b16 %v1871, %v1863
        %v2848 = vpack.c.b16 %v1872, %v1864
        %v2849 = vpack.c.b16 %v1873, %v1865
        %v2850 = vpack.c.b16 %v1874, %v1866
        %v2851 = vpack.c.b16 %v1875, %v1867
        %v2852 = vpack.c.b16 %v1876, %v1868
        %v2853 = vpack.c.b16 %v1877, %v1869
        %v2854 = vpack.c.b16 %v1886, %v1878
        %v2855 = vpack.c.b16 %v1887, %v1879
        %v2856 = vpack.c.b16 %v1888, %v1880
        %v2857 = vpack.c.b16 %v1889, %v1881
        %v2858 = vpack.c.b16 %v1890, %v1882
        %v2859 = vpack.c.b16 %v1891, %v1883
        %v2860 = vpack.c.b16 %v1892, %v1884
        %v2861 = vpack.c.b16 %v1893, %v1885
        %v2862 = vpack.c.b16 %v1902, %v1894
        %v2863 = vpack.c.b16 %v1903, %v1895
        %v2864 = vpack.c.b16 %v1904, %v1896
        %v2865 = vpack.c.b16 %v1905, %v1897
        %v2866 = vpack.c.b16 %v1906, %v1898
        %v2867 = vpack.c.b16 %v1907, %v1899
        %v2868 = vpack.c.b16 %v1908, %v1900
        %v2869 = vpack.c.b16 %v1909, %v1901
        %v2870 = vpack.c.b16 %v1918, %v1910
        %v2871 = vpack.c.b16 %v1919, %v1911
        %v2872 = vpack.c.b16 %v1920, %v1912
        %v2873 = vpack.c.b16 %v1921, %v1913
        %v2874 = vpack.c.b16 %v1922, %v1914
        %v2875 = vpack.c.b16 %v1923, %v1915
        %v2876 = vpack.c.b16 %v1924, %v1916
        %v2877 = vpack.c.b16 %v1925, %v1917
        %v2878 = vpack.c.b16 %v1934, %v1926
        %v2879 = vpack.c.b16 %v1935, %v1927
        %v2880 = vpack.c.b16 %v1936, %v1928
        %v2881 = vpack.c.b16 %v1937, %v1929
        %v2882 = vpack.c.b16 %v1938, %v1930
        %v2883 = vpack.c.b16 %v1939, %v1931
        %v2884 = vpack.c.b16 %v1940, %v1932
        %v2885 = vpack.c.b16 %v1941, %v1933
        %v2886 = vpack.c.b16 %v1950, %v1942
        %v2887 = vpack.c.b16 %v1951, %v1943
        %v2888 = vpack.c.b16 %v1952, %v1944
        %v2889 = vpack.c.b16 %v1953, %v1945
        %v2890 = vpack.c.b16 %v1954, %v1946
        %v2891 = vpack.c.b16 %v1955, %v1947
        %v2892 = vpack.c.b16 %v1956, %v1948
        %v2893 = vpack.c.b16 %v1957, %v1949
        %v2894 = vpack.c.b16 %v1966, %v1958
        %v2895 = vpack.c.b16 %v1967, %v1959
        %v2896 = vpack.c.b16 %v1968, %v1960
        %v2897 = vpack.c.b16 %v1969, %v1961
        %v2898 = vpack.c.b16 %v1970, %v1962
        %v2899 = vpack.c.b16 %v1971, %v1963
        %v2900 = vpack.c.b16 %v1972, %v1964
        %v2901 = vpack.c.b16 %v1973, %v1965
        %v2902 = vpack.c.b16 %v1982, %v1974
        %v2903 = vpack.c.b16 %v1983, %v1975
        %v2904 = vpack.c.b16 %v1984, %v1976
        %v2905 = vpack.c.b16 %v1985, %v1977
        %v2906 = vpack.c.b16 %v1986, %v1978
        %v2907 = vpack.c.b16 %v1987, %v1979
        %v2908 = vpack.c.b16 %v1988, %v1980
        %v2909 = vpack.c.b16 %v1989, %v1981
        %v2910 = vpack.c.b16 %v1998, %v1990
        %v2911 = vpack.c.b16 %v1999, %v1991
        %v2912 = vpack.c.b16 %v2000, %v1992
        %v2913 = vpack.c.b16 %v2001, %v1993
        %v2914 = vpack.c.b16 %v2002, %v1994
        %v2915 = vpack.c.b16 %v2003, %v1995
        %v2916 = vpack.c.b16 %v2004, %v1996
        %v2917 = vpack.c.b16 %v2005, %v1997
        %v2918 = vpack.c.b16 %v2014, %v2006
        %v2919 = vpack.c.b16 %v2015, %v2007
        %v2920 = vpack.c.b16 %v2016, %v2008
        %v2921 = vpack.c.b16 %v2017, %v2009
        %v2922 = vpack.c.b16 %v2018, %v2010
        %v2923 = vpack.c.b16 %v2019, %v2011
        %v2924 = vpack.c.b16 %v2020, %v2012
        %v2925 = vpack.c.b16 %v2021, %v2013
        %v2926 = vpack.c.b16 %v2030, %v2022
        %v2927 = vpack.c.b16 %v2031, %v2023
        %v2928 = vpack.c.b16 %v2032, %v2024
        %v2929 = vpack.c.b16 %v2033, %v2025
        %v2930 = vpack.c.b16 %v2034, %v2026
        %v2931 = vpack.c.b16 %v2035, %v2027
        %v2932 = vpack.c.b16 %v2036, %v2028
        %v2933 = vpack.c.b16 %v2037, %v2029
        %v2934 = vpack.c.b16 %v2046, %v2038
        %v2935 = vpack.c.b16 %v2047, %v2039
        %v2936 = vpack.c.b16 %v2048, %v2040
        %v2937 = vpack.c.b16 %v2049, %v2041
        %v2938 = vpack.c.b16 %v2050, %v2042
        %v2939 = vpack.c.b16 %v2051, %v2043
        %v2940 = vpack.c.b16 %v2052, %v2044
        %v2941 = vpack.c.b16 %v2053, %v2045
        %v2942 = vpack.c.b16 %v2062, %v2054
        %v2943 = vpack.c.b16 %v2063, %v2055
        %v2944 = vpack.c.b16 %v2064, %v2056
        %v2945 = vpack.c.b16 %v2065, %v2057
        %v2946 = vpack.c.b16 %v2066, %v2058
        %v2947 = vpack.c.b16 %v2067, %v2059
        %v2948 = vpack.c.b16 %v2068, %v2060
        %v2949 = vpack.c.b16 %v2069, %v2061
        %v2950 = vpack.c.b16 %v2078, %v2070
        %v2951 = vpack.c.b16 %v2079, %v2071
        %v2952 = vpack.c.b16 %v2080, %v2072
        %v2953 = vpack.c.b16 %v2081, %v2073
        %v2954 = vpack.c.b16 %v2082, %v2074
        %v2955 = vpack.c.b16 %v2083, %v2075
        %v2956 = vpack.c.b16 %v2084, %v2076
        %v2957 = vpack.c.b16 %v2085, %v2077
        %v2958 = vpack.c.b16 %v2094, %v2086
        %v2959 = vpack.c.b16 %v2095, %v2087
        %v2960 = vpack.c.b16 %v2096, %v2088
        %v2961 = vpack.c.b16 %v2097, %v2089
        %v2962 = vpack.c.b16 %v2098, %v2090
        %v2963 = vpack.c.b16 %v2099, %v2091
        %v2964 = vpack.c.b16 %v2100, %v2092
        %v2965 = vpack.c.b16 %v2101, %v2093
        %v2966 = vpack.c.b16 %v2110, %v2102
        %v2967 = vpack.c.b16 %v2111, %v2103
        %v2968 = vpack.c.b16 %v2112, %v2104
        %v2969 = vpack.c.b16 %v2113, %v2105
        %v2970 = vpack.c.b16 %v2114, %v2106
        %v2971 = vpack.c.b16 %v2115, %v2107
        %v2972 = vpack.c.b16 %v2116, %v2108
        %v2973 = vpack.c.b16 %v2117, %v2109
        %v2974 = vpack.c.b16 %v2126, %v2118
        %v2975 = vpack.c.b16 %v2127, %v2119
        %v2976 = vpack.c.b16 %v2128, %v2120
        %v2977 = vpack.c.b16 %v2129, %v2121
        %v2978 = vpack.c.b16 %v2130, %v2122
        %v2979 = vpack.c.b16 %v2131, %v2123
        %v2980 = vpack.c.b16 %v2132, %v2124
        %v2981 = vpack.c.b16 %v2133, %v2125
        %v2982 = vpack.c.b16 %v2142, %v2134
        %v2983 = vpack.c.b16 %v2143, %v2135
        %v2984 = vpack.c.b16 %v2144, %v2136
        %v2985 = vpack.c.b16 %v2145, %v2137
        %v2986 = vpack.c.b16 %v2146, %v2138
        %v2987 = vpack.c.b16 %v2147, %v2139
        %v2988 = vpack.c.b16 %v2148, %v2140
        %v2989 = vpack.c.b16 %v2149, %v2141
        %v2990 = vpack.c.b16 %v2158, %v2150
        %v2991 = vpack.c.b16 %v2159, %v2151
        %v2992 = vpack.c.b16 %v2160, %v2152
        %v2993 = vpack.c.b16 %v2161, %v2153
        %v2994 = vpack.c.b16 %v2162, %v2154
        %v2995 = vpack.c.b16 %v2163, %v2155
        %v2996 = vpack.c.b16 %v2164, %v2156
        %v2997 = vpack.c.b16 %v2165, %v2157
        %v2998 = vpack.c.b16 %v2174, %v2166
        %v2999 = vpack.c.b16 %v2175, %v2167
        %v3000 = vpack.c.b16 %v2176, %v2168
        %v3001 = vpack.c.b16 %v2177, %v2169
        %v3002 = vpack.c.b16 %v2178, %v2170
        %v3003 = vpack.c.b16 %v2179, %v2171
        %v3004 = vpack.c.b16 %v2180, %v2172
        %v3005 = vpack.c.b16 %v2181, %v2173
        %v3006 = vpack.c.b16 %v2190, %v2182
        %v3007 = vpack.c.b16 %v2191, %v2183
        %v3008 = vpack.c.b16 %v2192, %v2184
        %v3009 = vpack.c.b16 %v2193, %v2185
        %v3010 = vpack.c.b16 %v2194, %v2186
        %v3011 = vpack.c.b16 %v2195, %v2187
        %v3012 = vpack.c.b16 %v2196, %v2188
        %v3013 = vpack.c.b16 %v2197, %v2189
        %v3014 = vpack.c.b16 %v2206, %v2198
        %v3015 = vpack.c.b16 %v2207, %v2199
        %v3016 = vpack.c.b16 %v2208, %v2200
        %v3017 = vpack.c.b16 %v2209, %v2201
        %v3018 = vpack.c.b16 %v2210, %v2202
        %v3019 = vpack.c.b16 %v2211, %v2203
        %v3020 = vpack.c.b16 %v2212, %v2204
        %v3021 = vpack.c.b16 %v2213, %v2205
        %v3022 = vpack.c.b16 %v2222, %v2214
        %v3023 = vpack.c.b16 %v2223, %v2215
        %v3024 = vpack.c.b16 %v2224, %v2216
        %v3025 = vpack.c.b16 %v2225, %v2217
        %v3026 = vpack.c.b16 %v2226, %v2218
        %v3027 = vpack.c.b16 %v2227, %v2219
        %v3028 = vpack.c.b16 %v2228, %v2220
        %v3029 = vpack.c.b16 %v2229, %v2221
        %v3030 = vpack.c.b16 %v2238, %v2230
        %v3031 = vpack.c.b16 %v2239, %v2231
        %v3032 = vpack.c.b16 %v2240, %v2232
        %v3033 = vpack.c.b16 %v2241, %v2233
        %v3034 = vpack.c.b16 %v2242, %v2234
        %v3035 = vpack.c.b16 %v2243, %v2235
        %v3036 = vpack.c.b16 %v2244, %v2236
        %v3037 = vpack.c.b16 %v2245, %v2237
        %v3038 = vpack.c.b16 %v2254, %v2246
        %v3039 = vpack.c.b16 %v2255, %v2247
        %v3040 = vpack.c.b16 %v2256, %v2248
        %v3041 = vpack.c.b16 %v2257, %v2249
        %v3042 = vpack.c.b16 %v2258, %v2250
        %v3043 = vpack.c.b16 %v2259, %v2251
        %v3044 = vpack.c.b16 %v2260, %v2252
        %v3045 = vpack.c.b16 %v2261, %v2253
        %v3046 = vpack.c.b16 %v2270, %v2262
        %v3047 = vpack.c.b16 %v2271, %v2263
        %v3048 = vpack.c.b16 %v2272, %v2264
        %v3049 = vpack.c.b16 %v2273, %v2265
        %v3050 = vpack.c.b16 %v2274, %v2266
        %v3051 = vpack.c.b16 %v2275, %v2267
        %v3052 = vpack.c.b16 %v2276, %v2268
        %v3053 = vpack.c.b16 %v2277, %v2269
        %v3054 = vpack.c.b16 %v2286, %v2278
        %v3055 = vpack.c.b16 %v2287, %v2279
        %v3056 = vpack.c.b16 %v2288, %v2280
        %v3057 = vpack.c.b16 %v2289, %v2281
        %v3058 = vpack.c.b16 %v2290, %v2282
        %v3059 = vpack.c.b16 %v2291, %v2283
        %v3060 = vpack.c.b16 %v2292, %v2284
        %v3061 = vpack.c.b16 %v2293, %v2285
        %v3062 = vpack.c.b16 %v2302, %v2294
        %v3063 = vpack.c.b16 %v2303, %v2295
        %v3064 = vpack.c.b16 %v2304, %v2296
        %v3065 = vpack.c.b16 %v2305, %v2297
        %v3066 = vpack.c.b16 %v2306, %v2298
        %v3067 = vpack.c.b16 %v2307, %v2299
        %v3068 = vpack.c.b16 %v2308, %v2300
        %v3069 = vpack.c.b16 %v2309, %v2301
        %v3070 = vpack.c.b16 %v2318, %v2310
        %v3071 = vpack.c.b16 %v2319, %v2311
        %v3072 = vpack.c.b16 %v2320, %v2312
        %v3073 = vpack.c.b16 %v2321, %v2313
        %v3074 = vpack.c.b16 %v2322, %v2314
        %v3075 = vpack.c.b16 %v2323, %v2315
        %v3076 = vpack.c.b16 %v2324, %v2316
        %v3077 = vpack.c.b16 %v2325, %v2317
        %v3078 = vpack.c.b16 %v2334, %v2326
        %v3079 = vpack.c.b16 %v2335, %v2327
        %v3080 = vpack.c.b16 %v2336, %v2328
        %v3081 = vpack.c.b16 %v2337, %v2329
        %v3082 = vpack.c.b16 %v2338, %v2330
        %v3083 = vpack.c.b16 %v2339, %v2331
        %v3084 = vpack.c.b16 %v2340, %v2332
        %v3085 = vpack.c.b16 %v2341, %v2333
        %v3086 = vpack.c.b16 %v2350, %v2342
        %v3087 = vpack.c.b16 %v2351, %v2343
        %v3088 = vpack.c.b16 %v2352, %v2344
        %v3089 = vpack.c.b16 %v2353, %v2345
        %v3090 = vpack.c.b16 %v2354, %v2346
        %v3091 = vpack.c.b16 %v2355, %v2347
        %v3092 = vpack.c.b16 %v2356, %v2348
        %v3093 = vpack.c.b16 %v2357, %v2349
        %v3094 = vpack.c.b16 %v2366, %v2358
        %v3095 = vpack.c.b16 %v2367, %v2359
        %v3096 = vpack.c.b16 %v2368, %v2360
        %v3097 = vpack.c.b16 %v2369, %v2361
        %v3098 = vpack.c.b16 %v2370, %v2362
        %v3099 = vpack.c.b16 %v2371, %v2363
        %v3100 = vpack.c.b16 %v2372, %v2364
        %v3101 = vpack.c.b16 %v2373, %v2365
        %v3102 = vpack.c.b16 %v2382, %v2374
        %v3103 = vpack.c.b16 %v2383, %v2375
        %v3104 = vpack.c.b16 %v2384, %v2376
        %v3105 = vpack.c.b16 %v2385, %v2377
        %v3106 = vpack.c.b16 %v2386, %v2378
        %v3107 = vpack.c.b16 %v2387, %v2379
        %v3108 = vpack.c.b16 %v2388, %v2380
        %v3109 = vpack.c.b16 %v2389, %v2381
        %v3110 = vpack.c.b16 %v2398, %v2390
        %v3111 = vpack.c.b16 %v2399, %v2391
        %v3112 = vpack.c.b16 %v2400, %v2392
        %v3113 = vpack.c.b16 %v2401, %v2393
        %v3114 = vpack.c.b16 %v2402, %v2394
        %v3115 = vpack.c.b16 %v2403, %v2395
        %v3116 = vpack.c.b16 %v2404, %v2396
        %v3117 = vpack.c.b16 %v2405, %v2397
        %v3118 = vpack.c.b16 %v2414, %v2406
        %v3119 = vpack.c.b16 %v2415, %v2407
        %v3120 = vpack.c.b16 %v2416, %v2408
        %v3121 = vpack.c.b16 %v2417, %v2409
        %v3122 = vpack.c.b16 %v2418, %v2410
        %v3123 = vpack.c.b16 %v2419, %v2411
        %v3124 = vpack.c.b16 %v2420, %v2412
        %v3125 = vpack.c.b16 %v2421, %v2413
        %v3126 = vpack.c.b16 %v2430, %v2422
        %v3127 = vpack.c.b16 %v2431, %v2423
        %v3128 = vpack.c.b16 %v2432, %v2424
        %v3129 = vpack.c.b16 %v2433, %v2425
        %v3130 = vpack.c.b16 %v2434, %v2426
        %v3131 = vpack.c.b16 %v2435, %v2427
        %v3132 = vpack.c.b16 %v2436, %v2428
        %v3133 = vpack.c.b16 %v2437, %v2429
        %v3134 = vpack.c.b16 %v2446, %v2438
        %v3135 = vpack.c.b16 %v2447, %v2439
        %v3136 = vpack.c.b16 %v2448, %v2440
        %v3137 = vpack.c.b16 %v2449, %v2441
        %v3138 = vpack.c.b16 %v2450, %v2442
        %v3139 = vpack.c.b16 %v2451, %v2443
        %v3140 = vpack.c.b16 %v2452, %v2444
        %v3141 = vpack.c.b16 %v2453, %v2445
        %v3142 = vpack.c.b16 %v2462, %v2454
        %v3143 = vpack.c.b16 %v2463, %v2455
        %v3144 = vpack.c.b16 %v2464, %v2456
        %v3145 = vpack.c.b16 %v2465, %v2457
        %v3146 = vpack.c.b16 %v2466, %v2458
        %v3147 = vpack.c.b16 %v2467, %v2459
        %v3148 = vpack.c.b16 %v2468, %v2460
        %v3149 = vpack.c.b16 %v2469, %v2461
        %v3150 = vpack.c.b16 %v2478, %v2470
        %v3151 = vpack.c.b16 %v2479, %v2471
        %v3152 = vpack.c.b16 %v2480, %v2472
        %v3153 = vpack.c.b16 %v2481, %v2473
        %v3154 = vpack.c.b16 %v2482, %v2474
        %v3155 = vpack.c.b16 %v2483, %v2475
        %v3156 = vpack.c.b16 %v2484, %v2476
        %v3157 = vpack.c.b16 %v2485, %v2477
        %v3158 = vpack.c.b16 %v2494, %v2486
        %v3159 = vpack.c.b16 %v2495, %v2487
        %v3160 = vpack.c.b16 %v2496, %v2488
        %v3161 = vpack.c.b16 %v2497, %v2489
        %v3162 = vpack.c.b16 %v2498, %v2490
        %v3163 = vpack.c.b16 %v2499, %v2491
        %v3164 = vpack.c.b16 %v2500, %v2492
        %v3165 = vpack.c.b16 %v2501, %v2493
        %v3166 = vpack.c.b16 %v2510, %v2502
        %v3167 = vpack.c.b16 %v2511, %v2503
        %v3168 = vpack.c.b16 %v2512, %v2504
        %v3169 = vpack.c.b16 %v2513, %v2505
        %v3170 = vpack.c.b16 %v2514, %v2506
        %v3171 = vpack.c.b16 %v2515, %v2507
        %v3172 = vpack.c.b16 %v2516, %v2508
        %v3173 = vpack.c.b16 %v2517, %v2509
        %v3174 = vpack.c.b16 %v2526, %v2518
        %v3175 = vpack.c.b16 %v2527, %v2519
        %v3176 = vpack.c.b16 %v2528, %v2520
        %v3177 = vpack.c.b16 %v2529, %v2521
        %v3178 = vpack.c.b16 %v2530, %v2522
        %v3179 = vpack.c.b16 %v2531, %v2523
        %v3180 = vpack.c.b16 %v2532, %v2524
        %v3181 = vpack.c.b16 %v2533, %v2525
        %v3182 = vpack.c.b16 %v2542, %v2534
        %v3183 = vpack.c.b16 %v2543, %v2535
        %v3184 = vpack.c.b16 %v2544, %v2536
        %v3185 = vpack.c.b16 %v2545, %v2537
        %v3186 = vpack.c.b16 %v2546, %v2538
        %v3187 = vpack.c.b16 %v2547, %v2539
        %v3188 = vpack.c.b16 %v2548, %v2540
        %v3189 = vpack.c.b16 %v2549, %v2541
        %v3190 = vpack.c.b16 %v2558, %v2550
        %v3191 = vpack.c.b16 %v2559, %v2551
        %v3192 = vpack.c.b16 %v2560, %v2552
        %v3193 = vpack.c.b16 %v2561, %v2553
        %v3194 = vpack.c.b16 %v2562, %v2554
        %v3195 = vpack.c.b16 %v2563, %v2555
        %v3196 = vpack.c.b16 %v2564, %v2556
        %v3197 = vpack.c.b16 %v2565, %v2557
        %v3198 = vpack.c.b16 %v2574, %v2566
        %v3199 = vpack.c.b16 %v2575, %v2567
        %v3200 = vpack.c.b16 %v2576, %v2568
        %v3201 = vpack.c.b16 %v2577, %v2569
        %v3202 = vpack.c.b16 %v2578, %v2570
        %v3203 = vpack.c.b16 %v2579, %v2571
        %v3204 = vpack.c.b16 %v2580, %v2572
        %v3205 = vpack.c.b16 %v2581, %v2573
        %v3206 = vpack.c.b16 %v2590, %v2582
        %v3207 = vpack.c.b16 %v2591, %v2583
        %v3208 = vpack.c.b16 %v2592, %v2584
        %v3209 = vpack.c.b16 %v2593, %v2585
        %v3210 = vpack.c.b16 %v2594, %v2586
        %v3211 = vpack.c.b16 %v2595, %v2587
        %v3212 = vpack.c.b16 %v2596, %v2588
        %v3213 = vpack.c.b16 %v2597, %v2589
        %v3214 = vpack.c.b16 %v2606, %v2598
        %v3215 = vpack.c.b16 %v2607, %v2599
        %v3216 = vpack.c.b16 %v2608, %v2600
        %v3217 = vpack.c.b16 %v2609, %v2601
        %v3218 = vpack.c.b16 %v2610, %v2602
        %v3219 = vpack.c.b16 %v2611, %v2603
        %v3220 = vpack.c.b16 %v2612, %v2604
        %v3221 = vpack.c.b16 %v2613, %v2605
        %v3222 = vpack.c.b16 %v2622, %v2614
        %v3223 = vpack.c.b16 %v2623, %v2615
        %v3224 = vpack.c.b16 %v2624, %v2616
        %v3225 = vpack.c.b16 %v2625, %v2617
        %v3226 = vpack.c.b16 %v2626, %v2618
        %v3227 = vpack.c.b16 %v2627, %v2619
        %v3228 = vpack.c.b16 %v2628, %v2620
        %v3229 = vpack.c.b16 %v2629, %v2621
        %v3230 = vpack.c.b16 %v2638, %v2630
        %v3231 = vpack.c.b16 %v2639, %v2631
        %v3232 = vpack.c.b16 %v2640, %v2632
        %v3233 = vpack.c.b16 %v2641, %v2633
        %v3234 = vpack.c.b16 %v2642, %v2634
        %v3235 = vpack.c.b16 %v2643, %v2635
        %v3236 = vpack.c.b16 %v2644, %v2636
        %v3237 = vpack.c.b16 %v2645, %v2637
        %v3238 = vpack.c.b16 %v2654, %v2646
        %v3239 = vpack.c.b16 %v2655, %v2647
        %v3240 = vpack.c.b16 %v2656, %v2648
        %v3241 = vpack.c.b16 %v2657, %v2649
        %v3242 = vpack.c.b16 %v2658, %v2650
        %v3243 = vpack.c.b16 %v2659, %v2651
        %v3244 = vpack.c.b16 %v2660, %v2652
        %v3245 = vpack.c.b16 %v2661, %v2653
        %v3246 = vpack.c.b16 %v2670, %v2662
        %v3247 = vpack.c.b16 %v2671, %v2663
        %v3248 = vpack.c.b16 %v2672, %v2664
        %v3249 = vpack.c.b16 %v2673, %v2665
        %v3250 = vpack.c.b16 %v2674, %v2666
        %v3251 = vpack.c.b16 %v2675, %v2667
        %v3252 = vpack.c.b16 %v2676, %v2668
        %v3253 = vpack.c.b16 %v2677, %v2669
        %v3254 = vpack.c.b16 %v2686, %v2678
        %v3255 = vpack.c.b16 %v2687, %v2679
        %v3256 = vpack.c.b16 %v2688, %v2680
        %v3257 = vpack.c.b16 %v2689, %v2681
        %v3258 = vpack.c.b16 %v2690, %v2682
        %v3259 = vpack.c.b16 %v2691, %v2683
        %v3260 = vpack.c.b16 %v2692, %v2684
        %v3261 = vpack.c.b16 %v2693, %v2685
        %v3262 = vpack.c.b16 %v2702, %v2694
        %v3263 = vpack.c.b16 %v2703, %v2695
        %v3264 = vpack.c.b16 %v2704, %v2696
        %v3265 = vpack.c.b16 %v2705, %v2697
        %v3266 = vpack.c.b16 %v2706, %v2698
        %v3267 = vpack.c.b16 %v2707, %v2699
        %v3268 = vpack.c.b16 %v2708, %v2700
        %v3269 = vpack.c.b16 %v2709, %v2701
        %v3270 = vpack.c.b16 %v2718, %v2710
        %v3271 = vpack.c.b16 %v2719, %v2711
        %v3272 = vpack.c.b16 %v2720, %v2712
        %v3273 = vpack.c.b16 %v2721, %v2713
        %v3274 = vpack.c.b16 %v2722, %v2714
        %v3275 = vpack.c.b16 %v2723, %v2715
        %v3276 = vpack.c.b16 %v2724, %v2716
        %v3277 = vpack.c.b16 %v2725, %v2717
        %v3278 = vpack.c.b16 %v2734, %v2726
        %v3279 = vpack.c.b16 %v2735, %v2727
        %v3280 = vpack.c.b16 %v2736, %v2728
        %v3281 = vpack.c.b16 %v2737, %v2729
        %v3282 = vpack.c.b16 %v2738, %v2730
        %v3283 = vpack.c.b16 %v2739, %v2731
        %v3284 = vpack.c.b16 %v2740, %v2732
        %v3285 = vpack.c.b16 %v2741, %v2733
        %v3286 = vpack.c.b16 %v2750, %v2742
        %v3287 = vpack.c.b16 %v2751, %v2743
        %v3288 = vpack.c.b16 %v2752, %v2744
        %v3289 = vpack.c.b16 %v2753, %v2745
        %v3290 = vpack.c.b16 %v2754, %v2746
        %v3291 = vpack.c.b16 %v2755, %v2747
        %v3292 = vpack.c.b16 %v2756, %v2748
        %v3293 = vpack.c.b16 %v2757, %v2749
        %v3294 = vpack.c.b16 %v2766, %v2758
        %v3295 = vpack.c.b16 %v2767, %v2759
        %v3296 = vpack.c.b16 %v2768, %v2760
        %v3297 = vpack.c.b16 %v2769, %v2761
        %v3298 = vpack.c.b16 %v2770, %v2762
        %v3299 = vpack.c.b16 %v2771, %v2763
        %v3300 = vpack.c.b16 %v2772, %v2764
        %v3301 = vpack.c.b16 %v2773, %v2765
        %v3302 = vpack.c.b16 %v2782, %v2774
        %v3303 = vpack.c.b16 %v2783, %v2775
        %v3304 = vpack.c.b16 %v2784, %v2776
        %v3305 = vpack.c.b16 %v2785, %v2777
        %v3306 = vpack.c.b16 %v2786, %v2778
        %v3307 = vpack.c.b16 %v2787, %v2779
        %v3308 = vpack.c.b16 %v2788, %v2780
        %v3309 = vpack.c.b16 %v2789, %v2781
        %v3310 = vpack.c.b16 %v2798, %v2790
        %v3311 = vpack.c.b16 %v2799, %v2791
        %v3312 = vpack.c.b16 %v2800, %v2792
        %v3313 = vpack.c.b16 %v2801, %v2793
        %v3314 = vpack.c.b16 %v2802, %v2794
        %v3315 = vpack.c.b16 %v2803, %v2795
        %v3316 = vpack.c.b16 %v2804, %v2796
        %v3317 = vpack.c.b16 %v2805, %v2797
        %3830 = vmatprep.subr.bf16.mxu0 %v2863
        %3831 = vmatpush1.bf16.msra.mxu0 %v2862
        %3832 = vmatprep.subr.bf16.mxu0 %v2855
        %3833 = vmatpush1.bf16.msra.mxu0 %v2854
        %3834 = vmatprep.subr.bf16.mxu0 %v2847
        %3835 = vmatpush1.bf16.msra.mxu0 %v2846
        %3836 = vmatprep.subr.bf16.mxu0 %v2839
        %3837 = vmatpush1.bf16.msra.mxu0 %v2838
        %3838 = vmatprep.subr.bf16.mxu0 %v2831
        %3839 = vmatpush1.bf16.msra.mxu0 %v2830
        %3840 = vmatprep.subr.bf16.mxu0 %v2823
        %3841 = vmatpush1.bf16.msra.mxu0 %v2822
        %3842 = vmatprep.subr.bf16.mxu0 %v2815
        %3843 = vmatpush1.bf16.msra.mxu0 %v2814
        %3844 = vmatprep.subr.bf16.mxu0 %v2807
        %3845 = vmatpush1.bf16.msra.mxu0 %v2806
        %3846 = vmatprep.subr.bf16.mxu0 %v2927
        %3847 = vmatpush2.bf16.msra.mxu0 %v2926
        %3848 = vmatprep.subr.bf16.mxu0 %v2919
        %3849 = vmatpush2.bf16.msra.mxu0 %v2918
        %3850 = vmatprep.subr.bf16.mxu0 %v2911
        %3851 = vmatpush2.bf16.msra.mxu0 %v2910
        %3852 = vmatprep.subr.bf16.mxu0 %v2903
        %3853 = vmatpush2.bf16.msra.mxu0 %v2902
        %3854 = vmatprep.subr.bf16.mxu0 %v2895
        %3855 = vmatpush2.bf16.msra.mxu0 %v2894
        %3856 = vmatprep.subr.bf16.mxu0 %v2887
        %3857 = vmatpush2.bf16.msra.mxu0 %v2886
        %3858 = vmatprep.subr.bf16.mxu0 %v2879
        %3859 = vmatpush2.bf16.msra.mxu0 %v2878
        %3860 = vmatprep.subr.bf16.mxu0 %v2871
        %3861 = vmatpush2.bf16.msra.mxu0 %v2870
        %3862 = vmatprep.mubr.bf16.mxu0 %v709
        %3863 = vmatmul.mubr.bf16.gmra.mxu0 %v708
        %v3864 = vpop.f32.mrf.mxu0
        %v3865 = vadd.f32 %v1233, %v3864
        %v3866 = vpop.f32.mrf.mxu0
        %v3867 = vadd.f32 %v1237, %v3866
        %v3868 = vpop.f32.mrf.mxu0
        %v3869 = vpop.f32.mrf.mxu0
        %3870 = vdwg.mxu0
        %3871 = vmatprep.subr.bf16.mxu0 %v2991
        %3872 = vmatpush1.bf16.msra.mxu0 %v2990
        %3873 = vmatprep.subr.bf16.mxu0 %v2983
        %3874 = vmatpush1.bf16.msra.mxu0 %v2982
        %3875 = vmatprep.subr.bf16.mxu0 %v2975
        %3876 = vmatpush1.bf16.msra.mxu0 %v2974
        %3877 = vmatprep.subr.bf16.mxu0 %v2967
        %3878 = vmatpush1.bf16.msra.mxu0 %v2966
        %3879 = vmatprep.subr.bf16.mxu0 %v2959
        %3880 = vmatpush1.bf16.msra.mxu0 %v2958
        %3881 = vmatprep.subr.bf16.mxu0 %v2951
        %3882 = vmatpush1.bf16.msra.mxu0 %v2950
        %3883 = vmatprep.subr.bf16.mxu0 %v2943
        %3884 = vmatpush1.bf16.msra.mxu0 %v2942
        %3885 = vmatprep.subr.bf16.mxu0 %v2935
        %3886 = vmatpush1.bf16.msra.mxu0 %v2934
        %3887 = vmatprep.subr.bf16.mxu0 %v3055
        %3888 = vmatpush2.bf16.msra.mxu0 %v3054
        %3889 = vmatprep.subr.bf16.mxu0 %v3047
        %3890 = vmatpush2.bf16.msra.mxu0 %v3046
        %3891 = vmatprep.subr.bf16.mxu0 %v3039
        %3892 = vmatpush2.bf16.msra.mxu0 %v3038
        %3893 = vmatprep.subr.bf16.mxu0 %v3031
        %3894 = vmatpush2.bf16.msra.mxu0 %v3030
        %3895 = vmatprep.subr.bf16.mxu0 %v3023
        %3896 = vmatpush2.bf16.msra.mxu0 %v3022
        %3897 = vmatprep.subr.bf16.mxu0 %v3015
        %3898 = vmatpush2.bf16.msra.mxu0 %v3014
        %3899 = vmatprep.subr.bf16.mxu0 %v3007
        %3900 = vmatpush2.bf16.msra.mxu0 %v3006
        %3901 = vmatprep.subr.bf16.mxu0 %v2999
        %3902 = vmatpush2.bf16.msra.mxu0 %v2998
        %3903 = vmatprep.mubr.bf16.mxu0 %v711
        %3904 = vmatmul.mubr.bf16.gmra.mxu0 %v710
        %v3905 = vpop.f32.mrf.mxu0
        %v3906 = vadd.f32 %v3865, %v3905
        %v3907 = vpop.f32.mrf.mxu0
        %v3908 = vadd.f32 %v3867, %v3907
        %v3909 = vpop.f32.mrf.mxu0
        %v3910 = vpop.f32.mrf.mxu0
        %3911 = vdwg.mxu0
        %3912 = vmatprep.subr.bf16.mxu0 %v3119
        %3913 = vmatpush1.bf16.msra.mxu0 %v3118
        %3914 = vmatprep.subr.bf16.mxu0 %v3111
        %3915 = vmatpush1.bf16.msra.mxu0 %v3110
        %3916 = vmatprep.subr.bf16.mxu0 %v3103
        %3917 = vmatpush1.bf16.msra.mxu0 %v3102
        %3918 = vmatprep.subr.bf16.mxu0 %v3095
        %3919 = vmatpush1.bf16.msra.mxu0 %v3094
        %3920 = vmatprep.subr.bf16.mxu0 %v3087
        %3921 = vmatpush1.bf16.msra.mxu0 %v3086
        %3922 = vmatprep.subr.bf16.mxu0 %v3079
        %3923 = vmatpush1.bf16.msra.mxu0 %v3078
        %3924 = vmatprep.subr.bf16.mxu0 %v3071
        %3925 = vmatpush1.bf16.msra.mxu0 %v3070
        %3926 = vmatprep.subr.bf16.mxu0 %v3063
        %3927 = vmatpush1.bf16.msra.mxu0 %v3062
        %3928 = vmatprep.subr.bf16.mxu0 %v3183
        %3929 = vmatpush2.bf16.msra.mxu0 %v3182
        %3930 = vmatprep.subr.bf16.mxu0 %v3175
        %3931 = vmatpush2.bf16.msra.mxu0 %v3174
        %3932 = vmatprep.subr.bf16.mxu0 %v3167
        %3933 = vmatpush2.bf16.msra.mxu0 %v3166
        %3934 = vmatprep.subr.bf16.mxu0 %v3159
        %3935 = vmatpush2.bf16.msra.mxu0 %v3158
        %3936 = vmatprep.subr.bf16.mxu0 %v3151
        %3937 = vmatpush2.bf16.msra.mxu0 %v3150
        %3938 = vmatprep.subr.bf16.mxu0 %v3143
        %3939 = vmatpush2.bf16.msra.mxu0 %v3142
        %3940 = vmatprep.subr.bf16.mxu0 %v3135
        %3941 = vmatpush2.bf16.msra.mxu0 %v3134
        %3942 = vmatprep.subr.bf16.mxu0 %v3127
        %3943 = vmatpush2.bf16.msra.mxu0 %v3126
        %3944 = vmatprep.mubr.bf16.mxu0 %v713
        %3945 = vmatmul.mubr.bf16.gmra.mxu0 %v712
        %v3946 = vpop.f32.mrf.mxu0
        %v3947 = vadd.f32 %v3906, %v3946
        %v3948 = vpop.f32.mrf.mxu0
        %v3949 = vadd.f32 %v3908, %v3948
        %v3950 = vpop.f32.mrf.mxu0
        %v3951 = vpop.f32.mrf.mxu0
        %3952 = vdwg.mxu0
        %3953 = vmatprep.subr.bf16.mxu0 %v3247
        %3954 = vmatpush1.bf16.msra.mxu0 %v3246
        %3955 = vmatprep.subr.bf16.mxu0 %v3239
        %3956 = vmatpush1.bf16.msra.mxu0 %v3238
        %3957 = vmatprep.subr.bf16.mxu0 %v3231
        %3958 = vmatpush1.bf16.msra.mxu0 %v3230
        %3959 = vmatprep.subr.bf16.mxu0 %v3223
        %3960 = vmatpush1.bf16.msra.mxu0 %v3222
        %3961 = vmatprep.subr.bf16.mxu0 %v3215
        %3962 = vmatpush1.bf16.msra.mxu0 %v3214
        %3963 = vmatprep.subr.bf16.mxu0 %v3207
        %3964 = vmatpush1.bf16.msra.mxu0 %v3206
        %3965 = vmatprep.subr.bf16.mxu0 %v3199
        %3966 = vmatpush1.bf16.msra.mxu0 %v3198
        %3967 = vmatprep.subr.bf16.mxu0 %v3191
        %3968 = vmatpush1.bf16.msra.mxu0 %v3190
        %3969 = vmatprep.subr.bf16.mxu0 %v3311
        %3970 = vmatpush2.bf16.msra.mxu0 %v3310
        %3971 = vmatprep.subr.bf16.mxu0 %v3303
        %3972 = vmatpush2.bf16.msra.mxu0 %v3302
        %3973 = vmatprep.subr.bf16.mxu0 %v3295
        %3974 = vmatpush2.bf16.msra.mxu0 %v3294
        %3975 = vmatprep.subr.bf16.mxu0 %v3287
        %3976 = vmatpush2.bf16.msra.mxu0 %v3286
        %3977 = vmatprep.subr.bf16.mxu0 %v3279
        %3978 = vmatpush2.bf16.msra.mxu0 %v3278
        %3979 = vmatprep.subr.bf16.mxu0 %v3271
        %3980 = vmatpush2.bf16.msra.mxu0 %v3270
        %3981 = vmatprep.subr.bf16.mxu0 %v3263
        %3982 = vmatpush2.bf16.msra.mxu0 %v3262
        %3983 = vmatprep.subr.bf16.mxu0 %v3255
        %3984 = vmatpush2.bf16.msra.mxu0 %v3254
        %3985 = vmatprep.mubr.bf16.mxu0 %v715
        %3986 = vmatmul.mubr.bf16.gmra.mxu0 %v714
        %v3987 = vpop.f32.mrf.mxu0
        %v3988 = vadd.f32 %v3947, %v3987
        %v3989 = vpop.f32.mrf.mxu0
        %v3990 = vadd.f32 %v3949, %v3989
        %v3991 = vpop.f32.mrf.mxu0
        %v3992 = vpop.f32.mrf.mxu0
        %3993 = vdwg.mxu0
        %3994 = vmatprep.subr.bf16.mxu0 %v2865
        %3995 = vmatpush1.bf16.msra.mxu0 %v2864
        %3996 = vmatprep.subr.bf16.mxu0 %v2857
        %3997 = vmatpush1.bf16.msra.mxu0 %v2856
        %3998 = vmatprep.subr.bf16.mxu0 %v2849
        %3999 = vmatpush1.bf16.msra.mxu0 %v2848
        %4000 = vmatprep.subr.bf16.mxu0 %v2841
        %4001 = vmatpush1.bf16.msra.mxu0 %v2840
        %4002 = vmatprep.subr.bf16.mxu0 %v2833
        %4003 = vmatpush1.bf16.msra.mxu0 %v2832
        %4004 = vmatprep.subr.bf16.mxu0 %v2825
        %4005 = vmatpush1.bf16.msra.mxu0 %v2824
        %4006 = vmatprep.subr.bf16.mxu0 %v2817
        %4007 = vmatpush1.bf16.msra.mxu0 %v2816
        %4008 = vmatprep.subr.bf16.mxu0 %v2809
        %4009 = vmatpush1.bf16.msra.mxu0 %v2808
        %4010 = vmatprep.subr.bf16.mxu0 %v2929
        %4011 = vmatpush2.bf16.msra.mxu0 %v2928
        %4012 = vmatprep.subr.bf16.mxu0 %v2921
        %4013 = vmatpush2.bf16.msra.mxu0 %v2920
        %4014 = vmatprep.subr.bf16.mxu0 %v2913
        %4015 = vmatpush2.bf16.msra.mxu0 %v2912
        %4016 = vmatprep.subr.bf16.mxu0 %v2905
        %4017 = vmatpush2.bf16.msra.mxu0 %v2904
        %4018 = vmatprep.subr.bf16.mxu0 %v2897
        %4019 = vmatpush2.bf16.msra.mxu0 %v2896
        %4020 = vmatprep.subr.bf16.mxu0 %v2889
        %4021 = vmatpush2.bf16.msra.mxu0 %v2888
        %4022 = vmatprep.subr.bf16.mxu0 %v2881
        %4023 = vmatpush2.bf16.msra.mxu0 %v2880
        %4024 = vmatprep.subr.bf16.mxu0 %v2873
        %4025 = vmatpush2.bf16.msra.mxu0 %v2872
        %4026 = vmatprep.mubr.bf16.mxu0 %v709
        %4027 = vmatmul.mubr.bf16.gmra.mxu0 %v708
        %v4028 = vpop.f32.mrf.mxu0
        %v4029 = vadd.f32 %v1241, %v4028
        %v4030 = vpop.f32.mrf.mxu0
        %v4031 = vadd.f32 %v1245, %v4030
        %v4032 = vpop.f32.mrf.mxu0
        %v4033 = vpop.f32.mrf.mxu0
        %4034 = vdwg.mxu0
        %4035 = vmatprep.subr.bf16.mxu0 %v2993
        %4036 = vmatpush1.bf16.msra.mxu0 %v2992
        %4037 = vmatprep.subr.bf16.mxu0 %v2985
        %4038 = vmatpush1.bf16.msra.mxu0 %v2984
        %4039 = vmatprep.subr.bf16.mxu0 %v2977
        %4040 = vmatpush1.bf16.msra.mxu0 %v2976
        %4041 = vmatprep.subr.bf16.mxu0 %v2969
        %4042 = vmatpush1.bf16.msra.mxu0 %v2968
        %4043 = vmatprep.subr.bf16.mxu0 %v2961
        %4044 = vmatpush1.bf16.msra.mxu0 %v2960
        %4045 = vmatprep.subr.bf16.mxu0 %v2953
        %4046 = vmatpush1.bf16.msra.mxu0 %v2952
        %4047 = vmatprep.subr.bf16.mxu0 %v2945
        %4048 = vmatpush1.bf16.msra.mxu0 %v2944
        %4049 = vmatprep.subr.bf16.mxu0 %v2937
        %4050 = vmatpush1.bf16.msra.mxu0 %v2936
        %4051 = vmatprep.subr.bf16.mxu0 %v3057
        %4052 = vmatpush2.bf16.msra.mxu0 %v3056
        %4053 = vmatprep.subr.bf16.mxu0 %v3049
        %4054 = vmatpush2.bf16.msra.mxu0 %v3048
        %4055 = vmatprep.subr.bf16.mxu0 %v3041
        %4056 = vmatpush2.bf16.msra.mxu0 %v3040
        %4057 = vmatprep.subr.bf16.mxu0 %v3033
        %4058 = vmatpush2.bf16.msra.mxu0 %v3032
        %4059 = vmatprep.subr.bf16.mxu0 %v3025
        %4060 = vmatpush2.bf16.msra.mxu0 %v3024
        %4061 = vmatprep.subr.bf16.mxu0 %v3017
        %4062 = vmatpush2.bf16.msra.mxu0 %v3016
        %4063 = vmatprep.subr.bf16.mxu0 %v3009
        %4064 = vmatpush2.bf16.msra.mxu0 %v3008
        %4065 = vmatprep.subr.bf16.mxu0 %v3001
        %4066 = vmatpush2.bf16.msra.mxu0 %v3000
        %4067 = vmatprep.mubr.bf16.mxu0 %v711
        %4068 = vmatmul.mubr.bf16.gmra.mxu0 %v710
        %v4069 = vpop.f32.mrf.mxu0
        %v4070 = vadd.f32 %v4029, %v4069
        %v4071 = vpop.f32.mrf.mxu0
        %v4072 = vadd.f32 %v4031, %v4071
        %v4073 = vpop.f32.mrf.mxu0
        %v4074 = vpop.f32.mrf.mxu0
        %4075 = vdwg.mxu0
        %4076 = vmatprep.subr.bf16.mxu0 %v3121
        %4077 = vmatpush1.bf16.msra.mxu0 %v3120
        %4078 = vmatprep.subr.bf16.mxu0 %v3113
        %4079 = vmatpush1.bf16.msra.mxu0 %v3112
        %4080 = vmatprep.subr.bf16.mxu0 %v3105
        %4081 = vmatpush1.bf16.msra.mxu0 %v3104
        %4082 = vmatprep.subr.bf16.mxu0 %v3097
        %4083 = vmatpush1.bf16.msra.mxu0 %v3096
        %4084 = vmatprep.subr.bf16.mxu0 %v3089
        %4085 = vmatpush1.bf16.msra.mxu0 %v3088
        %4086 = vmatprep.subr.bf16.mxu0 %v3081
        %4087 = vmatpush1.bf16.msra.mxu0 %v3080
        %4088 = vmatprep.subr.bf16.mxu0 %v3073
        %4089 = vmatpush1.bf16.msra.mxu0 %v3072
        %4090 = vmatprep.subr.bf16.mxu0 %v3065
        %4091 = vmatpush1.bf16.msra.mxu0 %v3064
        %4092 = vmatprep.subr.bf16.mxu0 %v3185
        %4093 = vmatpush2.bf16.msra.mxu0 %v3184
        %4094 = vmatprep.subr.bf16.mxu0 %v3177
        %4095 = vmatpush2.bf16.msra.mxu0 %v3176
        %4096 = vmatprep.subr.bf16.mxu0 %v3169
        %4097 = vmatpush2.bf16.msra.mxu0 %v3168
        %4098 = vmatprep.subr.bf16.mxu0 %v3161
        %4099 = vmatpush2.bf16.msra.mxu0 %v3160
        %4100 = vmatprep.subr.bf16.mxu0 %v3153
        %4101 = vmatpush2.bf16.msra.mxu0 %v3152
        %4102 = vmatprep.subr.bf16.mxu0 %v3145
        %4103 = vmatpush2.bf16.msra.mxu0 %v3144
        %4104 = vmatprep.subr.bf16.mxu0 %v3137
        %4105 = vmatpush2.bf16.msra.mxu0 %v3136
        %4106 = vmatprep.subr.bf16.mxu0 %v3129
        %4107 = vmatpush2.bf16.msra.mxu0 %v3128
        %4108 = vmatprep.mubr.bf16.mxu0 %v713
        %4109 = vmatmul.mubr.bf16.gmra.mxu0 %v712
        %v4110 = vpop.f32.mrf.mxu0
        %v4111 = vadd.f32 %v4070, %v4110
        %v4112 = vpop.f32.mrf.mxu0
        %v4113 = vadd.f32 %v4072, %v4112
        %v4114 = vpop.f32.mrf.mxu0
        %v4115 = vpop.f32.mrf.mxu0
        %4116 = vdwg.mxu0
        %4117 = vmatprep.subr.bf16.mxu0 %v3249
        %4118 = vmatpush1.bf16.msra.mxu0 %v3248
        %4119 = vmatprep.subr.bf16.mxu0 %v3241
        %4120 = vmatpush1.bf16.msra.mxu0 %v3240
        %4121 = vmatprep.subr.bf16.mxu0 %v3233
        %4122 = vmatpush1.bf16.msra.mxu0 %v3232
        %4123 = vmatprep.subr.bf16.mxu0 %v3225
        %4124 = vmatpush1.bf16.msra.mxu0 %v3224
        %4125 = vmatprep.subr.bf16.mxu0 %v3217
        %4126 = vmatpush1.bf16.msra.mxu0 %v3216
        %4127 = vmatprep.subr.bf16.mxu0 %v3209
        %4128 = vmatpush1.bf16.msra.mxu0 %v3208
        %4129 = vmatprep.subr.bf16.mxu0 %v3201
        %4130 = vmatpush1.bf16.msra.mxu0 %v3200
        %4131 = vmatprep.subr.bf16.mxu0 %v3193
        %4132 = vmatpush1.bf16.msra.mxu0 %v3192
        %4133 = vmatprep.subr.bf16.mxu0 %v3313
        %4134 = vmatpush2.bf16.msra.mxu0 %v3312
        %4135 = vmatprep.subr.bf16.mxu0 %v3305
        %4136 = vmatpush2.bf16.msra.mxu0 %v3304
        %4137 = vmatprep.subr.bf16.mxu0 %v3297
        %4138 = vmatpush2.bf16.msra.mxu0 %v3296
        %4139 = vmatprep.subr.bf16.mxu0 %v3289
        %4140 = vmatpush2.bf16.msra.mxu0 %v3288
        %4141 = vmatprep.subr.bf16.mxu0 %v3281
        %4142 = vmatpush2.bf16.msra.mxu0 %v3280
        %4143 = vmatprep.subr.bf16.mxu0 %v3273
        %4144 = vmatpush2.bf16.msra.mxu0 %v3272
        %4145 = vmatprep.subr.bf16.mxu0 %v3265
        %4146 = vmatpush2.bf16.msra.mxu0 %v3264
        %4147 = vmatprep.subr.bf16.mxu0 %v3257
        %4148 = vmatpush2.bf16.msra.mxu0 %v3256
        %4149 = vmatprep.mubr.bf16.mxu0 %v715
        %4150 = vmatmul.mubr.bf16.gmra.mxu0 %v714
        %v4151 = vpop.f32.mrf.mxu0
        %v4152 = vadd.f32 %v4111, %v4151
        %v4153 = vpop.f32.mrf.mxu0
        %v4154 = vadd.f32 %v4113, %v4153
        %v4155 = vpop.f32.mrf.mxu0
        %v4156 = vpop.f32.mrf.mxu0
        %4157 = vdwg.mxu0
        %4158 = vmatprep.subr.bf16.mxu0 %v2867
        %4159 = vmatpush1.bf16.msra.mxu0 %v2866
        %4160 = vmatprep.subr.bf16.mxu0 %v2859
        %4161 = vmatpush1.bf16.msra.mxu0 %v2858
        %4162 = vmatprep.subr.bf16.mxu0 %v2851
        %4163 = vmatpush1.bf16.msra.mxu0 %v2850
        %4164 = vmatprep.subr.bf16.mxu0 %v2843
        %4165 = vmatpush1.bf16.msra.mxu0 %v2842
        %4166 = vmatprep.subr.bf16.mxu0 %v2835
        %4167 = vmatpush1.bf16.msra.mxu0 %v2834
        %4168 = vmatprep.subr.bf16.mxu0 %v2827
        %4169 = vmatpush1.bf16.msra.mxu0 %v2826
        %4170 = vmatprep.subr.bf16.mxu0 %v2819
        %4171 = vmatpush1.bf16.msra.mxu0 %v2818
        %4172 = vmatprep.subr.bf16.mxu0 %v2811
        %4173 = vmatpush1.bf16.msra.mxu0 %v2810
        %4174 = vmatprep.subr.bf16.mxu0 %v2931
        %4175 = vmatpush2.bf16.msra.mxu0 %v2930
        %4176 = vmatprep.subr.bf16.mxu0 %v2923
        %4177 = vmatpush2.bf16.msra.mxu0 %v2922
        %4178 = vmatprep.subr.bf16.mxu0 %v2915
        %4179 = vmatpush2.bf16.msra.mxu0 %v2914
        %4180 = vmatprep.subr.bf16.mxu0 %v2907
        %4181 = vmatpush2.bf16.msra.mxu0 %v2906
        %4182 = vmatprep.subr.bf16.mxu0 %v2899
        %4183 = vmatpush2.bf16.msra.mxu0 %v2898
        %4184 = vmatprep.subr.bf16.mxu0 %v2891
        %4185 = vmatpush2.bf16.msra.mxu0 %v2890
        %4186 = vmatprep.subr.bf16.mxu0 %v2883
        %4187 = vmatpush2.bf16.msra.mxu0 %v2882
        %4188 = vmatprep.subr.bf16.mxu0 %v2875
        %4189 = vmatpush2.bf16.msra.mxu0 %v2874
        %4190 = vmatprep.mubr.bf16.mxu0 %v709
        %4191 = vmatmul.mubr.bf16.gmra.mxu0 %v708
        %v4192 = vpop.f32.mrf.mxu0
        %v4193 = vadd.f32 %v1249, %v4192
        %v4194 = vpop.f32.mrf.mxu0
        %v4195 = vadd.f32 %v1253, %v4194
        %v4196 = vpop.f32.mrf.mxu0
        %v4197 = vpop.f32.mrf.mxu0
        %4198 = vdwg.mxu0
        %4199 = vmatprep.subr.bf16.mxu0 %v2995
        %4200 = vmatpush1.bf16.msra.mxu0 %v2994
        %4201 = vmatprep.subr.bf16.mxu0 %v2987
        %4202 = vmatpush1.bf16.msra.mxu0 %v2986
        %4203 = vmatprep.subr.bf16.mxu0 %v2979
        %4204 = vmatpush1.bf16.msra.mxu0 %v2978
        %4205 = vmatprep.subr.bf16.mxu0 %v2971
        %4206 = vmatpush1.bf16.msra.mxu0 %v2970
        %4207 = vmatprep.subr.bf16.mxu0 %v2963
        %4208 = vmatpush1.bf16.msra.mxu0 %v2962
        %4209 = vmatprep.subr.bf16.mxu0 %v2955
        %4210 = vmatpush1.bf16.msra.mxu0 %v2954
        %4211 = vmatprep.subr.bf16.mxu0 %v2947
        %4212 = vmatpush1.bf16.msra.mxu0 %v2946
        %4213 = vmatprep.subr.bf16.mxu0 %v2939
        %4214 = vmatpush1.bf16.msra.mxu0 %v2938
        %4215 = vmatprep.subr.bf16.mxu0 %v3059
        %4216 = vmatpush2.bf16.msra.mxu0 %v3058
        %4217 = vmatprep.subr.bf16.mxu0 %v3051
        %4218 = vmatpush2.bf16.msra.mxu0 %v3050
        %4219 = vmatprep.subr.bf16.mxu0 %v3043
        %4220 = vmatpush2.bf16.msra.mxu0 %v3042
        %4221 = vmatprep.subr.bf16.mxu0 %v3035
        %4222 = vmatpush2.bf16.msra.mxu0 %v3034
        %4223 = vmatprep.subr.bf16.mxu0 %v3027
        %4224 = vmatpush2.bf16.msra.mxu0 %v3026
        %4225 = vmatprep.subr.bf16.mxu0 %v3019
        %4226 = vmatpush2.bf16.msra.mxu0 %v3018
        %4227 = vmatprep.subr.bf16.mxu0 %v3011
        %4228 = vmatpush2.bf16.msra.mxu0 %v3010
        %4229 = vmatprep.subr.bf16.mxu0 %v3003
        %4230 = vmatpush2.bf16.msra.mxu0 %v3002
        %4231 = vmatprep.mubr.bf16.mxu0 %v711
        %4232 = vmatmul.mubr.bf16.gmra.mxu0 %v710
        %v4233 = vpop.f32.mrf.mxu0
        %v4234 = vadd.f32 %v4193, %v4233
        %v4235 = vpop.f32.mrf.mxu0
        %v4236 = vadd.f32 %v4195, %v4235
        %v4237 = vpop.f32.mrf.mxu0
        %v4238 = vpop.f32.mrf.mxu0
        %4239 = vdwg.mxu0
        %4240 = vmatprep.subr.bf16.mxu0 %v3123
        %4241 = vmatpush1.bf16.msra.mxu0 %v3122
        %4242 = vmatprep.subr.bf16.mxu0 %v3115
        %4243 = vmatpush1.bf16.msra.mxu0 %v3114
        %4244 = vmatprep.subr.bf16.mxu0 %v3107
        %4245 = vmatpush1.bf16.msra.mxu0 %v3106
        %4246 = vmatprep.subr.bf16.mxu0 %v3099
        %4247 = vmatpush1.bf16.msra.mxu0 %v3098
        %4248 = vmatprep.subr.bf16.mxu0 %v3091
        %4249 = vmatpush1.bf16.msra.mxu0 %v3090
        %4250 = vmatprep.subr.bf16.mxu0 %v3083
        %4251 = vmatpush1.bf16.msra.mxu0 %v3082
        %4252 = vmatprep.subr.bf16.mxu0 %v3075
        %4253 = vmatpush1.bf16.msra.mxu0 %v3074
        %4254 = vmatprep.subr.bf16.mxu0 %v3067
        %4255 = vmatpush1.bf16.msra.mxu0 %v3066
        %4256 = vmatprep.subr.bf16.mxu0 %v3187
        %4257 = vmatpush2.bf16.msra.mxu0 %v3186
        %4258 = vmatprep.subr.bf16.mxu0 %v3179
        %4259 = vmatpush2.bf16.msra.mxu0 %v3178
        %4260 = vmatprep.subr.bf16.mxu0 %v3171
        %4261 = vmatpush2.bf16.msra.mxu0 %v3170
        %4262 = vmatprep.subr.bf16.mxu0 %v3163
        %4263 = vmatpush2.bf16.msra.mxu0 %v3162
        %4264 = vmatprep.subr.bf16.mxu0 %v3155
        %4265 = vmatpush2.bf16.msra.mxu0 %v3154
        %4266 = vmatprep.subr.bf16.mxu0 %v3147
        %4267 = vmatpush2.bf16.msra.mxu0 %v3146
        %4268 = vmatprep.subr.bf16.mxu0 %v3139
        %4269 = vmatpush2.bf16.msra.mxu0 %v3138
        %4270 = vmatprep.subr.bf16.mxu0 %v3131
        %4271 = vmatpush2.bf16.msra.mxu0 %v3130
        %4272 = vmatprep.mubr.bf16.mxu0 %v713
        %4273 = vmatmul.mubr.bf16.gmra.mxu0 %v712
        %v4274 = vpop.f32.mrf.mxu0
        %v4275 = vadd.f32 %v4234, %v4274
        %v4276 = vpop.f32.mrf.mxu0
        %v4277 = vadd.f32 %v4236, %v4276
        %v4278 = vpop.f32.mrf.mxu0
        %v4279 = vpop.f32.mrf.mxu0
        %4280 = vdwg.mxu0
        %4281 = vmatprep.subr.bf16.mxu0 %v3251
        %4282 = vmatpush1.bf16.msra.mxu0 %v3250
        %4283 = vmatprep.subr.bf16.mxu0 %v3243
        %4284 = vmatpush1.bf16.msra.mxu0 %v3242
        %4285 = vmatprep.subr.bf16.mxu0 %v3235
        %4286 = vmatpush1.bf16.msra.mxu0 %v3234
        %4287 = vmatprep.subr.bf16.mxu0 %v3227
        %4288 = vmatpush1.bf16.msra.mxu0 %v3226
        %4289 = vmatprep.subr.bf16.mxu0 %v3219
        %4290 = vmatpush1.bf16.msra.mxu0 %v3218
        %4291 = vmatprep.subr.bf16.mxu0 %v3211
        %4292 = vmatpush1.bf16.msra.mxu0 %v3210
        %4293 = vmatprep.subr.bf16.mxu0 %v3203
        %4294 = vmatpush1.bf16.msra.mxu0 %v3202
        %4295 = vmatprep.subr.bf16.mxu0 %v3195
        %4296 = vmatpush1.bf16.msra.mxu0 %v3194
        %4297 = vmatprep.subr.bf16.mxu0 %v3315
        %4298 = vmatpush2.bf16.msra.mxu0 %v3314
        %4299 = vmatprep.subr.bf16.mxu0 %v3307
        %4300 = vmatpush2.bf16.msra.mxu0 %v3306
        %4301 = vmatprep.subr.bf16.mxu0 %v3299
        %4302 = vmatpush2.bf16.msra.mxu0 %v3298
        %4303 = vmatprep.subr.bf16.mxu0 %v3291
        %4304 = vmatpush2.bf16.msra.mxu0 %v3290
        %4305 = vmatprep.subr.bf16.mxu0 %v3283
        %4306 = vmatpush2.bf16.msra.mxu0 %v3282
        %4307 = vmatprep.subr.bf16.mxu0 %v3275
        %4308 = vmatpush2.bf16.msra.mxu0 %v3274
        %4309 = vmatprep.subr.bf16.mxu0 %v3267
        %4310 = vmatpush2.bf16.msra.mxu0 %v3266
        %4311 = vmatprep.subr.bf16.mxu0 %v3259
        %4312 = vmatpush2.bf16.msra.mxu0 %v3258
        %4313 = vmatprep.mubr.bf16.mxu0 %v715
        %4314 = vmatmul.mubr.bf16.gmra.mxu0 %v714
        %v4315 = vpop.f32.mrf.mxu0
        %v4316 = vadd.f32 %v4275, %v4315
        %v4317 = vpop.f32.mrf.mxu0
        %v4318 = vadd.f32 %v4277, %v4317
        %v4319 = vpop.f32.mrf.mxu0
        %v4320 = vpop.f32.mrf.mxu0
        %4321 = vdwg.mxu0
        %4322 = vmatprep.subr.bf16.mxu0 %v2869
        %4323 = vmatpush1.bf16.msra.mxu0 %v2868
        %4324 = vmatprep.subr.bf16.mxu0 %v2861
        %4325 = vmatpush1.bf16.msra.mxu0 %v2860
        %4326 = vmatprep.subr.bf16.mxu0 %v2853
        %4327 = vmatpush1.bf16.msra.mxu0 %v2852
        %4328 = vmatprep.subr.bf16.mxu0 %v2845
        %4329 = vmatpush1.bf16.msra.mxu0 %v2844
        %4330 = vmatprep.subr.bf16.mxu0 %v2837
        %4331 = vmatpush1.bf16.msra.mxu0 %v2836
        %4332 = vmatprep.subr.bf16.mxu0 %v2829
        %4333 = vmatpush1.bf16.msra.mxu0 %v2828
        %4334 = vmatprep.subr.bf16.mxu0 %v2821
        %4335 = vmatpush1.bf16.msra.mxu0 %v2820
        %4336 = vmatprep.subr.bf16.mxu0 %v2813
        %4337 = vmatpush1.bf16.msra.mxu0 %v2812
        %4338 = vmatprep.subr.bf16.mxu0 %v2933
        %4339 = vmatpush2.bf16.msra.mxu0 %v2932
        %4340 = vmatprep.subr.bf16.mxu0 %v2925
        %4341 = vmatpush2.bf16.msra.mxu0 %v2924
        %4342 = vmatprep.subr.bf16.mxu0 %v2917
        %4343 = vmatpush2.bf16.msra.mxu0 %v2916
        %4344 = vmatprep.subr.bf16.mxu0 %v2909
        %4345 = vmatpush2.bf16.msra.mxu0 %v2908
        %4346 = vmatprep.subr.bf16.mxu0 %v2901
        %4347 = vmatpush2.bf16.msra.mxu0 %v2900
        %4348 = vmatprep.subr.bf16.mxu0 %v2893
        %4349 = vmatpush2.bf16.msra.mxu0 %v2892
        %4350 = vmatprep.subr.bf16.mxu0 %v2885
        %4351 = vmatpush2.bf16.msra.mxu0 %v2884
        %4352 = vmatprep.subr.bf16.mxu0 %v2877
        %4353 = vmatpush2.bf16.msra.mxu0 %v2876
        %4354 = vmatprep.mubr.bf16.mxu0 %v709
        %4355 = vmatmul.mubr.bf16.gmra.mxu0 %v708
        %v4356 = vpop.f32.mrf.mxu0
        %v4357 = vadd.f32 %v1257, %v4356
        %v4358 = vpop.f32.mrf.mxu0
        %v4359 = vadd.f32 %v1261, %v4358
        %v4360 = vpop.f32.mrf.mxu0
        %v4361 = vpop.f32.mrf.mxu0
        %4362 = vdwg.mxu0
        %4363 = vmatprep.subr.bf16.mxu0 %v2997
        %4364 = vmatpush1.bf16.msra.mxu0 %v2996
        %4365 = vmatprep.subr.bf16.mxu0 %v2989
        %4366 = vmatpush1.bf16.msra.mxu0 %v2988
        %4367 = vmatprep.subr.bf16.mxu0 %v2981
        %4368 = vmatpush1.bf16.msra.mxu0 %v2980
        %4369 = vmatprep.subr.bf16.mxu0 %v2973
        %4370 = vmatpush1.bf16.msra.mxu0 %v2972
        %4371 = vmatprep.subr.bf16.mxu0 %v2965
        %4372 = vmatpush1.bf16.msra.mxu0 %v2964
        %4373 = vmatprep.subr.bf16.mxu0 %v2957
        %4374 = vmatpush1.bf16.msra.mxu0 %v2956
        %4375 = vmatprep.subr.bf16.mxu0 %v2949
        %4376 = vmatpush1.bf16.msra.mxu0 %v2948
        %4377 = vmatprep.subr.bf16.mxu0 %v2941
        %4378 = vmatpush1.bf16.msra.mxu0 %v2940
        %4379 = vmatprep.subr.bf16.mxu0 %v3061
        %4380 = vmatpush2.bf16.msra.mxu0 %v3060
        %4381 = vmatprep.subr.bf16.mxu0 %v3053
        %4382 = vmatpush2.bf16.msra.mxu0 %v3052
        %4383 = vmatprep.subr.bf16.mxu0 %v3045
        %4384 = vmatpush2.bf16.msra.mxu0 %v3044
        %4385 = vmatprep.subr.bf16.mxu0 %v3037
        %4386 = vmatpush2.bf16.msra.mxu0 %v3036
        %4387 = vmatprep.subr.bf16.mxu0 %v3029
        %4388 = vmatpush2.bf16.msra.mxu0 %v3028
        %4389 = vmatprep.subr.bf16.mxu0 %v3021
        %4390 = vmatpush2.bf16.msra.mxu0 %v3020
        %4391 = vmatprep.subr.bf16.mxu0 %v3013
        %4392 = vmatpush2.bf16.msra.mxu0 %v3012
        %4393 = vmatprep.subr.bf16.mxu0 %v3005
        %4394 = vmatpush2.bf16.msra.mxu0 %v3004
        %4395 = vmatprep.mubr.bf16.mxu0 %v711
        %4396 = vmatmul.mubr.bf16.gmra.mxu0 %v710
        %v4397 = vpop.f32.mrf.mxu0
        %v4398 = vadd.f32 %v4357, %v4397
        %v4399 = vpop.f32.mrf.mxu0
        %v4400 = vadd.f32 %v4359, %v4399
        %v4401 = vpop.f32.mrf.mxu0
        %v4402 = vpop.f32.mrf.mxu0
        %4403 = vdwg.mxu0
        %4404 = vmatprep.subr.bf16.mxu0 %v3125
        %4405 = vmatpush1.bf16.msra.mxu0 %v3124
        %4406 = vmatprep.subr.bf16.mxu0 %v3117
        %4407 = vmatpush1.bf16.msra.mxu0 %v3116
        %4408 = vmatprep.subr.bf16.mxu0 %v3109
        %4409 = vmatpush1.bf16.msra.mxu0 %v3108
        %4410 = vmatprep.subr.bf16.mxu0 %v3101
        %4411 = vmatpush1.bf16.msra.mxu0 %v3100
        %4412 = vmatprep.subr.bf16.mxu0 %v3093
        %4413 = vmatpush1.bf16.msra.mxu0 %v3092
        %4414 = vmatprep.subr.bf16.mxu0 %v3085
        %4415 = vmatpush1.bf16.msra.mxu0 %v3084
        %4416 = vmatprep.subr.bf16.mxu0 %v3077
        %4417 = vmatpush1.bf16.msra.mxu0 %v3076
        %4418 = vmatprep.subr.bf16.mxu0 %v3069
        %4419 = vmatpush1.bf16.msra.mxu0 %v3068
        %4420 = vmatprep.subr.bf16.mxu0 %v3189
        %4421 = vmatpush2.bf16.msra.mxu0 %v3188
        %4422 = vmatprep.subr.bf16.mxu0 %v3181
        %4423 = vmatpush2.bf16.msra.mxu0 %v3180
        %4424 = vmatprep.subr.bf16.mxu0 %v3173
        %4425 = vmatpush2.bf16.msra.mxu0 %v3172
        %4426 = vmatprep.subr.bf16.mxu0 %v3165
        %4427 = vmatpush2.bf16.msra.mxu0 %v3164
        %4428 = vmatprep.subr.bf16.mxu0 %v3157
        %4429 = vmatpush2.bf16.msra.mxu0 %v3156
        %4430 = vmatprep.subr.bf16.mxu0 %v3149
        %4431 = vmatpush2.bf16.msra.mxu0 %v3148
        %4432 = vmatprep.subr.bf16.mxu0 %v3141
        %4433 = vmatpush2.bf16.msra.mxu0 %v3140
        %4434 = vmatprep.subr.bf16.mxu0 %v3133
        %4435 = vmatpush2.bf16.msra.mxu0 %v3132
        %4436 = vmatprep.mubr.bf16.mxu0 %v713
        %4437 = vmatmul.mubr.bf16.gmra.mxu0 %v712
        %v4438 = vpop.f32.mrf.mxu0
        %v4439 = vadd.f32 %v4398, %v4438
        %v4440 = vpop.f32.mrf.mxu0
        %v4441 = vadd.f32 %v4400, %v4440
        %v4442 = vpop.f32.mrf.mxu0
        %v4443 = vpop.f32.mrf.mxu0
        %4444 = vdwg.mxu0
        %4445 = vmatprep.subr.bf16.mxu0 %v3253
        %4446 = vmatpush1.bf16.msra.mxu0 %v3252
        %4447 = vmatprep.subr.bf16.mxu0 %v3245
        %4448 = vmatpush1.bf16.msra.mxu0 %v3244
        %4449 = vmatprep.subr.bf16.mxu0 %v3237
        %4450 = vmatpush1.bf16.msra.mxu0 %v3236
        %4451 = vmatprep.subr.bf16.mxu0 %v3229
        %4452 = vmatpush1.bf16.msra.mxu0 %v3228
        %4453 = vmatprep.subr.bf16.mxu0 %v3221
        %4454 = vmatpush1.bf16.msra.mxu0 %v3220
        %4455 = vmatprep.subr.bf16.mxu0 %v3213
        %4456 = vmatpush1.bf16.msra.mxu0 %v3212
        %4457 = vmatprep.subr.bf16.mxu0 %v3205
        %4458 = vmatpush1.bf16.msra.mxu0 %v3204
        %4459 = vmatprep.subr.bf16.mxu0 %v3197
        %4460 = vmatpush1.bf16.msra.mxu0 %v3196
        %4461 = vmatprep.subr.bf16.mxu0 %v3317
        %4462 = vmatpush2.bf16.msra.mxu0 %v3316
        %4463 = vmatprep.subr.bf16.mxu0 %v3309
        %4464 = vmatpush2.bf16.msra.mxu0 %v3308
        %4465 = vmatprep.subr.bf16.mxu0 %v3301
        %4466 = vmatpush2.bf16.msra.mxu0 %v3300
        %4467 = vmatprep.subr.bf16.mxu0 %v3293
        %4468 = vmatpush2.bf16.msra.mxu0 %v3292
        %4469 = vmatprep.subr.bf16.mxu0 %v3285
        %4470 = vmatpush2.bf16.msra.mxu0 %v3284
        %4471 = vmatprep.subr.bf16.mxu0 %v3277
        %4472 = vmatpush2.bf16.msra.mxu0 %v3276
        %4473 = vmatprep.subr.bf16.mxu0 %v3269
        %4474 = vmatpush2.bf16.msra.mxu0 %v3268
        %4475 = vmatprep.subr.bf16.mxu0 %v3261
        %4476 = vmatpush2.bf16.msra.mxu0 %v3260
        %4477 = vmatprep.mubr.bf16.mxu0 %v715
        %4478 = vmatmul.mubr.bf16.gmra.mxu0 %v714
        %v4479 = vpop.f32.mrf.mxu0
        %v4480 = vadd.f32 %v4439, %v4479
        %v4481 = vpop.f32.mrf.mxu0
        %v4482 = vadd.f32 %v4441, %v4481
        %v4483 = vpop.f32.mrf.mxu0
        %v4484 = vpop.f32.mrf.mxu0
        %4485 = vdwg.mxu0
        %vm4486 = vcmp.gt.f32.partialorder %v3988, 0.0
        %vm4487 = vcmp.gt.f32.partialorder %v3990, 0.0
        %vm4488 = vcmp.gt.f32.partialorder %v4152, 0.0
        %vm4489 = vcmp.gt.f32.partialorder %v4154, 0.0
        %vm4490 = vcmp.gt.f32.partialorder %v4316, 0.0
        %vm4491 = vcmp.gt.f32.partialorder %v4318, 0.0
        %vm4492 = vcmp.gt.f32.partialorder %v4480, 0.0
        %vm4493 = vcmp.gt.f32.partialorder %v4482, 0.0
        %v4494 = vmul.f32 %v3988, 0.01
        %v4495 = vmul.f32 %v3990, 0.01
        %v4496 = vmul.f32 %v4152, 0.01
        %v4497 = vmul.f32 %v4154, 0.01
        %v4498 = vmul.f32 %v4316, 0.01
        %v4499 = vmul.f32 %v4318, 0.01
        %v4500 = vmul.f32 %v4480, 0.01
        %v4501 = vmul.f32 %v4482, 0.01
        %v4502 = vsel %vm4486, %v3988, %v4494
        %v4503 = vsel %vm4487, %v3990, %v4495
        %v4504 = vsel %vm4488, %v4152, %v4496
        %v4505 = vsel %vm4489, %v4154, %v4497
        %v4506 = vsel %vm4490, %v4316, %v4498
        %v4507 = vsel %vm4491, %v4318, %v4499
        %v4508 = vsel %vm4492, %v4480, %v4500
        %v4509 = vsel %vm4493, %v4482, %v4501
        %v4510 = vpack.c.bf16 %v4502, %v4502
        %v4511 = vpack.c.bf16 %v4503, %v4503
        %v4512 = vpack.c.bf16 %v4504, %v4504
        %v4513 = vpack.c.bf16 %v4505, %v4505
        %v4514 = vpack.c.bf16 %v4506, %v4506
        %v4515 = vpack.c.bf16 %v4507, %v4507
        %v4516 = vpack.c.bf16 %v4508, %v4508
        %v4517 = vpack.c.bf16 %v4509, %v4509
        %v4518 = vld [vmem:[#allocation11] sm:$0xf]
        %v4519 = vld [vmem:[#allocation11 + $0x4] sm:$0xf]
        %v4520 = vld [vmem:[#allocation11 + $0x8] sm:$0xf]
        %v4521 = vld [vmem:[#allocation11 + $0xc] sm:$0xf]
        %v4522 = vld [vmem:[#allocation11 + $0x10] sm:$0xf]
        %v4523 = vld [vmem:[#allocation11 + $0x14] sm:$0xf]
        %v4524 = vld [vmem:[#allocation11 + $0x18] sm:$0xf]
        %v4525 = vld [vmem:[#allocation11 + $0x1c] sm:$0xf]
        %v4526 = vld [vmem:[#allocation11 + $0x20] sm:$0xf]
        %v4527 = vld [vmem:[#allocation11 + $0x24] sm:$0xf]
        %v4528 = vld [vmem:[#allocation11 + $0x28] sm:$0xf]
        %v4529 = vld [vmem:[#allocation11 + $0x2c] sm:$0xf]
        %v4530 = vld [vmem:[#allocation11 + $0x30] sm:$0xf]
        %v4531 = vld [vmem:[#allocation11 + $0x34] sm:$0xf]
        %v4532 = vld [vmem:[#allocation11 + $0x38] sm:$0xf]
        %v4533 = vld [vmem:[#allocation11 + $0x3c] sm:$0xf]
        %v4534 = vld [vmem:[#allocation11 + $0x40] sm:$0xf]
        %v4535 = vld [vmem:[#allocation11 + $0x44] sm:$0xf]
        %v4536 = vld [vmem:[#allocation11 + $0x48] sm:$0xf]
        %v4537 = vld [vmem:[#allocation11 + $0x4c] sm:$0xf]
        %v4538 = vld [vmem:[#allocation11 + $0x50] sm:$0xf]
        %v4539 = vld [vmem:[#allocation11 + $0x54] sm:$0xf]
        %v4540 = vld [vmem:[#allocation11 + $0x58] sm:$0xf]
        %v4541 = vld [vmem:[#allocation11 + $0x5c] sm:$0xf]
        %v4542 = vld [vmem:[#allocation11 + $0x60] sm:$0xf]
        %v4543 = vld [vmem:[#allocation11 + $0x64] sm:$0xf]
        %v4544 = vld [vmem:[#allocation11 + $0x68] sm:$0xf]
        %v4545 = vld [vmem:[#allocation11 + $0x6c] sm:$0xf]
        %v4546 = vld [vmem:[#allocation11 + $0x70] sm:$0xf]
        %v4547 = vld [vmem:[#allocation11 + $0x74] sm:$0xf]
        %v4548 = vld [vmem:[#allocation11 + $0x78] sm:$0xf]
        %v4549 = vld [vmem:[#allocation11 + $0x7c] sm:$0xf]
        %v4550 = vld [vmem:[#allocation11 + $0x80] sm:$0xf]
        %v4551 = vld [vmem:[#allocation11 + $0x84] sm:$0xf]
        %v4552 = vld [vmem:[#allocation11 + $0x88] sm:$0xf]
        %v4553 = vld [vmem:[#allocation11 + $0x8c] sm:$0xf]
        %v4554 = vld [vmem:[#allocation11 + $0x90] sm:$0xf]
        %v4555 = vld [vmem:[#allocation11 + $0x94] sm:$0xf]
        %v4556 = vld [vmem:[#allocation11 + $0x98] sm:$0xf]
        %v4557 = vld [vmem:[#allocation11 + $0x9c] sm:$0xf]
        %v4558 = vld [vmem:[#allocation11 + $0xa0] sm:$0xf]
        %v4559 = vld [vmem:[#allocation11 + $0xa4] sm:$0xf]
        %v4560 = vld [vmem:[#allocation11 + $0xa8] sm:$0xf]
        %v4561 = vld [vmem:[#allocation11 + $0xac] sm:$0xf]
        %v4562 = vld [vmem:[#allocation11 + $0xb0] sm:$0xf]
        %v4563 = vld [vmem:[#allocation11 + $0xb4] sm:$0xf]
        %v4564 = vld [vmem:[#allocation11 + $0xb8] sm:$0xf]
        %v4565 = vld [vmem:[#allocation11 + $0xbc] sm:$0xf]
        %v4566 = vld [vmem:[#allocation11 + $0xc0] sm:$0xf]
        %v4567 = vld [vmem:[#allocation11 + $0xc4] sm:$0xf]
        %v4568 = vld [vmem:[#allocation11 + $0xc8] sm:$0xf]
        %v4569 = vld [vmem:[#allocation11 + $0xcc] sm:$0xf]
        %v4570 = vld [vmem:[#allocation11 + $0xd0] sm:$0xf]
        %v4571 = vld [vmem:[#allocation11 + $0xd4] sm:$0xf]
        %v4572 = vld [vmem:[#allocation11 + $0xd8] sm:$0xf]
        %v4573 = vld [vmem:[#allocation11 + $0xdc] sm:$0xf]
        %v4574 = vld [vmem:[#allocation11 + $0xe0] sm:$0xf]
        %v4575 = vld [vmem:[#allocation11 + $0xe4] sm:$0xf]
        %v4576 = vld [vmem:[#allocation11 + $0xe8] sm:$0xf]
        %v4577 = vld [vmem:[#allocation11 + $0xec] sm:$0xf]
        %v4578 = vld [vmem:[#allocation11 + $0xf0] sm:$0xf]
        %v4579 = vld [vmem:[#allocation11 + $0xf4] sm:$0xf]
        %v4580 = vld [vmem:[#allocation11 + $0xf8] sm:$0xf]
        %v4581 = vld [vmem:[#allocation11 + $0xfc] sm:$0xf]
        %v4582 = vld [vmem:[#allocation11 + $0x100] sm:$0xf]
        %v4583 = vld [vmem:[#allocation11 + $0x104] sm:$0xf]
        %v4584 = vld [vmem:[#allocation11 + $0x108] sm:$0xf]
        %v4585 = vld [vmem:[#allocation11 + $0x10c] sm:$0xf]
        %v4586 = vld [vmem:[#allocation11 + $0x110] sm:$0xf]
        %v4587 = vld [vmem:[#allocation11 + $0x114] sm:$0xf]
        %v4588 = vld [vmem:[#allocation11 + $0x118] sm:$0xf]
        %v4589 = vld [vmem:[#allocation11 + $0x11c] sm:$0xf]
        %v4590 = vld [vmem:[#allocation11 + $0x120] sm:$0xf]
        %v4591 = vld [vmem:[#allocation11 + $0x124] sm:$0xf]
        %v4592 = vld [vmem:[#allocation11 + $0x128] sm:$0xf]
        %v4593 = vld [vmem:[#allocation11 + $0x12c] sm:$0xf]
        %v4594 = vld [vmem:[#allocation11 + $0x130] sm:$0xf]
        %v4595 = vld [vmem:[#allocation11 + $0x134] sm:$0xf]
        %v4596 = vld [vmem:[#allocation11 + $0x138] sm:$0xf]
        %v4597 = vld [vmem:[#allocation11 + $0x13c] sm:$0xf]
        %v4598 = vld [vmem:[#allocation11 + $0x140] sm:$0xf]
        %v4599 = vld [vmem:[#allocation11 + $0x144] sm:$0xf]
        %v4600 = vld [vmem:[#allocation11 + $0x148] sm:$0xf]
        %v4601 = vld [vmem:[#allocation11 + $0x14c] sm:$0xf]
        %v4602 = vld [vmem:[#allocation11 + $0x150] sm:$0xf]
        %v4603 = vld [vmem:[#allocation11 + $0x154] sm:$0xf]
        %v4604 = vld [vmem:[#allocation11 + $0x158] sm:$0xf]
        %v4605 = vld [vmem:[#allocation11 + $0x15c] sm:$0xf]
        %v4606 = vld [vmem:[#allocation11 + $0x160] sm:$0xf]
        %v4607 = vld [vmem:[#allocation11 + $0x164] sm:$0xf]
        %v4608 = vld [vmem:[#allocation11 + $0x168] sm:$0xf]
        %v4609 = vld [vmem:[#allocation11 + $0x16c] sm:$0xf]
        %v4610 = vld [vmem:[#allocation11 + $0x170] sm:$0xf]
        %v4611 = vld [vmem:[#allocation11 + $0x174] sm:$0xf]
        %v4612 = vld [vmem:[#allocation11 + $0x178] sm:$0xf]
        %v4613 = vld [vmem:[#allocation11 + $0x17c] sm:$0xf]
        %v4614 = vld [vmem:[#allocation11 + $0x180] sm:$0xf]
        %v4615 = vld [vmem:[#allocation11 + $0x184] sm:$0xf]
        %v4616 = vld [vmem:[#allocation11 + $0x188] sm:$0xf]
        %v4617 = vld [vmem:[#allocation11 + $0x18c] sm:$0xf]
        %v4618 = vld [vmem:[#allocation11 + $0x190] sm:$0xf]
        %v4619 = vld [vmem:[#allocation11 + $0x194] sm:$0xf]
        %v4620 = vld [vmem:[#allocation11 + $0x198] sm:$0xf]
        %v4621 = vld [vmem:[#allocation11 + $0x19c] sm:$0xf]
        %v4622 = vld [vmem:[#allocation11 + $0x1a0] sm:$0xf]
        %v4623 = vld [vmem:[#allocation11 + $0x1a4] sm:$0xf]
        %v4624 = vld [vmem:[#allocation11 + $0x1a8] sm:$0xf]
        %v4625 = vld [vmem:[#allocation11 + $0x1ac] sm:$0xf]
        %v4626 = vld [vmem:[#allocation11 + $0x1b0] sm:$0xf]
        %v4627 = vld [vmem:[#allocation11 + $0x1b4] sm:$0xf]
        %v4628 = vld [vmem:[#allocation11 + $0x1b8] sm:$0xf]
        %v4629 = vld [vmem:[#allocation11 + $0x1bc] sm:$0xf]
        %v4630 = vld [vmem:[#allocation11 + $0x1c0] sm:$0xf]
        %v4631 = vld [vmem:[#allocation11 + $0x1c4] sm:$0xf]
        %v4632 = vld [vmem:[#allocation11 + $0x1c8] sm:$0xf]
        %v4633 = vld [vmem:[#allocation11 + $0x1cc] sm:$0xf]
        %v4634 = vld [vmem:[#allocation11 + $0x1d0] sm:$0xf]
        %v4635 = vld [vmem:[#allocation11 + $0x1d4] sm:$0xf]
        %v4636 = vld [vmem:[#allocation11 + $0x1d8] sm:$0xf]
        %v4637 = vld [vmem:[#allocation11 + $0x1dc] sm:$0xf]
        %v4638 = vld [vmem:[#allocation11 + $0x1e0] sm:$0xf]
        %v4639 = vld [vmem:[#allocation11 + $0x1e4] sm:$0xf]
        %v4640 = vld [vmem:[#allocation11 + $0x1e8] sm:$0xf]
        %v4641 = vld [vmem:[#allocation11 + $0x1ec] sm:$0xf]
        %v4642 = vld [vmem:[#allocation11 + $0x1f0] sm:$0xf]
        %v4643 = vld [vmem:[#allocation11 + $0x1f4] sm:$0xf]
        %v4644 = vld [vmem:[#allocation11 + $0x1f8] sm:$0xf]
        %v4645 = vld [vmem:[#allocation11 + $0x1fc] sm:$0xf]
        %v4646 = vld [vmem:[#allocation13] sm:$0x1]
        %v4648 = vlaneseq
        %v4649 = vshrl.u32 %v4648, 7
        %v4650 = vsub.s32 0, %v4649
        %v4651 = vrot.slane %v4646, %v4650
        %v4781 = vunpack.c.l.b16 %v4518
        %v4782 = vunpack.c.l.b16 %v4519
        %v4783 = vunpack.c.l.b16 %v4520
        %v4784 = vunpack.c.l.b16 %v4521
        %v4785 = vunpack.c.l.b16 %v4522
        %v4786 = vunpack.c.l.b16 %v4523
        %v4787 = vunpack.c.l.b16 %v4524
        %v4788 = vunpack.c.l.b16 %v4525
        %v4789 = vunpack.c.l.b16 %v4526
        %v4790 = vunpack.c.l.b16 %v4527
        %v4791 = vunpack.c.l.b16 %v4528
        %v4792 = vunpack.c.l.b16 %v4529
        %v4793 = vunpack.c.l.b16 %v4530
        %v4794 = vunpack.c.l.b16 %v4531
        %v4795 = vunpack.c.l.b16 %v4532
        %v4796 = vunpack.c.l.b16 %v4533
        %v4797 = vunpack.c.l.b16 %v4534
        %v4798 = vunpack.c.l.b16 %v4535
        %v4799 = vunpack.c.l.b16 %v4536
        %v4800 = vunpack.c.l.b16 %v4537
        %v4801 = vunpack.c.l.b16 %v4538
        %v4802 = vunpack.c.l.b16 %v4539
        %v4803 = vunpack.c.l.b16 %v4540
        %v4804 = vunpack.c.l.b16 %v4541
        %v4805 = vunpack.c.l.b16 %v4542
        %v4806 = vunpack.c.l.b16 %v4543
        %v4807 = vunpack.c.l.b16 %v4544
        %v4808 = vunpack.c.l.b16 %v4545
        %v4809 = vunpack.c.l.b16 %v4546
        %v4810 = vunpack.c.l.b16 %v4547
        %v4811 = vunpack.c.l.b16 %v4548
        %v4812 = vunpack.c.l.b16 %v4549
        %v4813 = vunpack.c.l.b16 %v4550
        %v4814 = vunpack.c.l.b16 %v4551
        %v4815 = vunpack.c.l.b16 %v4552
        %v4816 = vunpack.c.l.b16 %v4553
        %v4817 = vunpack.c.l.b16 %v4554
        %v4818 = vunpack.c.l.b16 %v4555
        %v4819 = vunpack.c.l.b16 %v4556
        %v4820 = vunpack.c.l.b16 %v4557
        %v4821 = vunpack.c.l.b16 %v4558
        %v4822 = vunpack.c.l.b16 %v4559
        %v4823 = vunpack.c.l.b16 %v4560
        %v4824 = vunpack.c.l.b16 %v4561
        %v4825 = vunpack.c.l.b16 %v4562
        %v4826 = vunpack.c.l.b16 %v4563
        %v4827 = vunpack.c.l.b16 %v4564
        %v4828 = vunpack.c.l.b16 %v4565
        %v4829 = vunpack.c.l.b16 %v4566
        %v4830 = vunpack.c.l.b16 %v4567
        %v4831 = vunpack.c.l.b16 %v4568
        %v4832 = vunpack.c.l.b16 %v4569
        %v4833 = vunpack.c.l.b16 %v4570
        %v4834 = vunpack.c.l.b16 %v4571
        %v4835 = vunpack.c.l.b16 %v4572
        %v4836 = vunpack.c.l.b16 %v4573
        %v4837 = vunpack.c.l.b16 %v4574
        %v4838 = vunpack.c.l.b16 %v4575
        %v4839 = vunpack.c.l.b16 %v4576
        %v4840 = vunpack.c.l.b16 %v4577
        %v4841 = vunpack.c.l.b16 %v4578
        %v4842 = vunpack.c.l.b16 %v4579
        %v4843 = vunpack.c.l.b16 %v4580
        %v4844 = vunpack.c.l.b16 %v4581
        %v4845 = vunpack.c.l.b16 %v4582
        %v4846 = vunpack.c.l.b16 %v4583
        %v4847 = vunpack.c.l.b16 %v4584
        %v4848 = vunpack.c.l.b16 %v4585
        %v4849 = vunpack.c.l.b16 %v4586
        %v4850 = vunpack.c.l.b16 %v4587
        %v4851 = vunpack.c.l.b16 %v4588
        %v4852 = vunpack.c.l.b16 %v4589
        %v4853 = vunpack.c.l.b16 %v4590
        %v4854 = vunpack.c.l.b16 %v4591
        %v4855 = vunpack.c.l.b16 %v4592
        %v4856 = vunpack.c.l.b16 %v4593
        %v4857 = vunpack.c.l.b16 %v4594
        %v4858 = vunpack.c.l.b16 %v4595
        %v4859 = vunpack.c.l.b16 %v4596
        %v4860 = vunpack.c.l.b16 %v4597
        %v4861 = vunpack.c.l.b16 %v4598
        %v4862 = vunpack.c.l.b16 %v4599
        %v4863 = vunpack.c.l.b16 %v4600
        %v4864 = vunpack.c.l.b16 %v4601
        %v4865 = vunpack.c.l.b16 %v4602
        %v4866 = vunpack.c.l.b16 %v4603
        %v4867 = vunpack.c.l.b16 %v4604
        %v4868 = vunpack.c.l.b16 %v4605
        %v4869 = vunpack.c.l.b16 %v4606
        %v4870 = vunpack.c.l.b16 %v4607
        %v4871 = vunpack.c.l.b16 %v4608
        %v4872 = vunpack.c.l.b16 %v4609
        %v4873 = vunpack.c.l.b16 %v4610
        %v4874 = vunpack.c.l.b16 %v4611
        %v4875 = vunpack.c.l.b16 %v4612
        %v4876 = vunpack.c.l.b16 %v4613
        %v4877 = vunpack.c.l.b16 %v4614
        %v4878 = vunpack.c.l.b16 %v4615
        %v4879 = vunpack.c.l.b16 %v4616
        %v4880 = vunpack.c.l.b16 %v4617
        %v4881 = vunpack.c.l.b16 %v4618
        %v4882 = vunpack.c.l.b16 %v4619
        %v4883 = vunpack.c.l.b16 %v4620
        %v4884 = vunpack.c.l.b16 %v4621
        %v4885 = vunpack.c.l.b16 %v4622
        %v4886 = vunpack.c.l.b16 %v4623
        %v4887 = vunpack.c.l.b16 %v4624
        %v4888 = vunpack.c.l.b16 %v4625
        %v4889 = vunpack.c.l.b16 %v4626
        %v4890 = vunpack.c.l.b16 %v4627
        %v4891 = vunpack.c.l.b16 %v4628
        %v4892 = vunpack.c.l.b16 %v4629
        %v4893 = vunpack.c.l.b16 %v4630
        %v4894 = vunpack.c.l.b16 %v4631
        %v4895 = vunpack.c.l.b16 %v4632
        %v4896 = vunpack.c.l.b16 %v4633
        %v4897 = vunpack.c.l.b16 %v4634
        %v4898 = vunpack.c.l.b16 %v4635
        %v4899 = vunpack.c.l.b16 %v4636
        %v4900 = vunpack.c.l.b16 %v4637
        %v4901 = vunpack.c.l.b16 %v4638
        %v4902 = vunpack.c.l.b16 %v4639
        %v4903 = vunpack.c.l.b16 %v4640
        %v4904 = vunpack.c.l.b16 %v4641
        %v4905 = vunpack.c.l.b16 %v4642
        %v4906 = vunpack.c.l.b16 %v4643
        %v4907 = vunpack.c.l.b16 %v4644
        %v4908 = vunpack.c.l.b16 %v4645
        %v4909 = vpack.c.b16 %v4782, %v4781
        %v4910 = vpack.c.b16 %v4784, %v4783
        %v4911 = vpack.c.b16 %v4786, %v4785
        %v4912 = vpack.c.b16 %v4788, %v4787
        %v4913 = vpack.c.b16 %v4790, %v4789
        %v4914 = vpack.c.b16 %v4792, %v4791
        %v4915 = vpack.c.b16 %v4794, %v4793
        %v4916 = vpack.c.b16 %v4796, %v4795
        %v4917 = vpack.c.b16 %v4798, %v4797
        %v4918 = vpack.c.b16 %v4800, %v4799
        %v4919 = vpack.c.b16 %v4802, %v4801
        %v4920 = vpack.c.b16 %v4804, %v4803
        %v4921 = vpack.c.b16 %v4806, %v4805
        %v4922 = vpack.c.b16 %v4808, %v4807
        %v4923 = vpack.c.b16 %v4810, %v4809
        %v4924 = vpack.c.b16 %v4812, %v4811
        %v4925 = vpack.c.b16 %v4814, %v4813
        %v4926 = vpack.c.b16 %v4816, %v4815
        %v4927 = vpack.c.b16 %v4818, %v4817
        %v4928 = vpack.c.b16 %v4820, %v4819
        %v4929 = vpack.c.b16 %v4822, %v4821
        %v4930 = vpack.c.b16 %v4824, %v4823
        %v4931 = vpack.c.b16 %v4826, %v4825
        %v4932 = vpack.c.b16 %v4828, %v4827
        %v4933 = vpack.c.b16 %v4830, %v4829
        %v4934 = vpack.c.b16 %v4832, %v4831
        %v4935 = vpack.c.b16 %v4834, %v4833
        %v4936 = vpack.c.b16 %v4836, %v4835
        %v4937 = vpack.c.b16 %v4838, %v4837
        %v4938 = vpack.c.b16 %v4840, %v4839
        %v4939 = vpack.c.b16 %v4842, %v4841
        %v4940 = vpack.c.b16 %v4844, %v4843
        %v4941 = vpack.c.b16 %v4846, %v4845
        %v4942 = vpack.c.b16 %v4848, %v4847
        %v4943 = vpack.c.b16 %v4850, %v4849
        %v4944 = vpack.c.b16 %v4852, %v4851
        %v4945 = vpack.c.b16 %v4854, %v4853
        %v4946 = vpack.c.b16 %v4856, %v4855
        %v4947 = vpack.c.b16 %v4858, %v4857
        %v4948 = vpack.c.b16 %v4860, %v4859
        %v4949 = vpack.c.b16 %v4862, %v4861
        %v4950 = vpack.c.b16 %v4864, %v4863
        %v4951 = vpack.c.b16 %v4866, %v4865
        %v4952 = vpack.c.b16 %v4868, %v4867
        %v4953 = vpack.c.b16 %v4870, %v4869
        %v4954 = vpack.c.b16 %v4872, %v4871
        %v4955 = vpack.c.b16 %v4874, %v4873
        %v4956 = vpack.c.b16 %v4876, %v4875
        %v4957 = vpack.c.b16 %v4878, %v4877
        %v4958 = vpack.c.b16 %v4880, %v4879
        %v4959 = vpack.c.b16 %v4882, %v4881
        %v4960 = vpack.c.b16 %v4884, %v4883
        %v4961 = vpack.c.b16 %v4886, %v4885
        %v4962 = vpack.c.b16 %v4888, %v4887
        %v4963 = vpack.c.b16 %v4890, %v4889
        %v4964 = vpack.c.b16 %v4892, %v4891
        %v4965 = vpack.c.b16 %v4894, %v4893
        %v4966 = vpack.c.b16 %v4896, %v4895
        %v4967 = vpack.c.b16 %v4898, %v4897
        %v4968 = vpack.c.b16 %v4900, %v4899
        %v4969 = vpack.c.b16 %v4902, %v4901
        %v4970 = vpack.c.b16 %v4904, %v4903
        %v4971 = vpack.c.b16 %v4906, %v4905
        %v4972 = vpack.c.b16 %v4908, %v4907
        %5037 = vmatprep.subr.bf16.mxu0 0
        %5038 = vmatpush1.bf16.msra.mxu0 %v4916
        %5039 = vmatprep.subr.bf16.mxu0 0
        %5040 = vmatpush1.bf16.msra.mxu0 %v4915
        %5041 = vmatprep.subr.bf16.mxu0 0
        %5042 = vmatpush1.bf16.msra.mxu0 %v4914
        %5043 = vmatprep.subr.bf16.mxu0 0
        %5044 = vmatpush1.bf16.msra.mxu0 %v4913
        %5045 = vmatprep.subr.bf16.mxu0 0
        %5046 = vmatpush1.bf16.msra.mxu0 %v4912
        %5047 = vmatprep.subr.bf16.mxu0 0
        %5048 = vmatpush1.bf16.msra.mxu0 %v4911
        %5049 = vmatprep.subr.bf16.mxu0 0
        %5050 = vmatpush1.bf16.msra.mxu0 %v4910
        %5051 = vmatprep.subr.bf16.mxu0 0
        %5052 = vmatpush1.bf16.msra.mxu0 %v4909
        %5053 = vmatprep.subr.bf16.mxu0 0
        %5054 = vmatpush2.bf16.msra.mxu0 %v4924
        %5055 = vmatprep.subr.bf16.mxu0 0
        %5056 = vmatpush2.bf16.msra.mxu0 %v4923
        %5057 = vmatprep.subr.bf16.mxu0 0
        %5058 = vmatpush2.bf16.msra.mxu0 %v4922
        %5059 = vmatprep.subr.bf16.mxu0 0
        %5060 = vmatpush2.bf16.msra.mxu0 %v4921
        %5061 = vmatprep.subr.bf16.mxu0 0
        %5062 = vmatpush2.bf16.msra.mxu0 %v4920
        %5063 = vmatprep.subr.bf16.mxu0 0
        %5064 = vmatpush2.bf16.msra.mxu0 %v4919
        %5065 = vmatprep.subr.bf16.mxu0 0
        %5066 = vmatpush2.bf16.msra.mxu0 %v4918
        %5067 = vmatprep.subr.bf16.mxu0 0
        %5068 = vmatpush2.bf16.msra.mxu0 %v4917
        %5069 = vmatprep.mubr.bf16.mxu0 %v4511
        %5070 = vmatmul.mubr.bf16.gmra.mxu0 %v4510
        %v5071 = vpop.f32.mrf.mxu0
        %v5072 = vadd.f32 %v4651, %v5071
        %v5073 = vpop.f32.mrf.mxu0
        %v5074 = vpop.f32.mrf.mxu0
        %v5075 = vpop.f32.mrf.mxu0
        %5076 = vdwg.mxu0
        %5077 = vmatprep.subr.bf16.mxu0 0
        %5078 = vmatpush1.bf16.msra.mxu0 %v4932
        %5079 = vmatprep.subr.bf16.mxu0 0
        %5080 = vmatpush1.bf16.msra.mxu0 %v4931
        %5081 = vmatprep.subr.bf16.mxu0 0
        %5082 = vmatpush1.bf16.msra.mxu0 %v4930
        %5083 = vmatprep.subr.bf16.mxu0 0
        %5084 = vmatpush1.bf16.msra.mxu0 %v4929
        %5085 = vmatprep.subr.bf16.mxu0 0
        %5086 = vmatpush1.bf16.msra.mxu0 %v4928
        %5087 = vmatprep.subr.bf16.mxu0 0
        %5088 = vmatpush1.bf16.msra.mxu0 %v4927
        %5089 = vmatprep.subr.bf16.mxu0 0
        %5090 = vmatpush1.bf16.msra.mxu0 %v4926
        %5091 = vmatprep.subr.bf16.mxu0 0
        %5092 = vmatpush1.bf16.msra.mxu0 %v4925
        %5093 = vmatprep.subr.bf16.mxu0 0
        %5094 = vmatpush2.bf16.msra.mxu0 %v4940
        %5095 = vmatprep.subr.bf16.mxu0 0
        %5096 = vmatpush2.bf16.msra.mxu0 %v4939
        %5097 = vmatprep.subr.bf16.mxu0 0
        %5098 = vmatpush2.bf16.msra.mxu0 %v4938
        %5099 = vmatprep.subr.bf16.mxu0 0
        %5100 = vmatpush2.bf16.msra.mxu0 %v4937
        %5101 = vmatprep.subr.bf16.mxu0 0
        %5102 = vmatpush2.bf16.msra.mxu0 %v4936
        %5103 = vmatprep.subr.bf16.mxu0 0
        %5104 = vmatpush2.bf16.msra.mxu0 %v4935
        %5105 = vmatprep.subr.bf16.mxu0 0
        %5106 = vmatpush2.bf16.msra.mxu0 %v4934
        %5107 = vmatprep.subr.bf16.mxu0 0
        %5108 = vmatpush2.bf16.msra.mxu0 %v4933
        %5109 = vmatprep.mubr.bf16.mxu0 %v4513
        %5110 = vmatmul.mubr.bf16.gmra.mxu0 %v4512
        %v5111 = vpop.f32.mrf.mxu0
        %v5112 = vadd.f32 %v5072, %v5111
        %v5113 = vpop.f32.mrf.mxu0
        %v5114 = vpop.f32.mrf.mxu0
        %v5115 = vpop.f32.mrf.mxu0
        %5116 = vdwg.mxu0
        %5117 = vmatprep.subr.bf16.mxu0 0
        %5118 = vmatpush1.bf16.msra.mxu0 %v4948
        %5119 = vmatprep.subr.bf16.mxu0 0
        %5120 = vmatpush1.bf16.msra.mxu0 %v4947
        %5121 = vmatprep.subr.bf16.mxu0 0
        %5122 = vmatpush1.bf16.msra.mxu0 %v4946
        %5123 = vmatprep.subr.bf16.mxu0 0
        %5124 = vmatpush1.bf16.msra.mxu0 %v4945
        %5125 = vmatprep.subr.bf16.mxu0 0
        %5126 = vmatpush1.bf16.msra.mxu0 %v4944
        %5127 = vmatprep.subr.bf16.mxu0 0
        %5128 = vmatpush1.bf16.msra.mxu0 %v4943
        %5129 = vmatprep.subr.bf16.mxu0 0
        %5130 = vmatpush1.bf16.msra.mxu0 %v4942
        %5131 = vmatprep.subr.bf16.mxu0 0
        %5132 = vmatpush1.bf16.msra.mxu0 %v4941
        %5133 = vmatprep.subr.bf16.mxu0 0
        %5134 = vmatpush2.bf16.msra.mxu0 %v4956
        %5135 = vmatprep.subr.bf16.mxu0 0
        %5136 = vmatpush2.bf16.msra.mxu0 %v4955
        %5137 = vmatprep.subr.bf16.mxu0 0
        %5138 = vmatpush2.bf16.msra.mxu0 %v4954
        %5139 = vmatprep.subr.bf16.mxu0 0
        %5140 = vmatpush2.bf16.msra.mxu0 %v4953
        %5141 = vmatprep.subr.bf16.mxu0 0
        %5142 = vmatpush2.bf16.msra.mxu0 %v4952
        %5143 = vmatprep.subr.bf16.mxu0 0
        %5144 = vmatpush2.bf16.msra.mxu0 %v4951
        %5145 = vmatprep.subr.bf16.mxu0 0
        %5146 = vmatpush2.bf16.msra.mxu0 %v4950
        %5147 = vmatprep.subr.bf16.mxu0 0
        %5148 = vmatpush2.bf16.msra.mxu0 %v4949
        %5149 = vmatprep.mubr.bf16.mxu0 %v4515
        %5150 = vmatmul.mubr.bf16.gmra.mxu0 %v4514
        %v5151 = vpop.f32.mrf.mxu0
        %v5152 = vadd.f32 %v5112, %v5151
        %v5153 = vpop.f32.mrf.mxu0
        %v5154 = vpop.f32.mrf.mxu0
        %v5155 = vpop.f32.mrf.mxu0
        %5156 = vdwg.mxu0
        %5157 = vmatprep.subr.bf16.mxu0 0
        %5158 = vmatpush1.bf16.msra.mxu0 %v4964
        %5159 = vmatprep.subr.bf16.mxu0 0
        %5160 = vmatpush1.bf16.msra.mxu0 %v4963
        %5161 = vmatprep.subr.bf16.mxu0 0
        %5162 = vmatpush1.bf16.msra.mxu0 %v4962
        %5163 = vmatprep.subr.bf16.mxu0 0
        %5164 = vmatpush1.bf16.msra.mxu0 %v4961
        %5165 = vmatprep.subr.bf16.mxu0 0
        %5166 = vmatpush1.bf16.msra.mxu0 %v4960
        %5167 = vmatprep.subr.bf16.mxu0 0
        %5168 = vmatpush1.bf16.msra.mxu0 %v4959
        %5169 = vmatprep.subr.bf16.mxu0 0
        %5170 = vmatpush1.bf16.msra.mxu0 %v4958
        %5171 = vmatprep.subr.bf16.mxu0 0
        %5172 = vmatpush1.bf16.msra.mxu0 %v4957
        %5173 = vmatprep.subr.bf16.mxu0 0
        %5174 = vmatpush2.bf16.msra.mxu0 %v4972
        %5175 = vmatprep.subr.bf16.mxu0 0
        %5176 = vmatpush2.bf16.msra.mxu0 %v4971
        %5177 = vmatprep.subr.bf16.mxu0 0
        %5178 = vmatpush2.bf16.msra.mxu0 %v4970
        %5179 = vmatprep.subr.bf16.mxu0 0
        %5180 = vmatpush2.bf16.msra.mxu0 %v4969
        %5181 = vmatprep.subr.bf16.mxu0 0
        %5182 = vmatpush2.bf16.msra.mxu0 %v4968
        %5183 = vmatprep.subr.bf16.mxu0 0
        %5184 = vmatpush2.bf16.msra.mxu0 %v4967
        %5185 = vmatprep.subr.bf16.mxu0 0
        %5186 = vmatpush2.bf16.msra.mxu0 %v4966
        %5187 = vmatprep.subr.bf16.mxu0 0
        %5188 = vmatpush2.bf16.msra.mxu0 %v4965
        %5189 = vmatprep.mubr.bf16.mxu0 %v4517
        %5190 = vmatmul.mubr.bf16.gmra.mxu0 %v4516
        %v5191 = vpop.f32.mrf.mxu0
        %v5192 = vadd.f32 %v5152, %v5191
        %v5193 = vpop.f32.mrf.mxu0
        %v5194 = vpop.f32.mrf.mxu0
        %v5195 = vpop.f32.mrf.mxu0
        %5196 = vdwg.mxu0
        %v5197 = vxor.u32 %v5192, 2147483648
        %v5198 = vmul.f32 %v5197, 1.442695
        %v5199 = vpow.pop %v5198
        %v5200 = vadd.f32 %v5199, 1.0
        %v5201 = vrcp.pop %v5200
        %v5202 = vmul.f32 1.0, %v5201
        %5203 = vst [vmem:[%s374] sm:$0xff] %v5202
        %s5204 = sand.u32 %s187, 1
        %s5205 = scalar_lea.sflag [#allocation4], %s5204
        %s5206 = sand.u32 %s187, 1
        %s5207 = smul.addr %s5206, 8
        %s5208 = scalar_lea.vmem [#allocation14], %s5207
        // Predicated region
        $region77: #{tpu_custom_call.1} parent=47 // pred_check
          %p5209 = pneg %p197
        $region78: #{tpu_custom_call.1} parent=47 // pred_check_branch
          %5211 = sbr.rel (%p5209) target = $region80
        $region79: #{tpu_custom_call.1} parent=47 // pred_region
          %s5213 = ssub.s32 128, 128
          %5214 = vsyncadd %s5205, %s5213
          %s5215 = smul.addr %s27, 128
          %s5216 = scalar_lea.hbm %s7, %s5215
          %s5218 = sshll.u32 %s5208, 4
          %s5219 = int_to_ptr.vmem [resolvable:$true] %s5218
          %5221 = dma.vmem_to_hbm [thread:$0]  %s5219, 128, %s5216, %s5205
        $region80: #{tpu_custom_call.1} parent=47 // pred_fallthru
          _
      $region48: #{tpu_custom_call.1} parent=5 // pred_fallthru
        _
      %p5222 = scmp.le.s32.totalorder 2, %s22
      // Predicated region
      $region81: #{tpu_custom_call.1} parent=5 // pred_check
        %p5223 = pneg %p5222
      $region82: #{tpu_custom_call.1} parent=5 // pred_check_branch
        %5225 = sbr.rel (%p5223) target = $region84
      $region83: #{tpu_custom_call.1} parent=5 // pred_region
        %s5226 = ssub.s32 %s22, 2
        // Predicated region
        $region85: #{tpu_custom_call.1} parent=83 // pred_check
          %p5227 = pneg %p203
        $region86: #{tpu_custom_call.1} parent=83 // pred_check_branch
          %5229 = sbr.rel (%p5227) target = $region88
        $region87: #{tpu_custom_call.1} parent=83 // pred_region
          %s5230 = sand.u32 %s188, 1
          %s5231 = scalar_lea.sflag [#allocation4], %s5230
          %s5232 = sand.u32 %s188, 1
          %s5233 = smul.addr %s5232, 8
          %s5234 = scalar_lea.vmem [#allocation14], %s5233
          %5235 = dma.done %s5231, 128
        $region88: #{tpu_custom_call.1} parent=83 // pred_fallthru
          _
      $region84: #{tpu_custom_call.1} parent=5 // pred_fallthru
        _
    $region6: #{tpu_custom_call.1} parent=1 // loop_footer
      %s26 = sadd.s32 1, %s22
    $region7: #{tpu_custom_call.1} parent=1 // loop_footer_branch
      %21 = sbr.rel target = $region3
    $region8: #{tpu_custom_call.1} parent=1 // loop_exit
      _
    %5236 = vsyncpa [#allocation3], 1
    %s5237 = scalar_lea.sflag [#allocation3], 1
    %5238 = vsyncpa %s5237, 1
    %5239 = vsyncpa [#allocation6], 1
    %5240 = vsyncpa [#allocation9], 1
    %5241 = vsyncpa [#allocation12], 1
    %5242 = vsyncpa [#allocation4], 1
    %s5243 = scalar_lea.sflag [#allocation4], 1
    %5244 = vsyncpa %s5243, 1

</llo_original>
